<compile_context>
chip_gen: v6e
topology: v6e:2x2x1
jax: 0.10.0
libtpu: 0.0.40
codegen_flags: <defaults>
</compile_context>

<pallas_src>
import functools
import math

import jax
import jax.numpy as jnp
import numpy as np
from jax.experimental import pallas as pl
from jax.experimental.pallas import tpu as pltpu


# ----------------------------------------------------------------------------
# Pallas kernel: one batch element per grid step ("parallel" axis).
# Inputs are flat-padded rows (C, HW + 2*ws*(W+1)); lane axis = H*W.
# ----------------------------------------------------------------------------
def _smoothness_kernel(opad_ref, spad_ref, out_ref, *,
                       height, width, window_size,
                       sigma_color_coeff, sigma_space_coeff,
                       lp, c1, c2, alpha, eps, scale):
    ws = window_size
    kside = 2 * ws + 1
    hw = height * width
    padf = ws * (width + 1)

    opad = opad_ref[0]                      # (C, HWP) flat-padded original
    spad = spad_ref[0]                      # (C, HWP) flat-padded smooth
    c = opad.shape[0]

    orig = opad[:, padf:padf + hw]          # (C, HW) center crops
    smooth = spad[:, padf:padf + hw]

    # Horizontal validity masks, one per dx offset (hoisted out of the loop).
    # Vertical out-of-range is absorbed by the flat zero padding.
    col = jax.lax.broadcasted_iota(jnp.int32, (1, hw), 1) % width
    hmasks = [((col + (dx - ws)) >= 0) & ((col + (dx - ws)) < width)
              for dx in range(kside)]

    # Per-channel accumulators; channel reduction and edge-response masking
    # are applied exactly once after the 25-offset loop (masks are offset-
    # independent), removing ~50 selects + the alpha multiply per offset.
    er_o = jnp.zeros((c, hw), jnp.float32)      # edge response, original
    er_s = jnp.zeros((c, hw), jnp.float32)      # edge response, smooth
    acc_l = jnp.zeros((c, hw), jnp.float32)     # sum_k ws_k * ti^2
    acc_s = jnp.zeros((c, hw), jnp.float32)     # sum_k wr_k * (ti+eps)^lp

    for dy in range(kside):
        sy = dy - ws
        for dx in range(kside):
            sx = dx - ws
            start = padf + sy * width + sx              # static slice offset
            ws_k = math.exp(-sigma_space_coeff * float(sy * sy + sx * sx))
            valid = hmasks[dx]                          # (1, HW)

            # Zero-padded shifted copies (== nn.Unfold(padding=ws) semantics).
            po = jnp.where(valid, opad[:, start:start + hw], 0.0)   # (C, HW)
            ps = jnp.where(valid, spad[:, start:start + hw], 0.0)   # (C, HW)

            d_o = po - orig
            er_o = er_o + jnp.abs(d_o)
            er_s = er_s + jnp.abs(ps - smooth)

            # Color affinity of the original image (per pixel).
            color = jnp.sum(d_o * d_o, axis=0, keepdims=True)       # (1, HW)
            wr = jnp.exp(-sigma_color_coeff * color)                # (1, HW)

            # Ti - Tj gated by "patch > 0" (valid, non-zero pixels).
            ti = jnp.abs(jnp.where(ps > 0, ps - smooth, 0.0))       # (C, HW)
            acc_l = acc_l + jnp.float32(ws_k) * (ti * ti)
            acc_s = acc_s + wr * jnp.exp(lp * jnp.log(ti + eps))

    er_o_px = jnp.sum(er_o, axis=0, keepdims=True)                  # (1, HW)
    er_s_px = jnp.sum(er_s, axis=0, keepdims=True)
    use_large = (er_o_px < c1) & ((er_s_px - er_o_px) > c2)         # (1, HW)

    large = jnp.sum(acc_l, axis=0, keepdims=True)
    small = jnp.sum(acc_s, axis=0, keepdims=True)
    total = jnp.sum(jnp.where(use_large, alpha * large, small)) * scale

    # Lane-dense, unmasked store of the per-batch partial sum (one f32 vreg).
    out_ref[...] = jnp.broadcast_to(total, out_ref.shape).astype(jnp.float32)


# ----------------------------------------------------------------------------
# Wrapper
# ----------------------------------------------------------------------------
def smoothness_loss_pallas(original_images, smooth_images, *,
                           sigma_color=0.1, sigma_space=7.0, lp=0.8,
                           c1=10.0, c2=5.0, window_size=2, alpha=5.0,
                           eps=1e-6):
    orig = original_images.astype(jnp.float32)
    smooth = smooth_images.astype(jnp.float32)
    bs, c, h, w = orig.shape
    ws = window_size
    hw = h * w
    padf = ws * (w + 1)
    hwp = hw + 2 * padf

    # Flat zero padding: for any |sy|,|sx| <= ws the row-major flat shift
    # sy*w+sx stays inside [0, hwp); vertical out-of-range lands in the zero
    # pad, horizontal out-of-range is masked in-kernel.
    flat_pad = ((0, 0), (0, 0), (padf, padf))
    opad = jnp.pad(orig.reshape(bs, c, hw), flat_pad)
    spad = jnp.pad(smooth.reshape(bs, c, hw), flat_pad)

    scale = 1.0 / (h * w * bs) / (ws ** 2)

    kernel = functools.partial(
        _smoothness_kernel,
        height=h, width=w, window_size=ws,
        sigma_color_coeff=1.0 / (sigma_color * sigma_color * 2.0),
        sigma_space_coeff=1.0 / (sigma_space * sigma_space * 2.0),
        lp=lp, c1=c1, c2=c2, alpha=alpha, eps=eps, scale=scale,
    )

    # One batch element per grid step; each step writes its own output block,
    # so the batch axis is "parallel" (v7x shards it across its 2 TensorCores).
    # Per-step VMEM: 2 x (c, hwp) f32 blocks, double buffered — a few KiB for
    # 16x16 images; larger images would add halo-tiling over H here.
    out = pl.pallas_call(
        kernel,
        out_shape=jax.ShapeDtypeStruct((bs, 8, 128), jnp.float32),
        grid=(bs,),
        in_specs=[
            pl.BlockSpec((1, c, hwp), lambda b: (b, 0, 0)),
            pl.BlockSpec((1, c, hwp), lambda b: (b, 0, 0)),
        ],
        out_specs=pl.BlockSpec((1, 8, 128), lambda b: (b, 0, 0)),
        compiler_params=pltpu.CompilerParams(
            dimension_semantics=("parallel",)),
    )(opad, spad)
    return jnp.sum(out[:, 0, 0])


# ----------------------------------------------------------------------------
# Plain-JAX reference (mirrors the PyTorch forward, same EdgeResponse stand-in)
# ----------------------------------------------------------------------------
def smoothness_loss_ref(original_images, smooth_images, *,
                        sigma_color=0.1, sigma_space=7.0, lp=0.8,
                        c1=10.0, c2=5.0, window_size=2, alpha=5.0,
                        eps=1e-6):
    orig = original_images.astype(jnp.float32)
    smooth = smooth_images.astype(jnp.float32)
    sc = 1.0 / (sigma_color * sigma_color * 2.0)
    ss = 1.0 / (sigma_space * sigma_space * 2.0)
    bs, c, h, w = orig.shape
    ws = window_size
    kside = 2 * ws + 1

    pad = ((0, 0), (0, 0), (ws, ws), (ws, ws))
    opad = jnp.pad(orig, pad)
    spad = jnp.pad(smooth, pad)

    po = jnp.stack([opad[:, :, dy:dy + h, dx:dx + w]
                    for dy in range(kside) for dx in range(kside)], axis=1)
    ps = jnp.stack([spad[:, :, dy:dy + h, dx:dx + w]
                    for dy in range(kside) for dx in range(kside)], axis=1)

    ti = jnp.abs(jnp.where(ps > 0, ps - smooth[:, None], 0.0))

    er_o = jnp.sum(jnp.abs(po - orig[:, None]), axis=(1, 2))    # (bs, h, w)
    er_s = jnp.sum(jnp.abs(ps - smooth[:, None]), axis=(1, 2))  # (bs, h, w)
    use_large = ((er_o < c1) & ((er_s - er_o) > c2))[:, None, None]
    use_small = jnp.logical_not(use_large)

    d = jnp.arange(-ws, ws + 1)
    ws_k = jnp.exp(-ss * (d[:, None] ** 2 + d[None, :] ** 2).astype(jnp.float32))
    ws_k = ws_k.reshape(1, kside * kside, 1, 1, 1)

    color_diff = jnp.sum((po - orig[:, None]) ** 2, axis=2, keepdims=True)
    wr = jnp.exp(-sc * color_diff)

    ws_m = jnp.where(use_large, ws_k, 0.0)
    wr_m = jnp.where(use_small, wr, 0.0)

    large = alpha * ws_m * ti ** 2
    small = wr_m * jnp.exp(lp * jnp.log(ti + eps))
    scale = 1.0 / (h * w * bs) / (ws ** 2)
    return scale * jnp.sum(large + small)


if __name__ == "__main__":
    # Small shapes consistent with the module: image_size = H = W = 16,
    # window_size = 2 (K = 25 window offsets), batch = 2, channels = 3.
    key = jax.random.PRNGKey(0)
    k1, k2 = jax.random.split(key)
    original_images = 0.2 * jax.random.uniform(k1, (2, 3, 16, 16), jnp.float32)
    smooth_images = jax.random.uniform(k2, (2, 3, 16, 16), jnp.float32)

    params = dict(sigma_color=0.1, sigma_space=7.0, lp=0.8,
                  c1=10.0, c2=5.0, window_size=2, alpha=5.0)

    loss = smoothness_loss_pallas(original_images, smooth_images, **params)
    loss = jax.block_until_ready(loss)

    ref = jax.block_until_ready(
        smoothness_loss_ref(original_images, smooth_images, **params))

    np.testing.assert_allclose(np.asarray(loss), np.asarray(ref),
                               rtol=1e-3, atol=1e-5)
    print("KERNEL_OK")
</pallas_src>

<mosaic_0001>
module attributes {stable_mosaic.version = 11 : i64} {
  func.func @_smoothness_kernel(%arg0: i32, %arg1: memref<1x3x324xf32, #tpu.memory_space<vmem>>, %arg2: memref<1x3x324xf32, #tpu.memory_space<vmem>>, %arg3: memref<1x8x128xf32, #tpu.memory_space<vmem>>) attributes {dimension_semantics = [#tpu.dimension_semantics<parallel>], iteration_bounds = array<i64: 2>, scalar_prefetch = 0 : i64, scratch_operands = 0 : i64, tpu.core_type = #tpu.core_type<tc>, window_params = [{transform_indices = @transform_0, window_bounds = array<i64: 1, 3, 324>}, {transform_indices = @transform_1, window_bounds = array<i64: 1, 3, 324>}, {transform_indices = @transform_2, window_bounds = array<i64: 1, 8, 128>}]} {
    %c0 = arith.constant 0 : index
    %c0_0 = arith.constant 0 : index
    %c0_1 = arith.constant 0 : index
    %0 = vector.load %arg1[%c0, %c0_0, %c0_1] : memref<1x3x324xf32, #tpu.memory_space<vmem>>, vector<1x3x324xf32>
    %1 = vector.shape_cast %0 : vector<1x3x324xf32> to vector<3x324xf32>
    %c0_2 = arith.constant 0 : index
    %c0_3 = arith.constant 0 : index
    %c0_4 = arith.constant 0 : index
    %2 = vector.load %arg2[%c0_2, %c0_3, %c0_4] : memref<1x3x324xf32, #tpu.memory_space<vmem>>, vector<1x3x324xf32>
    %3 = vector.shape_cast %2 : vector<1x3x324xf32> to vector<3x324xf32>
    %4 = vector.extract_strided_slice %1 {offsets = [0, 34], sizes = [3, 256], strides = [1, 1]} : vector<3x324xf32> to vector<3x256xf32>
    %5 = vector.extract_strided_slice %3 {offsets = [0, 34], sizes = [3, 256], strides = [1, 1]} : vector<3x324xf32> to vector<3x256xf32>
    %6 = tpu.iota {dimensions = array<i32: 1>} : vector<1x256xi32>
    %c16_i32 = arith.constant 16 : i32
    %c0_i32 = arith.constant 0 : i32
    %7 = arith.cmpi eq, %c16_i32, %c0_i32 : i32
    %c1_i32 = arith.constant 1 : i32
    %8 = arith.select %7, %c1_i32, %c16_i32 : i32
    %9 = vector.broadcast %8 : i32 to vector<1x256xi32>
    %10 = arith.remsi %6, %9 : vector<1x256xi32>
    %c0_i32_5 = arith.constant 0 : i32
    %11 = vector.broadcast %c0_i32_5 : i32 to vector<1x256xi32>
    %12 = arith.cmpi ne, %10, %11 : vector<1x256xi32>
    %c0_i32_6 = arith.constant 0 : i32
    %13 = vector.broadcast %c0_i32_6 : i32 to vector<1x256xi32>
    %14 = arith.cmpi slt, %10, %13 : vector<1x256xi32>
    %c0_i32_7 = arith.constant 0 : i32
    %15 = arith.cmpi slt, %8, %c0_i32_7 : i32
    %16 = vector.broadcast %15 : i1 to vector<1x256xi1>
    %17 = vector.broadcast %16 : vector<1x256xi1> to vector<1x256xi1>
    %18 = arith.xori %14, %17 : vector<1x256xi1>
    %19 = arith.andi %18, %12 : vector<1x256xi1>
    %20 = vector.broadcast %8 : i32 to vector<1x256xi32>
    %21 = arith.addi %10, %20 : vector<1x256xi32>
    %22 = arith.select %19, %21, %10 : vector<1x256xi1>, vector<1x256xi32>
    %c-2_i32 = arith.constant -2 : i32
    %23 = vector.broadcast %c-2_i32 : i32 to vector<1x256xi32>
    %24 = arith.addi %22, %23 : vector<1x256xi32>
    %c0_i32_8 = arith.constant 0 : i32
    %25 = vector.broadcast %c0_i32_8 : i32 to vector<1x256xi32>
    %26 = arith.cmpi sge, %24, %25 : vector<1x256xi32>
    %c-2_i32_9 = arith.constant -2 : i32
    %27 = vector.broadcast %c-2_i32_9 : i32 to vector<1x256xi32>
    %28 = arith.addi %22, %27 : vector<1x256xi32>
    %c16_i32_10 = arith.constant 16 : i32
    %29 = vector.broadcast %c16_i32_10 : i32 to vector<1x256xi32>
    %30 = arith.cmpi slt, %28, %29 : vector<1x256xi32>
    %31 = arith.andi %26, %30 : vector<1x256xi1>
    %c-1_i32 = arith.constant -1 : i32
    %32 = vector.broadcast %c-1_i32 : i32 to vector<1x256xi32>
    %33 = arith.addi %22, %32 : vector<1x256xi32>
    %c0_i32_11 = arith.constant 0 : i32
    %34 = vector.broadcast %c0_i32_11 : i32 to vector<1x256xi32>
    %35 = arith.cmpi sge, %33, %34 : vector<1x256xi32>
    %c-1_i32_12 = arith.constant -1 : i32
    %36 = vector.broadcast %c-1_i32_12 : i32 to vector<1x256xi32>
    %37 = arith.addi %22, %36 : vector<1x256xi32>
    %c16_i32_13 = arith.constant 16 : i32
    %38 = vector.broadcast %c16_i32_13 : i32 to vector<1x256xi32>
    %39 = arith.cmpi slt, %37, %38 : vector<1x256xi32>
    %40 = arith.andi %35, %39 : vector<1x256xi1>
    %c0_i32_14 = arith.constant 0 : i32
    %41 = vector.broadcast %c0_i32_14 : i32 to vector<1x256xi32>
    %42 = arith.addi %22, %41 : vector<1x256xi32>
    %c0_i32_15 = arith.constant 0 : i32
    %43 = vector.broadcast %c0_i32_15 : i32 to vector<1x256xi32>
    %44 = arith.cmpi sge, %42, %43 : vector<1x256xi32>
    %c0_i32_16 = arith.constant 0 : i32
    %45 = vector.broadcast %c0_i32_16 : i32 to vector<1x256xi32>
    %46 = arith.addi %22, %45 : vector<1x256xi32>
    %c16_i32_17 = arith.constant 16 : i32
    %47 = vector.broadcast %c16_i32_17 : i32 to vector<1x256xi32>
    %48 = arith.cmpi slt, %46, %47 : vector<1x256xi32>
    %49 = arith.andi %44, %48 : vector<1x256xi1>
    %c1_i32_18 = arith.constant 1 : i32
    %50 = vector.broadcast %c1_i32_18 : i32 to vector<1x256xi32>
    %51 = arith.addi %22, %50 : vector<1x256xi32>
    %c0_i32_19 = arith.constant 0 : i32
    %52 = vector.broadcast %c0_i32_19 : i32 to vector<1x256xi32>
    %53 = arith.cmpi sge, %51, %52 : vector<1x256xi32>
    %c1_i32_20 = arith.constant 1 : i32
    %54 = vector.broadcast %c1_i32_20 : i32 to vector<1x256xi32>
    %55 = arith.addi %22, %54 : vector<1x256xi32>
    %c16_i32_21 = arith.constant 16 : i32
    %56 = vector.broadcast %c16_i32_21 : i32 to vector<1x256xi32>
    %57 = arith.cmpi slt, %55, %56 : vector<1x256xi32>
    %58 = arith.andi %53, %57 : vector<1x256xi1>
    %c2_i32 = arith.constant 2 : i32
    %59 = vector.broadcast %c2_i32 : i32 to vector<1x256xi32>
    %60 = arith.addi %22, %59 : vector<1x256xi32>
    %c0_i32_22 = arith.constant 0 : i32
    %61 = vector.broadcast %c0_i32_22 : i32 to vector<1x256xi32>
    %62 = arith.cmpi sge, %60, %61 : vector<1x256xi32>
    %c2_i32_23 = arith.constant 2 : i32
    %63 = vector.broadcast %c2_i32_23 : i32 to vector<1x256xi32>
    %64 = arith.addi %22, %63 : vector<1x256xi32>
    %c16_i32_24 = arith.constant 16 : i32
    %65 = vector.broadcast %c16_i32_24 : i32 to vector<1x256xi32>
    %66 = arith.cmpi slt, %64, %65 : vector<1x256xi32>
    %67 = arith.andi %62, %66 : vector<1x256xi1>
    %cst = arith.constant 0.000000e+00 : f32
    %68 = vector.broadcast %cst : f32 to vector<3x256xf32>
    %cst_25 = arith.constant 0.000000e+00 : f32
    %69 = vector.broadcast %cst_25 : f32 to vector<3x256xf32>
    %cst_26 = arith.constant 0.000000e+00 : f32
    %70 = vector.broadcast %cst_26 : f32 to vector<3x256xf32>
    %cst_27 = arith.constant 0.000000e+00 : f32
    %71 = vector.broadcast %cst_27 : f32 to vector<3x256xf32>
    %72 = vector.extract_strided_slice %1 {offsets = [0, 0], sizes = [3, 256], strides = [1, 1]} : vector<3x324xf32> to vector<3x256xf32>
    %cst_28 = arith.constant 0.000000e+00 : f32
    %73 = vector.shape_cast %31 : vector<1x256xi1> to vector<1x256xi1>
    %74 = vector.broadcast %73 : vector<1x256xi1> to vector<3x256xi1>
    %75 = vector.broadcast %cst_28 : f32 to vector<3x256xf32>
    %76 = arith.select %74, %72, %75 : vector<3x256xi1>, vector<3x256xf32>
    %77 = vector.extract_strided_slice %3 {offsets = [0, 0], sizes = [3, 256], strides = [1, 1]} : vector<3x324xf32> to vector<3x256xf32>
    %cst_29 = arith.constant 0.000000e+00 : f32
    %78 = vector.shape_cast %31 : vector<1x256xi1> to vector<1x256xi1>
    %79 = vector.broadcast %78 : vector<1x256xi1> to vector<3x256xi1>
    %80 = vector.broadcast %cst_29 : f32 to vector<3x256xf32>
    %81 = arith.select %79, %77, %80 : vector<3x256xi1>, vector<3x256xf32>
    %82 = arith.subf %76, %4 : vector<3x256xf32>
    %83 = math.absf %82 : vector<3x256xf32>
    %84 = arith.addf %68, %83 : vector<3x256xf32>
    %85 = arith.subf %81, %5 : vector<3x256xf32>
    %86 = math.absf %85 : vector<3x256xf32>
    %87 = arith.addf %69, %86 : vector<3x256xf32>
    %88 = arith.mulf %82, %82 : vector<3x256xf32>
    %cst_30 = arith.constant dense<0.000000e+00> : vector<256xf32>
    %89 = vector.multi_reduction <add>, %88, %cst_30 [0] : vector<3x256xf32> to vector<256xf32>
    %90 = vector.shape_cast %89 : vector<256xf32> to vector<1x256xf32>
    %cst_31 = arith.constant -5.000000e+01 : f32
    %91 = vector.broadcast %cst_31 : f32 to vector<1x256xf32>
    %92 = arith.mulf %91, %90 : vector<1x256xf32>
    %93 = math.exp %92 : vector<1x256xf32>
    %cst_32 = arith.constant 0.000000e+00 : f32
    %94 = vector.broadcast %cst_32 : f32 to vector<3x256xf32>
    %95 = arith.cmpf ogt, %81, %94 : vector<3x256xf32>
    %96 = arith.subf %81, %5 : vector<3x256xf32>
    %cst_33 = arith.constant 0.000000e+00 : f32
    %97 = vector.broadcast %cst_33 : f32 to vector<3x256xf32>
    %98 = arith.select %95, %96, %97 : vector<3x256xi1>, vector<3x256xf32>
    %99 = math.absf %98 : vector<3x256xf32>
    %100 = arith.mulf %99, %99 : vector<3x256xf32>
    %cst_34 = arith.constant 0.921610474 : f32
    %101 = vector.broadcast %cst_34 : f32 to vector<3x256xf32>
    %102 = arith.mulf %101, %100 : vector<3x256xf32>
    %103 = arith.addf %70, %102 : vector<3x256xf32>
    %cst_35 = arith.constant 9.99999997E-7 : f32
    %104 = vector.broadcast %cst_35 : f32 to vector<3x256xf32>
    %105 = arith.addf %99, %104 : vector<3x256xf32>
    %106 = math.log %105 : vector<3x256xf32>
    %cst_36 = arith.constant 8.000000e-01 : f32
    %107 = vector.broadcast %cst_36 : f32 to vector<3x256xf32>
    %108 = arith.mulf %107, %106 : vector<3x256xf32>
    %109 = math.exp %108 : vector<3x256xf32>
    %110 = vector.broadcast %93 : vector<1x256xf32> to vector<3x256xf32>
    %111 = arith.mulf %110, %109 : vector<3x256xf32>
    %112 = arith.addf %71, %111 : vector<3x256xf32>
    %113 = vector.extract_strided_slice %1 {offsets = [0, 1], sizes = [3, 256], strides = [1, 1]} : vector<3x324xf32> to vector<3x256xf32>
    %cst_37 = arith.constant 0.000000e+00 : f32
    %114 = vector.shape_cast %40 : vector<1x256xi1> to vector<1x256xi1>
    %115 = vector.broadcast %114 : vector<1x256xi1> to vector<3x256xi1>
    %116 = vector.broadcast %cst_37 : f32 to vector<3x256xf32>
    %117 = arith.select %115, %113, %116 : vector<3x256xi1>, vector<3x256xf32>
    %118 = vector.extract_strided_slice %3 {offsets = [0, 1], sizes = [3, 256], strides = [1, 1]} : vector<3x324xf32> to vector<3x256xf32>
    %cst_38 = arith.constant 0.000000e+00 : f32
    %119 = vector.shape_cast %40 : vector<1x256xi1> to vector<1x256xi1>
    %120 = vector.broadcast %119 : vector<1x256xi1> to vector<3x256xi1>
    %121 = vector.broadcast %cst_38 : f32 to vector<3x256xf32>
    %122 = arith.select %120, %118, %121 : vector<3x256xi1>, vector<3x256xf32>
    %123 = arith.subf %117, %4 : vector<3x256xf32>
    %124 = math.absf %123 : vector<3x256xf32>
    %125 = arith.addf %84, %124 : vector<3x256xf32>
    %126 = arith.subf %122, %5 : vector<3x256xf32>
    %127 = math.absf %126 : vector<3x256xf32>
    %128 = arith.addf %87, %127 : vector<3x256xf32>
    %129 = arith.mulf %123, %123 : vector<3x256xf32>
    %cst_39 = arith.constant dense<0.000000e+00> : vector<256xf32>
    %130 = vector.multi_reduction <add>, %129, %cst_39 [0] : vector<3x256xf32> to vector<256xf32>
    %131 = vector.shape_cast %130 : vector<256xf32> to vector<1x256xf32>
    %cst_40 = arith.constant -5.000000e+01 : f32
    %132 = vector.broadcast %cst_40 : f32 to vector<1x256xf32>
    %133 = arith.mulf %132, %131 : vector<1x256xf32>
    %134 = math.exp %133 : vector<1x256xf32>
    %cst_41 = arith.constant 0.000000e+00 : f32
    %135 = vector.broadcast %cst_41 : f32 to vector<3x256xf32>
    %136 = arith.cmpf ogt, %122, %135 : vector<3x256xf32>
    %137 = arith.subf %122, %5 : vector<3x256xf32>
    %cst_42 = arith.constant 0.000000e+00 : f32
    %138 = vector.broadcast %cst_42 : f32 to vector<3x256xf32>
    %139 = arith.select %136, %137, %138 : vector<3x256xi1>, vector<3x256xf32>
    %140 = math.absf %139 : vector<3x256xf32>
    %141 = arith.mulf %140, %140 : vector<3x256xf32>
    %cst_43 = arith.constant 0.950259268 : f32
    %142 = vector.broadcast %cst_43 : f32 to vector<3x256xf32>
    %143 = arith.mulf %142, %141 : vector<3x256xf32>
    %144 = arith.addf %103, %143 : vector<3x256xf32>
    %cst_44 = arith.constant 9.99999997E-7 : f32
    %145 = vector.broadcast %cst_44 : f32 to vector<3x256xf32>
    %146 = arith.addf %140, %145 : vector<3x256xf32>
    %147 = math.log %146 : vector<3x256xf32>
    %cst_45 = arith.constant 8.000000e-01 : f32
    %148 = vector.broadcast %cst_45 : f32 to vector<3x256xf32>
    %149 = arith.mulf %148, %147 : vector<3x256xf32>
    %150 = math.exp %149 : vector<3x256xf32>
    %151 = vector.broadcast %134 : vector<1x256xf32> to vector<3x256xf32>
    %152 = arith.mulf %151, %150 : vector<3x256xf32>
    %153 = arith.addf %112, %152 : vector<3x256xf32>
    %154 = vector.extract_strided_slice %1 {offsets = [0, 2], sizes = [3, 256], strides = [1, 1]} : vector<3x324xf32> to vector<3x256xf32>
    %cst_46 = arith.constant 0.000000e+00 : f32
    %155 = vector.shape_cast %49 : vector<1x256xi1> to vector<1x256xi1>
    %156 = vector.broadcast %155 : vector<1x256xi1> to vector<3x256xi1>
    %157 = vector.broadcast %cst_46 : f32 to vector<3x256xf32>
    %158 = arith.select %156, %154, %157 : vector<3x256xi1>, vector<3x256xf32>
    %159 = vector.extract_strided_slice %3 {offsets = [0, 2], sizes = [3, 256], strides = [1, 1]} : vector<3x324xf32> to vector<3x256xf32>
    %cst_47 = arith.constant 0.000000e+00 : f32
    %160 = vector.shape_cast %49 : vector<1x256xi1> to vector<1x256xi1>
    %161 = vector.broadcast %160 : vector<1x256xi1> to vector<3x256xi1>
    %162 = vector.broadcast %cst_47 : f32 to vector<3x256xf32>
    %163 = arith.select %161, %159, %162 : vector<3x256xi1>, vector<3x256xf32>
    %164 = arith.subf %158, %4 : vector<3x256xf32>
    %165 = math.absf %164 : vector<3x256xf32>
    %166 = arith.addf %125, %165 : vector<3x256xf32>
    %167 = arith.subf %163, %5 : vector<3x256xf32>
    %168 = math.absf %167 : vector<3x256xf32>
    %169 = arith.addf %128, %168 : vector<3x256xf32>
    %170 = arith.mulf %164, %164 : vector<3x256xf32>
    %cst_48 = arith.constant dense<0.000000e+00> : vector<256xf32>
    %171 = vector.multi_reduction <add>, %170, %cst_48 [0] : vector<3x256xf32> to vector<256xf32>
    %172 = vector.shape_cast %171 : vector<256xf32> to vector<1x256xf32>
    %cst_49 = arith.constant -5.000000e+01 : f32
    %173 = vector.broadcast %cst_49 : f32 to vector<1x256xf32>
    %174 = arith.mulf %173, %172 : vector<1x256xf32>
    %175 = math.exp %174 : vector<1x256xf32>
    %cst_50 = arith.constant 0.000000e+00 : f32
    %176 = vector.broadcast %cst_50 : f32 to vector<3x256xf32>
    %177 = arith.cmpf ogt, %163, %176 : vector<3x256xf32>
    %178 = arith.subf %163, %5 : vector<3x256xf32>
    %cst_51 = arith.constant 0.000000e+00 : f32
    %179 = vector.broadcast %cst_51 : f32 to vector<3x256xf32>
    %180 = arith.select %177, %178, %179 : vector<3x256xi1>, vector<3x256xf32>
    %181 = math.absf %180 : vector<3x256xf32>
    %182 = arith.mulf %181, %181 : vector<3x256xf32>
    %cst_52 = arith.constant 0.960005462 : f32
    %183 = vector.broadcast %cst_52 : f32 to vector<3x256xf32>
    %184 = arith.mulf %183, %182 : vector<3x256xf32>
    %185 = arith.addf %144, %184 : vector<3x256xf32>
    %cst_53 = arith.constant 9.99999997E-7 : f32
    %186 = vector.broadcast %cst_53 : f32 to vector<3x256xf32>
    %187 = arith.addf %181, %186 : vector<3x256xf32>
    %188 = math.log %187 : vector<3x256xf32>
    %cst_54 = arith.constant 8.000000e-01 : f32
    %189 = vector.broadcast %cst_54 : f32 to vector<3x256xf32>
    %190 = arith.mulf %189, %188 : vector<3x256xf32>
    %191 = math.exp %190 : vector<3x256xf32>
    %192 = vector.broadcast %175 : vector<1x256xf32> to vector<3x256xf32>
    %193 = arith.mulf %192, %191 : vector<3x256xf32>
    %194 = arith.addf %153, %193 : vector<3x256xf32>
    %195 = vector.extract_strided_slice %1 {offsets = [0, 3], sizes = [3, 256], strides = [1, 1]} : vector<3x324xf32> to vector<3x256xf32>
    %cst_55 = arith.constant 0.000000e+00 : f32
    %196 = vector.shape_cast %58 : vector<1x256xi1> to vector<1x256xi1>
    %197 = vector.broadcast %196 : vector<1x256xi1> to vector<3x256xi1>
    %198 = vector.broadcast %cst_55 : f32 to vector<3x256xf32>
    %199 = arith.select %197, %195, %198 : vector<3x256xi1>, vector<3x256xf32>
    %200 = vector.extract_strided_slice %3 {offsets = [0, 3], sizes = [3, 256], strides = [1, 1]} : vector<3x324xf32> to vector<3x256xf32>
    %cst_56 = arith.constant 0.000000e+00 : f32
    %201 = vector.shape_cast %58 : vector<1x256xi1> to vector<1x256xi1>
    %202 = vector.broadcast %201 : vector<1x256xi1> to vector<3x256xi1>
    %203 = vector.broadcast %cst_56 : f32 to vector<3x256xf32>
    %204 = arith.select %202, %200, %203 : vector<3x256xi1>, vector<3x256xf32>
    %205 = arith.subf %199, %4 : vector<3x256xf32>
    %206 = math.absf %205 : vector<3x256xf32>
    %207 = arith.addf %166, %206 : vector<3x256xf32>
    %208 = arith.subf %204, %5 : vector<3x256xf32>
    %209 = math.absf %208 : vector<3x256xf32>
    %210 = arith.addf %169, %209 : vector<3x256xf32>
    %211 = arith.mulf %205, %205 : vector<3x256xf32>
    %cst_57 = arith.constant dense<0.000000e+00> : vector<256xf32>
    %212 = vector.multi_reduction <add>, %211, %cst_57 [0] : vector<3x256xf32> to vector<256xf32>
    %213 = vector.shape_cast %212 : vector<256xf32> to vector<1x256xf32>
    %cst_58 = arith.constant -5.000000e+01 : f32
    %214 = vector.broadcast %cst_58 : f32 to vector<1x256xf32>
    %215 = arith.mulf %214, %213 : vector<1x256xf32>
    %216 = math.exp %215 : vector<1x256xf32>
    %cst_59 = arith.constant 0.000000e+00 : f32
    %217 = vector.broadcast %cst_59 : f32 to vector<3x256xf32>
    %218 = arith.cmpf ogt, %204, %217 : vector<3x256xf32>
    %219 = arith.subf %204, %5 : vector<3x256xf32>
    %cst_60 = arith.constant 0.000000e+00 : f32
    %220 = vector.broadcast %cst_60 : f32 to vector<3x256xf32>
    %221 = arith.select %218, %219, %220 : vector<3x256xi1>, vector<3x256xf32>
    %222 = math.absf %221 : vector<3x256xf32>
    %223 = arith.mulf %222, %222 : vector<3x256xf32>
    %cst_61 = arith.constant 0.950259268 : f32
    %224 = vector.broadcast %cst_61 : f32 to vector<3x256xf32>
    %225 = arith.mulf %224, %223 : vector<3x256xf32>
    %226 = arith.addf %185, %225 : vector<3x256xf32>
    %cst_62 = arith.constant 9.99999997E-7 : f32
    %227 = vector.broadcast %cst_62 : f32 to vector<3x256xf32>
    %228 = arith.addf %222, %227 : vector<3x256xf32>
    %229 = math.log %228 : vector<3x256xf32>
    %cst_63 = arith.constant 8.000000e-01 : f32
    %230 = vector.broadcast %cst_63 : f32 to vector<3x256xf32>
    %231 = arith.mulf %230, %229 : vector<3x256xf32>
    %232 = math.exp %231 : vector<3x256xf32>
    %233 = vector.broadcast %216 : vector<1x256xf32> to vector<3x256xf32>
    %234 = arith.mulf %233, %232 : vector<3x256xf32>
    %235 = arith.addf %194, %234 : vector<3x256xf32>
    %236 = vector.extract_strided_slice %1 {offsets = [0, 4], sizes = [3, 256], strides = [1, 1]} : vector<3x324xf32> to vector<3x256xf32>
    %cst_64 = arith.constant 0.000000e+00 : f32
    %237 = vector.shape_cast %67 : vector<1x256xi1> to vector<1x256xi1>
    %238 = vector.broadcast %237 : vector<1x256xi1> to vector<3x256xi1>
    %239 = vector.broadcast %cst_64 : f32 to vector<3x256xf32>
    %240 = arith.select %238, %236, %239 : vector<3x256xi1>, vector<3x256xf32>
    %241 = vector.extract_strided_slice %3 {offsets = [0, 4], sizes = [3, 256], strides = [1, 1]} : vector<3x324xf32> to vector<3x256xf32>
    %cst_65 = arith.constant 0.000000e+00 : f32
    %242 = vector.shape_cast %67 : vector<1x256xi1> to vector<1x256xi1>
    %243 = vector.broadcast %242 : vector<1x256xi1> to vector<3x256xi1>
    %244 = vector.broadcast %cst_65 : f32 to vector<3x256xf32>
    %245 = arith.select %243, %241, %244 : vector<3x256xi1>, vector<3x256xf32>
    %246 = arith.subf %240, %4 : vector<3x256xf32>
    %247 = math.absf %246 : vector<3x256xf32>
    %248 = arith.addf %207, %247 : vector<3x256xf32>
    %249 = arith.subf %245, %5 : vector<3x256xf32>
    %250 = math.absf %249 : vector<3x256xf32>
    %251 = arith.addf %210, %250 : vector<3x256xf32>
    %252 = arith.mulf %246, %246 : vector<3x256xf32>
    %cst_66 = arith.constant dense<0.000000e+00> : vector<256xf32>
    %253 = vector.multi_reduction <add>, %252, %cst_66 [0] : vector<3x256xf32> to vector<256xf32>
    %254 = vector.shape_cast %253 : vector<256xf32> to vector<1x256xf32>
    %cst_67 = arith.constant -5.000000e+01 : f32
    %255 = vector.broadcast %cst_67 : f32 to vector<1x256xf32>
    %256 = arith.mulf %255, %254 : vector<1x256xf32>
    %257 = math.exp %256 : vector<1x256xf32>
    %cst_68 = arith.constant 0.000000e+00 : f32
    %258 = vector.broadcast %cst_68 : f32 to vector<3x256xf32>
    %259 = arith.cmpf ogt, %245, %258 : vector<3x256xf32>
    %260 = arith.subf %245, %5 : vector<3x256xf32>
    %cst_69 = arith.constant 0.000000e+00 : f32
    %261 = vector.broadcast %cst_69 : f32 to vector<3x256xf32>
    %262 = arith.select %259, %260, %261 : vector<3x256xi1>, vector<3x256xf32>
    %263 = math.absf %262 : vector<3x256xf32>
    %264 = arith.mulf %263, %263 : vector<3x256xf32>
    %cst_70 = arith.constant 0.921610474 : f32
    %265 = vector.broadcast %cst_70 : f32 to vector<3x256xf32>
    %266 = arith.mulf %265, %264 : vector<3x256xf32>
    %267 = arith.addf %226, %266 : vector<3x256xf32>
    %cst_71 = arith.constant 9.99999997E-7 : f32
    %268 = vector.broadcast %cst_71 : f32 to vector<3x256xf32>
    %269 = arith.addf %263, %268 : vector<3x256xf32>
    %270 = math.log %269 : vector<3x256xf32>
    %cst_72 = arith.constant 8.000000e-01 : f32
    %271 = vector.broadcast %cst_72 : f32 to vector<3x256xf32>
    %272 = arith.mulf %271, %270 : vector<3x256xf32>
    %273 = math.exp %272 : vector<3x256xf32>
    %274 = vector.broadcast %257 : vector<1x256xf32> to vector<3x256xf32>
    %275 = arith.mulf %274, %273 : vector<3x256xf32>
    %276 = arith.addf %235, %275 : vector<3x256xf32>
    %277 = vector.extract_strided_slice %1 {offsets = [0, 16], sizes = [3, 256], strides = [1, 1]} : vector<3x324xf32> to vector<3x256xf32>
    %cst_73 = arith.constant 0.000000e+00 : f32
    %278 = vector.shape_cast %31 : vector<1x256xi1> to vector<1x256xi1>
    %279 = vector.broadcast %278 : vector<1x256xi1> to vector<3x256xi1>
    %280 = vector.broadcast %cst_73 : f32 to vector<3x256xf32>
    %281 = arith.select %279, %277, %280 : vector<3x256xi1>, vector<3x256xf32>
    %282 = vector.extract_strided_slice %3 {offsets = [0, 16], sizes = [3, 256], strides = [1, 1]} : vector<3x324xf32> to vector<3x256xf32>
    %cst_74 = arith.constant 0.000000e+00 : f32
    %283 = vector.shape_cast %31 : vector<1x256xi1> to vector<1x256xi1>
    %284 = vector.broadcast %283 : vector<1x256xi1> to vector<3x256xi1>
    %285 = vector.broadcast %cst_74 : f32 to vector<3x256xf32>
    %286 = arith.select %284, %282, %285 : vector<3x256xi1>, vector<3x256xf32>
    %287 = arith.subf %281, %4 : vector<3x256xf32>
    %288 = math.absf %287 : vector<3x256xf32>
    %289 = arith.addf %248, %288 : vector<3x256xf32>
    %290 = arith.subf %286, %5 : vector<3x256xf32>
    %291 = math.absf %290 : vector<3x256xf32>
    %292 = arith.addf %251, %291 : vector<3x256xf32>
    %293 = arith.mulf %287, %287 : vector<3x256xf32>
    %cst_75 = arith.constant dense<0.000000e+00> : vector<256xf32>
    %294 = vector.multi_reduction <add>, %293, %cst_75 [0] : vector<3x256xf32> to vector<256xf32>
    %295 = vector.shape_cast %294 : vector<256xf32> to vector<1x256xf32>
    %cst_76 = arith.constant -5.000000e+01 : f32
    %296 = vector.broadcast %cst_76 : f32 to vector<1x256xf32>
    %297 = arith.mulf %296, %295 : vector<1x256xf32>
    %298 = math.exp %297 : vector<1x256xf32>
    %cst_77 = arith.constant 0.000000e+00 : f32
    %299 = vector.broadcast %cst_77 : f32 to vector<3x256xf32>
    %300 = arith.cmpf ogt, %286, %299 : vector<3x256xf32>
    %301 = arith.subf %286, %5 : vector<3x256xf32>
    %cst_78 = arith.constant 0.000000e+00 : f32
    %302 = vector.broadcast %cst_78 : f32 to vector<3x256xf32>
    %303 = arith.select %300, %301, %302 : vector<3x256xi1>, vector<3x256xf32>
    %304 = math.absf %303 : vector<3x256xf32>
    %305 = arith.mulf %304, %304 : vector<3x256xf32>
    %cst_79 = arith.constant 0.950259268 : f32
    %306 = vector.broadcast %cst_79 : f32 to vector<3x256xf32>
    %307 = arith.mulf %306, %305 : vector<3x256xf32>
    %308 = arith.addf %267, %307 : vector<3x256xf32>
    %cst_80 = arith.constant 9.99999997E-7 : f32
    %309 = vector.broadcast %cst_80 : f32 to vector<3x256xf32>
    %310 = arith.addf %304, %309 : vector<3x256xf32>
    %311 = math.log %310 : vector<3x256xf32>
    %cst_81 = arith.constant 8.000000e-01 : f32
    %312 = vector.broadcast %cst_81 : f32 to vector<3x256xf32>
    %313 = arith.mulf %312, %311 : vector<3x256xf32>
    %314 = math.exp %313 : vector<3x256xf32>
    %315 = vector.broadcast %298 : vector<1x256xf32> to vector<3x256xf32>
    %316 = arith.mulf %315, %314 : vector<3x256xf32>
    %317 = arith.addf %276, %316 : vector<3x256xf32>
    %318 = vector.extract_strided_slice %1 {offsets = [0, 17], sizes = [3, 256], strides = [1, 1]} : vector<3x324xf32> to vector<3x256xf32>
    %cst_82 = arith.constant 0.000000e+00 : f32
    %319 = vector.shape_cast %40 : vector<1x256xi1> to vector<1x256xi1>
    %320 = vector.broadcast %319 : vector<1x256xi1> to vector<3x256xi1>
    %321 = vector.broadcast %cst_82 : f32 to vector<3x256xf32>
    %322 = arith.select %320, %318, %321 : vector<3x256xi1>, vector<3x256xf32>
    %323 = vector.extract_strided_slice %3 {offsets = [0, 17], sizes = [3, 256], strides = [1, 1]} : vector<3x324xf32> to vector<3x256xf32>
    %cst_83 = arith.constant 0.000000e+00 : f32
    %324 = vector.shape_cast %40 : vector<1x256xi1> to vector<1x256xi1>
    %325 = vector.broadcast %324 : vector<1x256xi1> to vector<3x256xi1>
    %326 = vector.broadcast %cst_83 : f32 to vector<3x256xf32>
    %327 = arith.select %325, %323, %326 : vector<3x256xi1>, vector<3x256xf32>
    %328 = arith.subf %322, %4 : vector<3x256xf32>
    %329 = math.absf %328 : vector<3x256xf32>
    %330 = arith.addf %289, %329 : vector<3x256xf32>
    %331 = arith.subf %327, %5 : vector<3x256xf32>
    %332 = math.absf %331 : vector<3x256xf32>
    %333 = arith.addf %292, %332 : vector<3x256xf32>
    %334 = arith.mulf %328, %328 : vector<3x256xf32>
    %cst_84 = arith.constant dense<0.000000e+00> : vector<256xf32>
    %335 = vector.multi_reduction <add>, %334, %cst_84 [0] : vector<3x256xf32> to vector<256xf32>
    %336 = vector.shape_cast %335 : vector<256xf32> to vector<1x256xf32>
    %cst_85 = arith.constant -5.000000e+01 : f32
    %337 = vector.broadcast %cst_85 : f32 to vector<1x256xf32>
    %338 = arith.mulf %337, %336 : vector<1x256xf32>
    %339 = math.exp %338 : vector<1x256xf32>
    %cst_86 = arith.constant 0.000000e+00 : f32
    %340 = vector.broadcast %cst_86 : f32 to vector<3x256xf32>
    %341 = arith.cmpf ogt, %327, %340 : vector<3x256xf32>
    %342 = arith.subf %327, %5 : vector<3x256xf32>
    %cst_87 = arith.constant 0.000000e+00 : f32
    %343 = vector.broadcast %cst_87 : f32 to vector<3x256xf32>
    %344 = arith.select %341, %342, %343 : vector<3x256xi1>, vector<3x256xf32>
    %345 = math.absf %344 : vector<3x256xf32>
    %346 = arith.mulf %345, %345 : vector<3x256xf32>
    %cst_88 = arith.constant 0.979798674 : f32
    %347 = vector.broadcast %cst_88 : f32 to vector<3x256xf32>
    %348 = arith.mulf %347, %346 : vector<3x256xf32>
    %349 = arith.addf %308, %348 : vector<3x256xf32>
    %cst_89 = arith.constant 9.99999997E-7 : f32
    %350 = vector.broadcast %cst_89 : f32 to vector<3x256xf32>
    %351 = arith.addf %345, %350 : vector<3x256xf32>
    %352 = math.log %351 : vector<3x256xf32>
    %cst_90 = arith.constant 8.000000e-01 : f32
    %353 = vector.broadcast %cst_90 : f32 to vector<3x256xf32>
    %354 = arith.mulf %353, %352 : vector<3x256xf32>
    %355 = math.exp %354 : vector<3x256xf32>
    %356 = vector.broadcast %339 : vector<1x256xf32> to vector<3x256xf32>
    %357 = arith.mulf %356, %355 : vector<3x256xf32>
    %358 = arith.addf %317, %357 : vector<3x256xf32>
    %359 = vector.extract_strided_slice %1 {offsets = [0, 18], sizes = [3, 256], strides = [1, 1]} : vector<3x324xf32> to vector<3x256xf32>
    %cst_91 = arith.constant 0.000000e+00 : f32
    %360 = vector.shape_cast %49 : vector<1x256xi1> to vector<1x256xi1>
    %361 = vector.broadcast %360 : vector<1x256xi1> to vector<3x256xi1>
    %362 = vector.broadcast %cst_91 : f32 to vector<3x256xf32>
    %363 = arith.select %361, %359, %362 : vector<3x256xi1>, vector<3x256xf32>
    %364 = vector.extract_strided_slice %3 {offsets = [0, 18], sizes = [3, 256], strides = [1, 1]} : vector<3x324xf32> to vector<3x256xf32>
    %cst_92 = arith.constant 0.000000e+00 : f32
    %365 = vector.shape_cast %49 : vector<1x256xi1> to vector<1x256xi1>
    %366 = vector.broadcast %365 : vector<1x256xi1> to vector<3x256xi1>
    %367 = vector.broadcast %cst_92 : f32 to vector<3x256xf32>
    %368 = arith.select %366, %364, %367 : vector<3x256xi1>, vector<3x256xf32>
    %369 = arith.subf %363, %4 : vector<3x256xf32>
    %370 = math.absf %369 : vector<3x256xf32>
    %371 = arith.addf %330, %370 : vector<3x256xf32>
    %372 = arith.subf %368, %5 : vector<3x256xf32>
    %373 = math.absf %372 : vector<3x256xf32>
    %374 = arith.addf %333, %373 : vector<3x256xf32>
    %375 = arith.mulf %369, %369 : vector<3x256xf32>
    %cst_93 = arith.constant dense<0.000000e+00> : vector<256xf32>
    %376 = vector.multi_reduction <add>, %375, %cst_93 [0] : vector<3x256xf32> to vector<256xf32>
    %377 = vector.shape_cast %376 : vector<256xf32> to vector<1x256xf32>
    %cst_94 = arith.constant -5.000000e+01 : f32
    %378 = vector.broadcast %cst_94 : f32 to vector<1x256xf32>
    %379 = arith.mulf %378, %377 : vector<1x256xf32>
    %380 = math.exp %379 : vector<1x256xf32>
    %cst_95 = arith.constant 0.000000e+00 : f32
    %381 = vector.broadcast %cst_95 : f32 to vector<3x256xf32>
    %382 = arith.cmpf ogt, %368, %381 : vector<3x256xf32>
    %383 = arith.subf %368, %5 : vector<3x256xf32>
    %cst_96 = arith.constant 0.000000e+00 : f32
    %384 = vector.broadcast %cst_96 : f32 to vector<3x256xf32>
    %385 = arith.select %382, %383, %384 : vector<3x256xi1>, vector<3x256xf32>
    %386 = math.absf %385 : vector<3x256xf32>
    %387 = arith.mulf %386, %386 : vector<3x256xf32>
    %cst_97 = arith.constant 0.989847779 : f32
    %388 = vector.broadcast %cst_97 : f32 to vector<3x256xf32>
    %389 = arith.mulf %388, %387 : vector<3x256xf32>
    %390 = arith.addf %349, %389 : vector<3x256xf32>
    %cst_98 = arith.constant 9.99999997E-7 : f32
    %391 = vector.broadcast %cst_98 : f32 to vector<3x256xf32>
    %392 = arith.addf %386, %391 : vector<3x256xf32>
    %393 = math.log %392 : vector<3x256xf32>
    %cst_99 = arith.constant 8.000000e-01 : f32
    %394 = vector.broadcast %cst_99 : f32 to vector<3x256xf32>
    %395 = arith.mulf %394, %393 : vector<3x256xf32>
    %396 = math.exp %395 : vector<3x256xf32>
    %397 = vector.broadcast %380 : vector<1x256xf32> to vector<3x256xf32>
    %398 = arith.mulf %397, %396 : vector<3x256xf32>
    %399 = arith.addf %358, %398 : vector<3x256xf32>
    %400 = vector.extract_strided_slice %1 {offsets = [0, 19], sizes = [3, 256], strides = [1, 1]} : vector<3x324xf32> to vector<3x256xf32>
    %cst_100 = arith.constant 0.000000e+00 : f32
    %401 = vector.shape_cast %58 : vector<1x256xi1> to vector<1x256xi1>
    %402 = vector.broadcast %401 : vector<1x256xi1> to vector<3x256xi1>
    %403 = vector.broadcast %cst_100 : f32 to vector<3x256xf32>
    %404 = arith.select %402, %400, %403 : vector<3x256xi1>, vector<3x256xf32>
    %405 = vector.extract_strided_slice %3 {offsets = [0, 19], sizes = [3, 256], strides = [1, 1]} : vector<3x324xf32> to vector<3x256xf32>
    %cst_101 = arith.constant 0.000000e+00 : f32
    %406 = vector.shape_cast %58 : vector<1x256xi1> to vector<1x256xi1>
    %407 = vector.broadcast %406 : vector<1x256xi1> to vector<3x256xi1>
    %408 = vector.broadcast %cst_101 : f32 to vector<3x256xf32>
    %409 = arith.select %407, %405, %408 : vector<3x256xi1>, vector<3x256xf32>
    %410 = arith.subf %404, %4 : vector<3x256xf32>
    %411 = math.absf %410 : vector<3x256xf32>
    %412 = arith.addf %371, %411 : vector<3x256xf32>
    %413 = arith.subf %409, %5 : vector<3x256xf32>
    %414 = math.absf %413 : vector<3x256xf32>
    %415 = arith.addf %374, %414 : vector<3x256xf32>
    %416 = arith.mulf %410, %410 : vector<3x256xf32>
    %cst_102 = arith.constant dense<0.000000e+00> : vector<256xf32>
    %417 = vector.multi_reduction <add>, %416, %cst_102 [0] : vector<3x256xf32> to vector<256xf32>
    %418 = vector.shape_cast %417 : vector<256xf32> to vector<1x256xf32>
    %cst_103 = arith.constant -5.000000e+01 : f32
    %419 = vector.broadcast %cst_103 : f32 to vector<1x256xf32>
    %420 = arith.mulf %419, %418 : vector<1x256xf32>
    %421 = math.exp %420 : vector<1x256xf32>
    %cst_104 = arith.constant 0.000000e+00 : f32
    %422 = vector.broadcast %cst_104 : f32 to vector<3x256xf32>
    %423 = arith.cmpf ogt, %409, %422 : vector<3x256xf32>
    %424 = arith.subf %409, %5 : vector<3x256xf32>
    %cst_105 = arith.constant 0.000000e+00 : f32
    %425 = vector.broadcast %cst_105 : f32 to vector<3x256xf32>
    %426 = arith.select %423, %424, %425 : vector<3x256xi1>, vector<3x256xf32>
    %427 = math.absf %426 : vector<3x256xf32>
    %428 = arith.mulf %427, %427 : vector<3x256xf32>
    %cst_106 = arith.constant 0.979798674 : f32
    %429 = vector.broadcast %cst_106 : f32 to vector<3x256xf32>
    %430 = arith.mulf %429, %428 : vector<3x256xf32>
    %431 = arith.addf %390, %430 : vector<3x256xf32>
    %cst_107 = arith.constant 9.99999997E-7 : f32
    %432 = vector.broadcast %cst_107 : f32 to vector<3x256xf32>
    %433 = arith.addf %427, %432 : vector<3x256xf32>
    %434 = math.log %433 : vector<3x256xf32>
    %cst_108 = arith.constant 8.000000e-01 : f32
    %435 = vector.broadcast %cst_108 : f32 to vector<3x256xf32>
    %436 = arith.mulf %435, %434 : vector<3x256xf32>
    %437 = math.exp %436 : vector<3x256xf32>
    %438 = vector.broadcast %421 : vector<1x256xf32> to vector<3x256xf32>
    %439 = arith.mulf %438, %437 : vector<3x256xf32>
    %440 = arith.addf %399, %439 : vector<3x256xf32>
    %441 = vector.extract_strided_slice %1 {offsets = [0, 20], sizes = [3, 256], strides = [1, 1]} : vector<3x324xf32> to vector<3x256xf32>
    %cst_109 = arith.constant 0.000000e+00 : f32
    %442 = vector.shape_cast %67 : vector<1x256xi1> to vector<1x256xi1>
    %443 = vector.broadcast %442 : vector<1x256xi1> to vector<3x256xi1>
    %444 = vector.broadcast %cst_109 : f32 to vector<3x256xf32>
    %445 = arith.select %443, %441, %444 : vector<3x256xi1>, vector<3x256xf32>
    %446 = vector.extract_strided_slice %3 {offsets = [0, 20], sizes = [3, 256], strides = [1, 1]} : vector<3x324xf32> to vector<3x256xf32>
    %cst_110 = arith.constant 0.000000e+00 : f32
    %447 = vector.shape_cast %67 : vector<1x256xi1> to vector<1x256xi1>
    %448 = vector.broadcast %447 : vector<1x256xi1> to vector<3x256xi1>
    %449 = vector.broadcast %cst_110 : f32 to vector<3x256xf32>
    %450 = arith.select %448, %446, %449 : vector<3x256xi1>, vector<3x256xf32>
    %451 = arith.subf %445, %4 : vector<3x256xf32>
    %452 = math.absf %451 : vector<3x256xf32>
    %453 = arith.addf %412, %452 : vector<3x256xf32>
    %454 = arith.subf %450, %5 : vector<3x256xf32>
    %455 = math.absf %454 : vector<3x256xf32>
    %456 = arith.addf %415, %455 : vector<3x256xf32>
    %457 = arith.mulf %451, %451 : vector<3x256xf32>
    %cst_111 = arith.constant dense<0.000000e+00> : vector<256xf32>
    %458 = vector.multi_reduction <add>, %457, %cst_111 [0] : vector<3x256xf32> to vector<256xf32>
    %459 = vector.shape_cast %458 : vector<256xf32> to vector<1x256xf32>
    %cst_112 = arith.constant -5.000000e+01 : f32
    %460 = vector.broadcast %cst_112 : f32 to vector<1x256xf32>
    %461 = arith.mulf %460, %459 : vector<1x256xf32>
    %462 = math.exp %461 : vector<1x256xf32>
    %cst_113 = arith.constant 0.000000e+00 : f32
    %463 = vector.broadcast %cst_113 : f32 to vector<3x256xf32>
    %464 = arith.cmpf ogt, %450, %463 : vector<3x256xf32>
    %465 = arith.subf %450, %5 : vector<3x256xf32>
    %cst_114 = arith.constant 0.000000e+00 : f32
    %466 = vector.broadcast %cst_114 : f32 to vector<3x256xf32>
    %467 = arith.select %464, %465, %466 : vector<3x256xi1>, vector<3x256xf32>
    %468 = math.absf %467 : vector<3x256xf32>
    %469 = arith.mulf %468, %468 : vector<3x256xf32>
    %cst_115 = arith.constant 0.950259268 : f32
    %470 = vector.broadcast %cst_115 : f32 to vector<3x256xf32>
    %471 = arith.mulf %470, %469 : vector<3x256xf32>
    %472 = arith.addf %431, %471 : vector<3x256xf32>
    %cst_116 = arith.constant 9.99999997E-7 : f32
    %473 = vector.broadcast %cst_116 : f32 to vector<3x256xf32>
    %474 = arith.addf %468, %473 : vector<3x256xf32>
    %475 = math.log %474 : vector<3x256xf32>
    %cst_117 = arith.constant 8.000000e-01 : f32
    %476 = vector.broadcast %cst_117 : f32 to vector<3x256xf32>
    %477 = arith.mulf %476, %475 : vector<3x256xf32>
    %478 = math.exp %477 : vector<3x256xf32>
    %479 = vector.broadcast %462 : vector<1x256xf32> to vector<3x256xf32>
    %480 = arith.mulf %479, %478 : vector<3x256xf32>
    %481 = arith.addf %440, %480 : vector<3x256xf32>
    %482 = vector.extract_strided_slice %1 {offsets = [0, 32], sizes = [3, 256], strides = [1, 1]} : vector<3x324xf32> to vector<3x256xf32>
    %cst_118 = arith.constant 0.000000e+00 : f32
    %483 = vector.shape_cast %31 : vector<1x256xi1> to vector<1x256xi1>
    %484 = vector.broadcast %483 : vector<1x256xi1> to vector<3x256xi1>
    %485 = vector.broadcast %cst_118 : f32 to vector<3x256xf32>
    %486 = arith.select %484, %482, %485 : vector<3x256xi1>, vector<3x256xf32>
    %487 = vector.extract_strided_slice %3 {offsets = [0, 32], sizes = [3, 256], strides = [1, 1]} : vector<3x324xf32> to vector<3x256xf32>
    %cst_119 = arith.constant 0.000000e+00 : f32
    %488 = vector.shape_cast %31 : vector<1x256xi1> to vector<1x256xi1>
    %489 = vector.broadcast %488 : vector<1x256xi1> to vector<3x256xi1>
    %490 = vector.broadcast %cst_119 : f32 to vector<3x256xf32>
    %491 = arith.select %489, %487, %490 : vector<3x256xi1>, vector<3x256xf32>
    %492 = arith.subf %486, %4 : vector<3x256xf32>
    %493 = math.absf %492 : vector<3x256xf32>
    %494 = arith.addf %453, %493 : vector<3x256xf32>
    %495 = arith.subf %491, %5 : vector<3x256xf32>
    %496 = math.absf %495 : vector<3x256xf32>
    %497 = arith.addf %456, %496 : vector<3x256xf32>
    %498 = arith.mulf %492, %492 : vector<3x256xf32>
    %cst_120 = arith.constant dense<0.000000e+00> : vector<256xf32>
    %499 = vector.multi_reduction <add>, %498, %cst_120 [0] : vector<3x256xf32> to vector<256xf32>
    %500 = vector.shape_cast %499 : vector<256xf32> to vector<1x256xf32>
    %cst_121 = arith.constant -5.000000e+01 : f32
    %501 = vector.broadcast %cst_121 : f32 to vector<1x256xf32>
    %502 = arith.mulf %501, %500 : vector<1x256xf32>
    %503 = math.exp %502 : vector<1x256xf32>
    %cst_122 = arith.constant 0.000000e+00 : f32
    %504 = vector.broadcast %cst_122 : f32 to vector<3x256xf32>
    %505 = arith.cmpf ogt, %491, %504 : vector<3x256xf32>
    %506 = arith.subf %491, %5 : vector<3x256xf32>
    %cst_123 = arith.constant 0.000000e+00 : f32
    %507 = vector.broadcast %cst_123 : f32 to vector<3x256xf32>
    %508 = arith.select %505, %506, %507 : vector<3x256xi1>, vector<3x256xf32>
    %509 = math.absf %508 : vector<3x256xf32>
    %510 = arith.mulf %509, %509 : vector<3x256xf32>
    %cst_124 = arith.constant 0.960005462 : f32
    %511 = vector.broadcast %cst_124 : f32 to vector<3x256xf32>
    %512 = arith.mulf %511, %510 : vector<3x256xf32>
    %513 = arith.addf %472, %512 : vector<3x256xf32>
    %cst_125 = arith.constant 9.99999997E-7 : f32
    %514 = vector.broadcast %cst_125 : f32 to vector<3x256xf32>
    %515 = arith.addf %509, %514 : vector<3x256xf32>
    %516 = math.log %515 : vector<3x256xf32>
    %cst_126 = arith.constant 8.000000e-01 : f32
    %517 = vector.broadcast %cst_126 : f32 to vector<3x256xf32>
    %518 = arith.mulf %517, %516 : vector<3x256xf32>
    %519 = math.exp %518 : vector<3x256xf32>
    %520 = vector.broadcast %503 : vector<1x256xf32> to vector<3x256xf32>
    %521 = arith.mulf %520, %519 : vector<3x256xf32>
    %522 = arith.addf %481, %521 : vector<3x256xf32>
    %523 = vector.extract_strided_slice %1 {offsets = [0, 33], sizes = [3, 256], strides = [1, 1]} : vector<3x324xf32> to vector<3x256xf32>
    %cst_127 = arith.constant 0.000000e+00 : f32
    %524 = vector.shape_cast %40 : vector<1x256xi1> to vector<1x256xi1>
    %525 = vector.broadcast %524 : vector<1x256xi1> to vector<3x256xi1>
    %526 = vector.broadcast %cst_127 : f32 to vector<3x256xf32>
    %527 = arith.select %525, %523, %526 : vector<3x256xi1>, vector<3x256xf32>
    %528 = vector.extract_strided_slice %3 {offsets = [0, 33], sizes = [3, 256], strides = [1, 1]} : vector<3x324xf32> to vector<3x256xf32>
    %cst_128 = arith.constant 0.000000e+00 : f32
    %529 = vector.shape_cast %40 : vector<1x256xi1> to vector<1x256xi1>
    %530 = vector.broadcast %529 : vector<1x256xi1> to vector<3x256xi1>
    %531 = vector.broadcast %cst_128 : f32 to vector<3x256xf32>
    %532 = arith.select %530, %528, %531 : vector<3x256xi1>, vector<3x256xf32>
    %533 = arith.subf %527, %4 : vector<3x256xf32>
    %534 = math.absf %533 : vector<3x256xf32>
    %535 = arith.addf %494, %534 : vector<3x256xf32>
    %536 = arith.subf %532, %5 : vector<3x256xf32>
    %537 = math.absf %536 : vector<3x256xf32>
    %538 = arith.addf %497, %537 : vector<3x256xf32>
    %539 = arith.mulf %533, %533 : vector<3x256xf32>
    %cst_129 = arith.constant dense<0.000000e+00> : vector<256xf32>
    %540 = vector.multi_reduction <add>, %539, %cst_129 [0] : vector<3x256xf32> to vector<256xf32>
    %541 = vector.shape_cast %540 : vector<256xf32> to vector<1x256xf32>
    %cst_130 = arith.constant -5.000000e+01 : f32
    %542 = vector.broadcast %cst_130 : f32 to vector<1x256xf32>
    %543 = arith.mulf %542, %541 : vector<1x256xf32>
    %544 = math.exp %543 : vector<1x256xf32>
    %cst_131 = arith.constant 0.000000e+00 : f32
    %545 = vector.broadcast %cst_131 : f32 to vector<3x256xf32>
    %546 = arith.cmpf ogt, %532, %545 : vector<3x256xf32>
    %547 = arith.subf %532, %5 : vector<3x256xf32>
    %cst_132 = arith.constant 0.000000e+00 : f32
    %548 = vector.broadcast %cst_132 : f32 to vector<3x256xf32>
    %549 = arith.select %546, %547, %548 : vector<3x256xi1>, vector<3x256xf32>
    %550 = math.absf %549 : vector<3x256xf32>
    %551 = arith.mulf %550, %550 : vector<3x256xf32>
    %cst_133 = arith.constant 0.989847779 : f32
    %552 = vector.broadcast %cst_133 : f32 to vector<3x256xf32>
    %553 = arith.mulf %552, %551 : vector<3x256xf32>
    %554 = arith.addf %513, %553 : vector<3x256xf32>
    %cst_134 = arith.constant 9.99999997E-7 : f32
    %555 = vector.broadcast %cst_134 : f32 to vector<3x256xf32>
    %556 = arith.addf %550, %555 : vector<3x256xf32>
    %557 = math.log %556 : vector<3x256xf32>
    %cst_135 = arith.constant 8.000000e-01 : f32
    %558 = vector.broadcast %cst_135 : f32 to vector<3x256xf32>
    %559 = arith.mulf %558, %557 : vector<3x256xf32>
    %560 = math.exp %559 : vector<3x256xf32>
    %561 = vector.broadcast %544 : vector<1x256xf32> to vector<3x256xf32>
    %562 = arith.mulf %561, %560 : vector<3x256xf32>
    %563 = arith.addf %522, %562 : vector<3x256xf32>
    %564 = vector.extract_strided_slice %1 {offsets = [0, 34], sizes = [3, 256], strides = [1, 1]} : vector<3x324xf32> to vector<3x256xf32>
    %cst_136 = arith.constant 0.000000e+00 : f32
    %565 = vector.shape_cast %49 : vector<1x256xi1> to vector<1x256xi1>
    %566 = vector.broadcast %565 : vector<1x256xi1> to vector<3x256xi1>
    %567 = vector.broadcast %cst_136 : f32 to vector<3x256xf32>
    %568 = arith.select %566, %564, %567 : vector<3x256xi1>, vector<3x256xf32>
    %569 = vector.extract_strided_slice %3 {offsets = [0, 34], sizes = [3, 256], strides = [1, 1]} : vector<3x324xf32> to vector<3x256xf32>
    %cst_137 = arith.constant 0.000000e+00 : f32
    %570 = vector.shape_cast %49 : vector<1x256xi1> to vector<1x256xi1>
    %571 = vector.broadcast %570 : vector<1x256xi1> to vector<3x256xi1>
    %572 = vector.broadcast %cst_137 : f32 to vector<3x256xf32>
    %573 = arith.select %571, %569, %572 : vector<3x256xi1>, vector<3x256xf32>
    %574 = arith.subf %568, %4 : vector<3x256xf32>
    %575 = math.absf %574 : vector<3x256xf32>
    %576 = arith.addf %535, %575 : vector<3x256xf32>
    %577 = arith.subf %573, %5 : vector<3x256xf32>
    %578 = math.absf %577 : vector<3x256xf32>
    %579 = arith.addf %538, %578 : vector<3x256xf32>
    %580 = arith.mulf %574, %574 : vector<3x256xf32>
    %cst_138 = arith.constant dense<0.000000e+00> : vector<256xf32>
    %581 = vector.multi_reduction <add>, %580, %cst_138 [0] : vector<3x256xf32> to vector<256xf32>
    %582 = vector.shape_cast %581 : vector<256xf32> to vector<1x256xf32>
    %cst_139 = arith.constant -5.000000e+01 : f32
    %583 = vector.broadcast %cst_139 : f32 to vector<1x256xf32>
    %584 = arith.mulf %583, %582 : vector<1x256xf32>
    %585 = math.exp %584 : vector<1x256xf32>
    %cst_140 = arith.constant 0.000000e+00 : f32
    %586 = vector.broadcast %cst_140 : f32 to vector<3x256xf32>
    %587 = arith.cmpf ogt, %573, %586 : vector<3x256xf32>
    %588 = arith.subf %573, %5 : vector<3x256xf32>
    %cst_141 = arith.constant 0.000000e+00 : f32
    %589 = vector.broadcast %cst_141 : f32 to vector<3x256xf32>
    %590 = arith.select %587, %588, %589 : vector<3x256xi1>, vector<3x256xf32>
    %591 = math.absf %590 : vector<3x256xf32>
    %592 = arith.mulf %591, %591 : vector<3x256xf32>
    %cst_142 = arith.constant 1.000000e+00 : f32
    %593 = vector.broadcast %cst_142 : f32 to vector<3x256xf32>
    %594 = arith.mulf %593, %592 : vector<3x256xf32>
    %595 = arith.addf %554, %594 : vector<3x256xf32>
    %cst_143 = arith.constant 9.99999997E-7 : f32
    %596 = vector.broadcast %cst_143 : f32 to vector<3x256xf32>
    %597 = arith.addf %591, %596 : vector<3x256xf32>
    %598 = math.log %597 : vector<3x256xf32>
    %cst_144 = arith.constant 8.000000e-01 : f32
    %599 = vector.broadcast %cst_144 : f32 to vector<3x256xf32>
    %600 = arith.mulf %599, %598 : vector<3x256xf32>
    %601 = math.exp %600 : vector<3x256xf32>
    %602 = vector.broadcast %585 : vector<1x256xf32> to vector<3x256xf32>
    %603 = arith.mulf %602, %601 : vector<3x256xf32>
    %604 = arith.addf %563, %603 : vector<3x256xf32>
    %605 = vector.extract_strided_slice %1 {offsets = [0, 35], sizes = [3, 256], strides = [1, 1]} : vector<3x324xf32> to vector<3x256xf32>
    %cst_145 = arith.constant 0.000000e+00 : f32
    %606 = vector.shape_cast %58 : vector<1x256xi1> to vector<1x256xi1>
    %607 = vector.broadcast %606 : vector<1x256xi1> to vector<3x256xi1>
    %608 = vector.broadcast %cst_145 : f32 to vector<3x256xf32>
    %609 = arith.select %607, %605, %608 : vector<3x256xi1>, vector<3x256xf32>
    %610 = vector.extract_strided_slice %3 {offsets = [0, 35], sizes = [3, 256], strides = [1, 1]} : vector<3x324xf32> to vector<3x256xf32>
    %cst_146 = arith.constant 0.000000e+00 : f32
    %611 = vector.shape_cast %58 : vector<1x256xi1> to vector<1x256xi1>
    %612 = vector.broadcast %611 : vector<1x256xi1> to vector<3x256xi1>
    %613 = vector.broadcast %cst_146 : f32 to vector<3x256xf32>
    %614 = arith.select %612, %610, %613 : vector<3x256xi1>, vector<3x256xf32>
    %615 = arith.subf %609, %4 : vector<3x256xf32>
    %616 = math.absf %615 : vector<3x256xf32>
    %617 = arith.addf %576, %616 : vector<3x256xf32>
    %618 = arith.subf %614, %5 : vector<3x256xf32>
    %619 = math.absf %618 : vector<3x256xf32>
    %620 = arith.addf %579, %619 : vector<3x256xf32>
    %621 = arith.mulf %615, %615 : vector<3x256xf32>
    %cst_147 = arith.constant dense<0.000000e+00> : vector<256xf32>
    %622 = vector.multi_reduction <add>, %621, %cst_147 [0] : vector<3x256xf32> to vector<256xf32>
    %623 = vector.shape_cast %622 : vector<256xf32> to vector<1x256xf32>
    %cst_148 = arith.constant -5.000000e+01 : f32
    %624 = vector.broadcast %cst_148 : f32 to vector<1x256xf32>
    %625 = arith.mulf %624, %623 : vector<1x256xf32>
    %626 = math.exp %625 : vector<1x256xf32>
    %cst_149 = arith.constant 0.000000e+00 : f32
    %627 = vector.broadcast %cst_149 : f32 to vector<3x256xf32>
    %628 = arith.cmpf ogt, %614, %627 : vector<3x256xf32>
    %629 = arith.subf %614, %5 : vector<3x256xf32>
    %cst_150 = arith.constant 0.000000e+00 : f32
    %630 = vector.broadcast %cst_150 : f32 to vector<3x256xf32>
    %631 = arith.select %628, %629, %630 : vector<3x256xi1>, vector<3x256xf32>
    %632 = math.absf %631 : vector<3x256xf32>
    %633 = arith.mulf %632, %632 : vector<3x256xf32>
    %cst_151 = arith.constant 0.989847779 : f32
    %634 = vector.broadcast %cst_151 : f32 to vector<3x256xf32>
    %635 = arith.mulf %634, %633 : vector<3x256xf32>
    %636 = arith.addf %595, %635 : vector<3x256xf32>
    %cst_152 = arith.constant 9.99999997E-7 : f32
    %637 = vector.broadcast %cst_152 : f32 to vector<3x256xf32>
    %638 = arith.addf %632, %637 : vector<3x256xf32>
    %639 = math.log %638 : vector<3x256xf32>
    %cst_153 = arith.constant 8.000000e-01 : f32
    %640 = vector.broadcast %cst_153 : f32 to vector<3x256xf32>
    %641 = arith.mulf %640, %639 : vector<3x256xf32>
    %642 = math.exp %641 : vector<3x256xf32>
    %643 = vector.broadcast %626 : vector<1x256xf32> to vector<3x256xf32>
    %644 = arith.mulf %643, %642 : vector<3x256xf32>
    %645 = arith.addf %604, %644 : vector<3x256xf32>
    %646 = vector.extract_strided_slice %1 {offsets = [0, 36], sizes = [3, 256], strides = [1, 1]} : vector<3x324xf32> to vector<3x256xf32>
    %cst_154 = arith.constant 0.000000e+00 : f32
    %647 = vector.shape_cast %67 : vector<1x256xi1> to vector<1x256xi1>
    %648 = vector.broadcast %647 : vector<1x256xi1> to vector<3x256xi1>
    %649 = vector.broadcast %cst_154 : f32 to vector<3x256xf32>
    %650 = arith.select %648, %646, %649 : vector<3x256xi1>, vector<3x256xf32>
    %651 = vector.extract_strided_slice %3 {offsets = [0, 36], sizes = [3, 256], strides = [1, 1]} : vector<3x324xf32> to vector<3x256xf32>
    %cst_155 = arith.constant 0.000000e+00 : f32
    %652 = vector.shape_cast %67 : vector<1x256xi1> to vector<1x256xi1>
    %653 = vector.broadcast %652 : vector<1x256xi1> to vector<3x256xi1>
    %654 = vector.broadcast %cst_155 : f32 to vector<3x256xf32>
    %655 = arith.select %653, %651, %654 : vector<3x256xi1>, vector<3x256xf32>
    %656 = arith.subf %650, %4 : vector<3x256xf32>
    %657 = math.absf %656 : vector<3x256xf32>
    %658 = arith.addf %617, %657 : vector<3x256xf32>
    %659 = arith.subf %655, %5 : vector<3x256xf32>
    %660 = math.absf %659 : vector<3x256xf32>
    %661 = arith.addf %620, %660 : vector<3x256xf32>
    %662 = arith.mulf %656, %656 : vector<3x256xf32>
    %cst_156 = arith.constant dense<0.000000e+00> : vector<256xf32>
    %663 = vector.multi_reduction <add>, %662, %cst_156 [0] : vector<3x256xf32> to vector<256xf32>
    %664 = vector.shape_cast %663 : vector<256xf32> to vector<1x256xf32>
    %cst_157 = arith.constant -5.000000e+01 : f32
    %665 = vector.broadcast %cst_157 : f32 to vector<1x256xf32>
    %666 = arith.mulf %665, %664 : vector<1x256xf32>
    %667 = math.exp %666 : vector<1x256xf32>
    %cst_158 = arith.constant 0.000000e+00 : f32
    %668 = vector.broadcast %cst_158 : f32 to vector<3x256xf32>
    %669 = arith.cmpf ogt, %655, %668 : vector<3x256xf32>
    %670 = arith.subf %655, %5 : vector<3x256xf32>
    %cst_159 = arith.constant 0.000000e+00 : f32
    %671 = vector.broadcast %cst_159 : f32 to vector<3x256xf32>
    %672 = arith.select %669, %670, %671 : vector<3x256xi1>, vector<3x256xf32>
    %673 = math.absf %672 : vector<3x256xf32>
    %674 = arith.mulf %673, %673 : vector<3x256xf32>
    %cst_160 = arith.constant 0.960005462 : f32
    %675 = vector.broadcast %cst_160 : f32 to vector<3x256xf32>
    %676 = arith.mulf %675, %674 : vector<3x256xf32>
    %677 = arith.addf %636, %676 : vector<3x256xf32>
    %cst_161 = arith.constant 9.99999997E-7 : f32
    %678 = vector.broadcast %cst_161 : f32 to vector<3x256xf32>
    %679 = arith.addf %673, %678 : vector<3x256xf32>
    %680 = math.log %679 : vector<3x256xf32>
    %cst_162 = arith.constant 8.000000e-01 : f32
    %681 = vector.broadcast %cst_162 : f32 to vector<3x256xf32>
    %682 = arith.mulf %681, %680 : vector<3x256xf32>
    %683 = math.exp %682 : vector<3x256xf32>
    %684 = vector.broadcast %667 : vector<1x256xf32> to vector<3x256xf32>
    %685 = arith.mulf %684, %683 : vector<3x256xf32>
    %686 = arith.addf %645, %685 : vector<3x256xf32>
    %687 = vector.extract_strided_slice %1 {offsets = [0, 48], sizes = [3, 256], strides = [1, 1]} : vector<3x324xf32> to vector<3x256xf32>
    %cst_163 = arith.constant 0.000000e+00 : f32
    %688 = vector.shape_cast %31 : vector<1x256xi1> to vector<1x256xi1>
    %689 = vector.broadcast %688 : vector<1x256xi1> to vector<3x256xi1>
    %690 = vector.broadcast %cst_163 : f32 to vector<3x256xf32>
    %691 = arith.select %689, %687, %690 : vector<3x256xi1>, vector<3x256xf32>
    %692 = vector.extract_strided_slice %3 {offsets = [0, 48], sizes = [3, 256], strides = [1, 1]} : vector<3x324xf32> to vector<3x256xf32>
    %cst_164 = arith.constant 0.000000e+00 : f32
    %693 = vector.shape_cast %31 : vector<1x256xi1> to vector<1x256xi1>
    %694 = vector.broadcast %693 : vector<1x256xi1> to vector<3x256xi1>
    %695 = vector.broadcast %cst_164 : f32 to vector<3x256xf32>
    %696 = arith.select %694, %692, %695 : vector<3x256xi1>, vector<3x256xf32>
    %697 = arith.subf %691, %4 : vector<3x256xf32>
    %698 = math.absf %697 : vector<3x256xf32>
    %699 = arith.addf %658, %698 : vector<3x256xf32>
    %700 = arith.subf %696, %5 : vector<3x256xf32>
    %701 = math.absf %700 : vector<3x256xf32>
    %702 = arith.addf %661, %701 : vector<3x256xf32>
    %703 = arith.mulf %697, %697 : vector<3x256xf32>
    %cst_165 = arith.constant dense<0.000000e+00> : vector<256xf32>
    %704 = vector.multi_reduction <add>, %703, %cst_165 [0] : vector<3x256xf32> to vector<256xf32>
    %705 = vector.shape_cast %704 : vector<256xf32> to vector<1x256xf32>
    %cst_166 = arith.constant -5.000000e+01 : f32
    %706 = vector.broadcast %cst_166 : f32 to vector<1x256xf32>
    %707 = arith.mulf %706, %705 : vector<1x256xf32>
    %708 = math.exp %707 : vector<1x256xf32>
    %cst_167 = arith.constant 0.000000e+00 : f32
    %709 = vector.broadcast %cst_167 : f32 to vector<3x256xf32>
    %710 = arith.cmpf ogt, %696, %709 : vector<3x256xf32>
    %711 = arith.subf %696, %5 : vector<3x256xf32>
    %cst_168 = arith.constant 0.000000e+00 : f32
    %712 = vector.broadcast %cst_168 : f32 to vector<3x256xf32>
    %713 = arith.select %710, %711, %712 : vector<3x256xi1>, vector<3x256xf32>
    %714 = math.absf %713 : vector<3x256xf32>
    %715 = arith.mulf %714, %714 : vector<3x256xf32>
    %cst_169 = arith.constant 0.950259268 : f32
    %716 = vector.broadcast %cst_169 : f32 to vector<3x256xf32>
    %717 = arith.mulf %716, %715 : vector<3x256xf32>
    %718 = arith.addf %677, %717 : vector<3x256xf32>
    %cst_170 = arith.constant 9.99999997E-7 : f32
    %719 = vector.broadcast %cst_170 : f32 to vector<3x256xf32>
    %720 = arith.addf %714, %719 : vector<3x256xf32>
    %721 = math.log %720 : vector<3x256xf32>
    %cst_171 = arith.constant 8.000000e-01 : f32
    %722 = vector.broadcast %cst_171 : f32 to vector<3x256xf32>
    %723 = arith.mulf %722, %721 : vector<3x256xf32>
    %724 = math.exp %723 : vector<3x256xf32>
    %725 = vector.broadcast %708 : vector<1x256xf32> to vector<3x256xf32>
    %726 = arith.mulf %725, %724 : vector<3x256xf32>
    %727 = arith.addf %686, %726 : vector<3x256xf32>
    %728 = vector.extract_strided_slice %1 {offsets = [0, 49], sizes = [3, 256], strides = [1, 1]} : vector<3x324xf32> to vector<3x256xf32>
    %cst_172 = arith.constant 0.000000e+00 : f32
    %729 = vector.shape_cast %40 : vector<1x256xi1> to vector<1x256xi1>
    %730 = vector.broadcast %729 : vector<1x256xi1> to vector<3x256xi1>
    %731 = vector.broadcast %cst_172 : f32 to vector<3x256xf32>
    %732 = arith.select %730, %728, %731 : vector<3x256xi1>, vector<3x256xf32>
    %733 = vector.extract_strided_slice %3 {offsets = [0, 49], sizes = [3, 256], strides = [1, 1]} : vector<3x324xf32> to vector<3x256xf32>
    %cst_173 = arith.constant 0.000000e+00 : f32
    %734 = vector.shape_cast %40 : vector<1x256xi1> to vector<1x256xi1>
    %735 = vector.broadcast %734 : vector<1x256xi1> to vector<3x256xi1>
    %736 = vector.broadcast %cst_173 : f32 to vector<3x256xf32>
    %737 = arith.select %735, %733, %736 : vector<3x256xi1>, vector<3x256xf32>
    %738 = arith.subf %732, %4 : vector<3x256xf32>
    %739 = math.absf %738 : vector<3x256xf32>
    %740 = arith.addf %699, %739 : vector<3x256xf32>
    %741 = arith.subf %737, %5 : vector<3x256xf32>
    %742 = math.absf %741 : vector<3x256xf32>
    %743 = arith.addf %702, %742 : vector<3x256xf32>
    %744 = arith.mulf %738, %738 : vector<3x256xf32>
    %cst_174 = arith.constant dense<0.000000e+00> : vector<256xf32>
    %745 = vector.multi_reduction <add>, %744, %cst_174 [0] : vector<3x256xf32> to vector<256xf32>
    %746 = vector.shape_cast %745 : vector<256xf32> to vector<1x256xf32>
    %cst_175 = arith.constant -5.000000e+01 : f32
    %747 = vector.broadcast %cst_175 : f32 to vector<1x256xf32>
    %748 = arith.mulf %747, %746 : vector<1x256xf32>
    %749 = math.exp %748 : vector<1x256xf32>
    %cst_176 = arith.constant 0.000000e+00 : f32
    %750 = vector.broadcast %cst_176 : f32 to vector<3x256xf32>
    %751 = arith.cmpf ogt, %737, %750 : vector<3x256xf32>
    %752 = arith.subf %737, %5 : vector<3x256xf32>
    %cst_177 = arith.constant 0.000000e+00 : f32
    %753 = vector.broadcast %cst_177 : f32 to vector<3x256xf32>
    %754 = arith.select %751, %752, %753 : vector<3x256xi1>, vector<3x256xf32>
    %755 = math.absf %754 : vector<3x256xf32>
    %756 = arith.mulf %755, %755 : vector<3x256xf32>
    %cst_178 = arith.constant 0.979798674 : f32
    %757 = vector.broadcast %cst_178 : f32 to vector<3x256xf32>
    %758 = arith.mulf %757, %756 : vector<3x256xf32>
    %759 = arith.addf %718, %758 : vector<3x256xf32>
    %cst_179 = arith.constant 9.99999997E-7 : f32
    %760 = vector.broadcast %cst_179 : f32 to vector<3x256xf32>
    %761 = arith.addf %755, %760 : vector<3x256xf32>
    %762 = math.log %761 : vector<3x256xf32>
    %cst_180 = arith.constant 8.000000e-01 : f32
    %763 = vector.broadcast %cst_180 : f32 to vector<3x256xf32>
    %764 = arith.mulf %763, %762 : vector<3x256xf32>
    %765 = math.exp %764 : vector<3x256xf32>
    %766 = vector.broadcast %749 : vector<1x256xf32> to vector<3x256xf32>
    %767 = arith.mulf %766, %765 : vector<3x256xf32>
    %768 = arith.addf %727, %767 : vector<3x256xf32>
    %769 = vector.extract_strided_slice %1 {offsets = [0, 50], sizes = [3, 256], strides = [1, 1]} : vector<3x324xf32> to vector<3x256xf32>
    %cst_181 = arith.constant 0.000000e+00 : f32
    %770 = vector.shape_cast %49 : vector<1x256xi1> to vector<1x256xi1>
    %771 = vector.broadcast %770 : vector<1x256xi1> to vector<3x256xi1>
    %772 = vector.broadcast %cst_181 : f32 to vector<3x256xf32>
    %773 = arith.select %771, %769, %772 : vector<3x256xi1>, vector<3x256xf32>
    %774 = vector.extract_strided_slice %3 {offsets = [0, 50], sizes = [3, 256], strides = [1, 1]} : vector<3x324xf32> to vector<3x256xf32>
    %cst_182 = arith.constant 0.000000e+00 : f32
    %775 = vector.shape_cast %49 : vector<1x256xi1> to vector<1x256xi1>
    %776 = vector.broadcast %775 : vector<1x256xi1> to vector<3x256xi1>
    %777 = vector.broadcast %cst_182 : f32 to vector<3x256xf32>
    %778 = arith.select %776, %774, %777 : vector<3x256xi1>, vector<3x256xf32>
    %779 = arith.subf %773, %4 : vector<3x256xf32>
    %780 = math.absf %779 : vector<3x256xf32>
    %781 = arith.addf %740, %780 : vector<3x256xf32>
    %782 = arith.subf %778, %5 : vector<3x256xf32>
    %783 = math.absf %782 : vector<3x256xf32>
    %784 = arith.addf %743, %783 : vector<3x256xf32>
    %785 = arith.mulf %779, %779 : vector<3x256xf32>
    %cst_183 = arith.constant dense<0.000000e+00> : vector<256xf32>
    %786 = vector.multi_reduction <add>, %785, %cst_183 [0] : vector<3x256xf32> to vector<256xf32>
    %787 = vector.shape_cast %786 : vector<256xf32> to vector<1x256xf32>
    %cst_184 = arith.constant -5.000000e+01 : f32
    %788 = vector.broadcast %cst_184 : f32 to vector<1x256xf32>
    %789 = arith.mulf %788, %787 : vector<1x256xf32>
    %790 = math.exp %789 : vector<1x256xf32>
    %cst_185 = arith.constant 0.000000e+00 : f32
    %791 = vector.broadcast %cst_185 : f32 to vector<3x256xf32>
    %792 = arith.cmpf ogt, %778, %791 : vector<3x256xf32>
    %793 = arith.subf %778, %5 : vector<3x256xf32>
    %cst_186 = arith.constant 0.000000e+00 : f32
    %794 = vector.broadcast %cst_186 : f32 to vector<3x256xf32>
    %795 = arith.select %792, %793, %794 : vector<3x256xi1>, vector<3x256xf32>
    %796 = math.absf %795 : vector<3x256xf32>
    %797 = arith.mulf %796, %796 : vector<3x256xf32>
    %cst_187 = arith.constant 0.989847779 : f32
    %798 = vector.broadcast %cst_187 : f32 to vector<3x256xf32>
    %799 = arith.mulf %798, %797 : vector<3x256xf32>
    %800 = arith.addf %759, %799 : vector<3x256xf32>
    %cst_188 = arith.constant 9.99999997E-7 : f32
    %801 = vector.broadcast %cst_188 : f32 to vector<3x256xf32>
    %802 = arith.addf %796, %801 : vector<3x256xf32>
    %803 = math.log %802 : vector<3x256xf32>
    %cst_189 = arith.constant 8.000000e-01 : f32
    %804 = vector.broadcast %cst_189 : f32 to vector<3x256xf32>
    %805 = arith.mulf %804, %803 : vector<3x256xf32>
    %806 = math.exp %805 : vector<3x256xf32>
    %807 = vector.broadcast %790 : vector<1x256xf32> to vector<3x256xf32>
    %808 = arith.mulf %807, %806 : vector<3x256xf32>
    %809 = arith.addf %768, %808 : vector<3x256xf32>
    %810 = vector.extract_strided_slice %1 {offsets = [0, 51], sizes = [3, 256], strides = [1, 1]} : vector<3x324xf32> to vector<3x256xf32>
    %cst_190 = arith.constant 0.000000e+00 : f32
    %811 = vector.shape_cast %58 : vector<1x256xi1> to vector<1x256xi1>
    %812 = vector.broadcast %811 : vector<1x256xi1> to vector<3x256xi1>
    %813 = vector.broadcast %cst_190 : f32 to vector<3x256xf32>
    %814 = arith.select %812, %810, %813 : vector<3x256xi1>, vector<3x256xf32>
    %815 = vector.extract_strided_slice %3 {offsets = [0, 51], sizes = [3, 256], strides = [1, 1]} : vector<3x324xf32> to vector<3x256xf32>
    %cst_191 = arith.constant 0.000000e+00 : f32
    %816 = vector.shape_cast %58 : vector<1x256xi1> to vector<1x256xi1>
    %817 = vector.broadcast %816 : vector<1x256xi1> to vector<3x256xi1>
    %818 = vector.broadcast %cst_191 : f32 to vector<3x256xf32>
    %819 = arith.select %817, %815, %818 : vector<3x256xi1>, vector<3x256xf32>
    %820 = arith.subf %814, %4 : vector<3x256xf32>
    %821 = math.absf %820 : vector<3x256xf32>
    %822 = arith.addf %781, %821 : vector<3x256xf32>
    %823 = arith.subf %819, %5 : vector<3x256xf32>
    %824 = math.absf %823 : vector<3x256xf32>
    %825 = arith.addf %784, %824 : vector<3x256xf32>
    %826 = arith.mulf %820, %820 : vector<3x256xf32>
    %cst_192 = arith.constant dense<0.000000e+00> : vector<256xf32>
    %827 = vector.multi_reduction <add>, %826, %cst_192 [0] : vector<3x256xf32> to vector<256xf32>
    %828 = vector.shape_cast %827 : vector<256xf32> to vector<1x256xf32>
    %cst_193 = arith.constant -5.000000e+01 : f32
    %829 = vector.broadcast %cst_193 : f32 to vector<1x256xf32>
    %830 = arith.mulf %829, %828 : vector<1x256xf32>
    %831 = math.exp %830 : vector<1x256xf32>
    %cst_194 = arith.constant 0.000000e+00 : f32
    %832 = vector.broadcast %cst_194 : f32 to vector<3x256xf32>
    %833 = arith.cmpf ogt, %819, %832 : vector<3x256xf32>
    %834 = arith.subf %819, %5 : vector<3x256xf32>
    %cst_195 = arith.constant 0.000000e+00 : f32
    %835 = vector.broadcast %cst_195 : f32 to vector<3x256xf32>
    %836 = arith.select %833, %834, %835 : vector<3x256xi1>, vector<3x256xf32>
    %837 = math.absf %836 : vector<3x256xf32>
    %838 = arith.mulf %837, %837 : vector<3x256xf32>
    %cst_196 = arith.constant 0.979798674 : f32
    %839 = vector.broadcast %cst_196 : f32 to vector<3x256xf32>
    %840 = arith.mulf %839, %838 : vector<3x256xf32>
    %841 = arith.addf %800, %840 : vector<3x256xf32>
    %cst_197 = arith.constant 9.99999997E-7 : f32
    %842 = vector.broadcast %cst_197 : f32 to vector<3x256xf32>
    %843 = arith.addf %837, %842 : vector<3x256xf32>
    %844 = math.log %843 : vector<3x256xf32>
    %cst_198 = arith.constant 8.000000e-01 : f32
    %845 = vector.broadcast %cst_198 : f32 to vector<3x256xf32>
    %846 = arith.mulf %845, %844 : vector<3x256xf32>
    %847 = math.exp %846 : vector<3x256xf32>
    %848 = vector.broadcast %831 : vector<1x256xf32> to vector<3x256xf32>
    %849 = arith.mulf %848, %847 : vector<3x256xf32>
    %850 = arith.addf %809, %849 : vector<3x256xf32>
    %851 = vector.extract_strided_slice %1 {offsets = [0, 52], sizes = [3, 256], strides = [1, 1]} : vector<3x324xf32> to vector<3x256xf32>
    %cst_199 = arith.constant 0.000000e+00 : f32
    %852 = vector.shape_cast %67 : vector<1x256xi1> to vector<1x256xi1>
    %853 = vector.broadcast %852 : vector<1x256xi1> to vector<3x256xi1>
    %854 = vector.broadcast %cst_199 : f32 to vector<3x256xf32>
    %855 = arith.select %853, %851, %854 : vector<3x256xi1>, vector<3x256xf32>
    %856 = vector.extract_strided_slice %3 {offsets = [0, 52], sizes = [3, 256], strides = [1, 1]} : vector<3x324xf32> to vector<3x256xf32>
    %cst_200 = arith.constant 0.000000e+00 : f32
    %857 = vector.shape_cast %67 : vector<1x256xi1> to vector<1x256xi1>
    %858 = vector.broadcast %857 : vector<1x256xi1> to vector<3x256xi1>
    %859 = vector.broadcast %cst_200 : f32 to vector<3x256xf32>
    %860 = arith.select %858, %856, %859 : vector<3x256xi1>, vector<3x256xf32>
    %861 = arith.subf %855, %4 : vector<3x256xf32>
    %862 = math.absf %861 : vector<3x256xf32>
    %863 = arith.addf %822, %862 : vector<3x256xf32>
    %864 = arith.subf %860, %5 : vector<3x256xf32>
    %865 = math.absf %864 : vector<3x256xf32>
    %866 = arith.addf %825, %865 : vector<3x256xf32>
    %867 = arith.mulf %861, %861 : vector<3x256xf32>
    %cst_201 = arith.constant dense<0.000000e+00> : vector<256xf32>
    %868 = vector.multi_reduction <add>, %867, %cst_201 [0] : vector<3x256xf32> to vector<256xf32>
    %869 = vector.shape_cast %868 : vector<256xf32> to vector<1x256xf32>
    %cst_202 = arith.constant -5.000000e+01 : f32
    %870 = vector.broadcast %cst_202 : f32 to vector<1x256xf32>
    %871 = arith.mulf %870, %869 : vector<1x256xf32>
    %872 = math.exp %871 : vector<1x256xf32>
    %cst_203 = arith.constant 0.000000e+00 : f32
    %873 = vector.broadcast %cst_203 : f32 to vector<3x256xf32>
    %874 = arith.cmpf ogt, %860, %873 : vector<3x256xf32>
    %875 = arith.subf %860, %5 : vector<3x256xf32>
    %cst_204 = arith.constant 0.000000e+00 : f32
    %876 = vector.broadcast %cst_204 : f32 to vector<3x256xf32>
    %877 = arith.select %874, %875, %876 : vector<3x256xi1>, vector<3x256xf32>
    %878 = math.absf %877 : vector<3x256xf32>
    %879 = arith.mulf %878, %878 : vector<3x256xf32>
    %cst_205 = arith.constant 0.950259268 : f32
    %880 = vector.broadcast %cst_205 : f32 to vector<3x256xf32>
    %881 = arith.mulf %880, %879 : vector<3x256xf32>
    %882 = arith.addf %841, %881 : vector<3x256xf32>
    %cst_206 = arith.constant 9.99999997E-7 : f32
    %883 = vector.broadcast %cst_206 : f32 to vector<3x256xf32>
    %884 = arith.addf %878, %883 : vector<3x256xf32>
    %885 = math.log %884 : vector<3x256xf32>
    %cst_207 = arith.constant 8.000000e-01 : f32
    %886 = vector.broadcast %cst_207 : f32 to vector<3x256xf32>
    %887 = arith.mulf %886, %885 : vector<3x256xf32>
    %888 = math.exp %887 : vector<3x256xf32>
    %889 = vector.broadcast %872 : vector<1x256xf32> to vector<3x256xf32>
    %890 = arith.mulf %889, %888 : vector<3x256xf32>
    %891 = arith.addf %850, %890 : vector<3x256xf32>
    %892 = vector.extract_strided_slice %1 {offsets = [0, 64], sizes = [3, 256], strides = [1, 1]} : vector<3x324xf32> to vector<3x256xf32>
    %cst_208 = arith.constant 0.000000e+00 : f32
    %893 = vector.shape_cast %31 : vector<1x256xi1> to vector<1x256xi1>
    %894 = vector.broadcast %893 : vector<1x256xi1> to vector<3x256xi1>
    %895 = vector.broadcast %cst_208 : f32 to vector<3x256xf32>
    %896 = arith.select %894, %892, %895 : vector<3x256xi1>, vector<3x256xf32>
    %897 = vector.extract_strided_slice %3 {offsets = [0, 64], sizes = [3, 256], strides = [1, 1]} : vector<3x324xf32> to vector<3x256xf32>
    %cst_209 = arith.constant 0.000000e+00 : f32
    %898 = vector.shape_cast %31 : vector<1x256xi1> to vector<1x256xi1>
    %899 = vector.broadcast %898 : vector<1x256xi1> to vector<3x256xi1>
    %900 = vector.broadcast %cst_209 : f32 to vector<3x256xf32>
    %901 = arith.select %899, %897, %900 : vector<3x256xi1>, vector<3x256xf32>
    %902 = arith.subf %896, %4 : vector<3x256xf32>
    %903 = math.absf %902 : vector<3x256xf32>
    %904 = arith.addf %863, %903 : vector<3x256xf32>
    %905 = arith.subf %901, %5 : vector<3x256xf32>
    %906 = math.absf %905 : vector<3x256xf32>
    %907 = arith.addf %866, %906 : vector<3x256xf32>
    %908 = arith.mulf %902, %902 : vector<3x256xf32>
    %cst_210 = arith.constant dense<0.000000e+00> : vector<256xf32>
    %909 = vector.multi_reduction <add>, %908, %cst_210 [0] : vector<3x256xf32> to vector<256xf32>
    %910 = vector.shape_cast %909 : vector<256xf32> to vector<1x256xf32>
    %cst_211 = arith.constant -5.000000e+01 : f32
    %911 = vector.broadcast %cst_211 : f32 to vector<1x256xf32>
    %912 = arith.mulf %911, %910 : vector<1x256xf32>
    %913 = math.exp %912 : vector<1x256xf32>
    %cst_212 = arith.constant 0.000000e+00 : f32
    %914 = vector.broadcast %cst_212 : f32 to vector<3x256xf32>
    %915 = arith.cmpf ogt, %901, %914 : vector<3x256xf32>
    %916 = arith.subf %901, %5 : vector<3x256xf32>
    %cst_213 = arith.constant 0.000000e+00 : f32
    %917 = vector.broadcast %cst_213 : f32 to vector<3x256xf32>
    %918 = arith.select %915, %916, %917 : vector<3x256xi1>, vector<3x256xf32>
    %919 = math.absf %918 : vector<3x256xf32>
    %920 = arith.mulf %919, %919 : vector<3x256xf32>
    %cst_214 = arith.constant 0.921610474 : f32
    %921 = vector.broadcast %cst_214 : f32 to vector<3x256xf32>
    %922 = arith.mulf %921, %920 : vector<3x256xf32>
    %923 = arith.addf %882, %922 : vector<3x256xf32>
    %cst_215 = arith.constant 9.99999997E-7 : f32
    %924 = vector.broadcast %cst_215 : f32 to vector<3x256xf32>
    %925 = arith.addf %919, %924 : vector<3x256xf32>
    %926 = math.log %925 : vector<3x256xf32>
    %cst_216 = arith.constant 8.000000e-01 : f32
    %927 = vector.broadcast %cst_216 : f32 to vector<3x256xf32>
    %928 = arith.mulf %927, %926 : vector<3x256xf32>
    %929 = math.exp %928 : vector<3x256xf32>
    %930 = vector.broadcast %913 : vector<1x256xf32> to vector<3x256xf32>
    %931 = arith.mulf %930, %929 : vector<3x256xf32>
    %932 = arith.addf %891, %931 : vector<3x256xf32>
    %933 = vector.extract_strided_slice %1 {offsets = [0, 65], sizes = [3, 256], strides = [1, 1]} : vector<3x324xf32> to vector<3x256xf32>
    %cst_217 = arith.constant 0.000000e+00 : f32
    %934 = vector.shape_cast %40 : vector<1x256xi1> to vector<1x256xi1>
    %935 = vector.broadcast %934 : vector<1x256xi1> to vector<3x256xi1>
    %936 = vector.broadcast %cst_217 : f32 to vector<3x256xf32>
    %937 = arith.select %935, %933, %936 : vector<3x256xi1>, vector<3x256xf32>
    %938 = vector.extract_strided_slice %3 {offsets = [0, 65], sizes = [3, 256], strides = [1, 1]} : vector<3x324xf32> to vector<3x256xf32>
    %cst_218 = arith.constant 0.000000e+00 : f32
    %939 = vector.shape_cast %40 : vector<1x256xi1> to vector<1x256xi1>
    %940 = vector.broadcast %939 : vector<1x256xi1> to vector<3x256xi1>
    %941 = vector.broadcast %cst_218 : f32 to vector<3x256xf32>
    %942 = arith.select %940, %938, %941 : vector<3x256xi1>, vector<3x256xf32>
    %943 = arith.subf %937, %4 : vector<3x256xf32>
    %944 = math.absf %943 : vector<3x256xf32>
    %945 = arith.addf %904, %944 : vector<3x256xf32>
    %946 = arith.subf %942, %5 : vector<3x256xf32>
    %947 = math.absf %946 : vector<3x256xf32>
    %948 = arith.addf %907, %947 : vector<3x256xf32>
    %949 = arith.mulf %943, %943 : vector<3x256xf32>
    %cst_219 = arith.constant dense<0.000000e+00> : vector<256xf32>
    %950 = vector.multi_reduction <add>, %949, %cst_219 [0] : vector<3x256xf32> to vector<256xf32>
    %951 = vector.shape_cast %950 : vector<256xf32> to vector<1x256xf32>
    %cst_220 = arith.constant -5.000000e+01 : f32
    %952 = vector.broadcast %cst_220 : f32 to vector<1x256xf32>
    %953 = arith.mulf %952, %951 : vector<1x256xf32>
    %954 = math.exp %953 : vector<1x256xf32>
    %cst_221 = arith.constant 0.000000e+00 : f32
    %955 = vector.broadcast %cst_221 : f32 to vector<3x256xf32>
    %956 = arith.cmpf ogt, %942, %955 : vector<3x256xf32>
    %957 = arith.subf %942, %5 : vector<3x256xf32>
    %cst_222 = arith.constant 0.000000e+00 : f32
    %958 = vector.broadcast %cst_222 : f32 to vector<3x256xf32>
    %959 = arith.select %956, %957, %958 : vector<3x256xi1>, vector<3x256xf32>
    %960 = math.absf %959 : vector<3x256xf32>
    %961 = arith.mulf %960, %960 : vector<3x256xf32>
    %cst_223 = arith.constant 0.950259268 : f32
    %962 = vector.broadcast %cst_223 : f32 to vector<3x256xf32>
    %963 = arith.mulf %962, %961 : vector<3x256xf32>
    %964 = arith.addf %923, %963 : vector<3x256xf32>
    %cst_224 = arith.constant 9.99999997E-7 : f32
    %965 = vector.broadcast %cst_224 : f32 to vector<3x256xf32>
    %966 = arith.addf %960, %965 : vector<3x256xf32>
    %967 = math.log %966 : vector<3x256xf32>
    %cst_225 = arith.constant 8.000000e-01 : f32
    %968 = vector.broadcast %cst_225 : f32 to vector<3x256xf32>
    %969 = arith.mulf %968, %967 : vector<3x256xf32>
    %970 = math.exp %969 : vector<3x256xf32>
    %971 = vector.broadcast %954 : vector<1x256xf32> to vector<3x256xf32>
    %972 = arith.mulf %971, %970 : vector<3x256xf32>
    %973 = arith.addf %932, %972 : vector<3x256xf32>
    %974 = vector.extract_strided_slice %1 {offsets = [0, 66], sizes = [3, 256], strides = [1, 1]} : vector<3x324xf32> to vector<3x256xf32>
    %cst_226 = arith.constant 0.000000e+00 : f32
    %975 = vector.shape_cast %49 : vector<1x256xi1> to vector<1x256xi1>
    %976 = vector.broadcast %975 : vector<1x256xi1> to vector<3x256xi1>
    %977 = vector.broadcast %cst_226 : f32 to vector<3x256xf32>
    %978 = arith.select %976, %974, %977 : vector<3x256xi1>, vector<3x256xf32>
    %979 = vector.extract_strided_slice %3 {offsets = [0, 66], sizes = [3, 256], strides = [1, 1]} : vector<3x324xf32> to vector<3x256xf32>
    %cst_227 = arith.constant 0.000000e+00 : f32
    %980 = vector.shape_cast %49 : vector<1x256xi1> to vector<1x256xi1>
    %981 = vector.broadcast %980 : vector<1x256xi1> to vector<3x256xi1>
    %982 = vector.broadcast %cst_227 : f32 to vector<3x256xf32>
    %983 = arith.select %981, %979, %982 : vector<3x256xi1>, vector<3x256xf32>
    %984 = arith.subf %978, %4 : vector<3x256xf32>
    %985 = math.absf %984 : vector<3x256xf32>
    %986 = arith.addf %945, %985 : vector<3x256xf32>
    %987 = arith.subf %983, %5 : vector<3x256xf32>
    %988 = math.absf %987 : vector<3x256xf32>
    %989 = arith.addf %948, %988 : vector<3x256xf32>
    %990 = arith.mulf %984, %984 : vector<3x256xf32>
    %cst_228 = arith.constant dense<0.000000e+00> : vector<256xf32>
    %991 = vector.multi_reduction <add>, %990, %cst_228 [0] : vector<3x256xf32> to vector<256xf32>
    %992 = vector.shape_cast %991 : vector<256xf32> to vector<1x256xf32>
    %cst_229 = arith.constant -5.000000e+01 : f32
    %993 = vector.broadcast %cst_229 : f32 to vector<1x256xf32>
    %994 = arith.mulf %993, %992 : vector<1x256xf32>
    %995 = math.exp %994 : vector<1x256xf32>
    %cst_230 = arith.constant 0.000000e+00 : f32
    %996 = vector.broadcast %cst_230 : f32 to vector<3x256xf32>
    %997 = arith.cmpf ogt, %983, %996 : vector<3x256xf32>
    %998 = arith.subf %983, %5 : vector<3x256xf32>
    %cst_231 = arith.constant 0.000000e+00 : f32
    %999 = vector.broadcast %cst_231 : f32 to vector<3x256xf32>
    %1000 = arith.select %997, %998, %999 : vector<3x256xi1>, vector<3x256xf32>
    %1001 = math.absf %1000 : vector<3x256xf32>
    %1002 = arith.mulf %1001, %1001 : vector<3x256xf32>
    %cst_232 = arith.constant 0.960005462 : f32
    %1003 = vector.broadcast %cst_232 : f32 to vector<3x256xf32>
    %1004 = arith.mulf %1003, %1002 : vector<3x256xf32>
    %1005 = arith.addf %964, %1004 : vector<3x256xf32>
    %cst_233 = arith.constant 9.99999997E-7 : f32
    %1006 = vector.broadcast %cst_233 : f32 to vector<3x256xf32>
    %1007 = arith.addf %1001, %1006 : vector<3x256xf32>
    %1008 = math.log %1007 : vector<3x256xf32>
    %cst_234 = arith.constant 8.000000e-01 : f32
    %1009 = vector.broadcast %cst_234 : f32 to vector<3x256xf32>
    %1010 = arith.mulf %1009, %1008 : vector<3x256xf32>
    %1011 = math.exp %1010 : vector<3x256xf32>
    %1012 = vector.broadcast %995 : vector<1x256xf32> to vector<3x256xf32>
    %1013 = arith.mulf %1012, %1011 : vector<3x256xf32>
    %1014 = arith.addf %973, %1013 : vector<3x256xf32>
    %1015 = vector.extract_strided_slice %1 {offsets = [0, 67], sizes = [3, 256], strides = [1, 1]} : vector<3x324xf32> to vector<3x256xf32>
    %cst_235 = arith.constant 0.000000e+00 : f32
    %1016 = vector.shape_cast %58 : vector<1x256xi1> to vector<1x256xi1>
    %1017 = vector.broadcast %1016 : vector<1x256xi1> to vector<3x256xi1>
    %1018 = vector.broadcast %cst_235 : f32 to vector<3x256xf32>
    %1019 = arith.select %1017, %1015, %1018 : vector<3x256xi1>, vector<3x256xf32>
    %1020 = vector.extract_strided_slice %3 {offsets = [0, 67], sizes = [3, 256], strides = [1, 1]} : vector<3x324xf32> to vector<3x256xf32>
    %cst_236 = arith.constant 0.000000e+00 : f32
    %1021 = vector.shape_cast %58 : vector<1x256xi1> to vector<1x256xi1>
    %1022 = vector.broadcast %1021 : vector<1x256xi1> to vector<3x256xi1>
    %1023 = vector.broadcast %cst_236 : f32 to vector<3x256xf32>
    %1024 = arith.select %1022, %1020, %1023 : vector<3x256xi1>, vector<3x256xf32>
    %1025 = arith.subf %1019, %4 : vector<3x256xf32>
    %1026 = math.absf %1025 : vector<3x256xf32>
    %1027 = arith.addf %986, %1026 : vector<3x256xf32>
    %1028 = arith.subf %1024, %5 : vector<3x256xf32>
    %1029 = math.absf %1028 : vector<3x256xf32>
    %1030 = arith.addf %989, %1029 : vector<3x256xf32>
    %1031 = arith.mulf %1025, %1025 : vector<3x256xf32>
    %cst_237 = arith.constant dense<0.000000e+00> : vector<256xf32>
    %1032 = vector.multi_reduction <add>, %1031, %cst_237 [0] : vector<3x256xf32> to vector<256xf32>
    %1033 = vector.shape_cast %1032 : vector<256xf32> to vector<1x256xf32>
    %cst_238 = arith.constant -5.000000e+01 : f32
    %1034 = vector.broadcast %cst_238 : f32 to vector<1x256xf32>
    %1035 = arith.mulf %1034, %1033 : vector<1x256xf32>
    %1036 = math.exp %1035 : vector<1x256xf32>
    %cst_239 = arith.constant 0.000000e+00 : f32
    %1037 = vector.broadcast %cst_239 : f32 to vector<3x256xf32>
    %1038 = arith.cmpf ogt, %1024, %1037 : vector<3x256xf32>
    %1039 = arith.subf %1024, %5 : vector<3x256xf32>
    %cst_240 = arith.constant 0.000000e+00 : f32
    %1040 = vector.broadcast %cst_240 : f32 to vector<3x256xf32>
    %1041 = arith.select %1038, %1039, %1040 : vector<3x256xi1>, vector<3x256xf32>
    %1042 = math.absf %1041 : vector<3x256xf32>
    %1043 = arith.mulf %1042, %1042 : vector<3x256xf32>
    %cst_241 = arith.constant 0.950259268 : f32
    %1044 = vector.broadcast %cst_241 : f32 to vector<3x256xf32>
    %1045 = arith.mulf %1044, %1043 : vector<3x256xf32>
    %1046 = arith.addf %1005, %1045 : vector<3x256xf32>
    %cst_242 = arith.constant 9.99999997E-7 : f32
    %1047 = vector.broadcast %cst_242 : f32 to vector<3x256xf32>
    %1048 = arith.addf %1042, %1047 : vector<3x256xf32>
    %1049 = math.log %1048 : vector<3x256xf32>
    %cst_243 = arith.constant 8.000000e-01 : f32
    %1050 = vector.broadcast %cst_243 : f32 to vector<3x256xf32>
    %1051 = arith.mulf %1050, %1049 : vector<3x256xf32>
    %1052 = math.exp %1051 : vector<3x256xf32>
    %1053 = vector.broadcast %1036 : vector<1x256xf32> to vector<3x256xf32>
    %1054 = arith.mulf %1053, %1052 : vector<3x256xf32>
    %1055 = arith.addf %1014, %1054 : vector<3x256xf32>
    %1056 = vector.extract_strided_slice %1 {offsets = [0, 68], sizes = [3, 256], strides = [1, 1]} : vector<3x324xf32> to vector<3x256xf32>
    %cst_244 = arith.constant 0.000000e+00 : f32
    %1057 = vector.shape_cast %67 : vector<1x256xi1> to vector<1x256xi1>
    %1058 = vector.broadcast %1057 : vector<1x256xi1> to vector<3x256xi1>
    %1059 = vector.broadcast %cst_244 : f32 to vector<3x256xf32>
    %1060 = arith.select %1058, %1056, %1059 : vector<3x256xi1>, vector<3x256xf32>
    %1061 = vector.extract_strided_slice %3 {offsets = [0, 68], sizes = [3, 256], strides = [1, 1]} : vector<3x324xf32> to vector<3x256xf32>
    %cst_245 = arith.constant 0.000000e+00 : f32
    %1062 = vector.shape_cast %67 : vector<1x256xi1> to vector<1x256xi1>
    %1063 = vector.broadcast %1062 : vector<1x256xi1> to vector<3x256xi1>
    %1064 = vector.broadcast %cst_245 : f32 to vector<3x256xf32>
    %1065 = arith.select %1063, %1061, %1064 : vector<3x256xi1>, vector<3x256xf32>
    %1066 = arith.subf %1060, %4 : vector<3x256xf32>
    %1067 = math.absf %1066 : vector<3x256xf32>
    %1068 = arith.addf %1027, %1067 : vector<3x256xf32>
    %1069 = arith.subf %1065, %5 : vector<3x256xf32>
    %1070 = math.absf %1069 : vector<3x256xf32>
    %1071 = arith.addf %1030, %1070 : vector<3x256xf32>
    %1072 = arith.mulf %1066, %1066 : vector<3x256xf32>
    %cst_246 = arith.constant dense<0.000000e+00> : vector<256xf32>
    %1073 = vector.multi_reduction <add>, %1072, %cst_246 [0] : vector<3x256xf32> to vector<256xf32>
    %1074 = vector.shape_cast %1073 : vector<256xf32> to vector<1x256xf32>
    %cst_247 = arith.constant -5.000000e+01 : f32
    %1075 = vector.broadcast %cst_247 : f32 to vector<1x256xf32>
    %1076 = arith.mulf %1075, %1074 : vector<1x256xf32>
    %1077 = math.exp %1076 : vector<1x256xf32>
    %cst_248 = arith.constant 0.000000e+00 : f32
    %1078 = vector.broadcast %cst_248 : f32 to vector<3x256xf32>
    %1079 = arith.cmpf ogt, %1065, %1078 : vector<3x256xf32>
    %1080 = arith.subf %1065, %5 : vector<3x256xf32>
    %cst_249 = arith.constant 0.000000e+00 : f32
    %1081 = vector.broadcast %cst_249 : f32 to vector<3x256xf32>
    %1082 = arith.select %1079, %1080, %1081 : vector<3x256xi1>, vector<3x256xf32>
    %1083 = math.absf %1082 : vector<3x256xf32>
    %1084 = arith.mulf %1083, %1083 : vector<3x256xf32>
    %cst_250 = arith.constant 0.921610474 : f32
    %1085 = vector.broadcast %cst_250 : f32 to vector<3x256xf32>
    %1086 = arith.mulf %1085, %1084 : vector<3x256xf32>
    %1087 = arith.addf %1046, %1086 : vector<3x256xf32>
    %cst_251 = arith.constant 9.99999997E-7 : f32
    %1088 = vector.broadcast %cst_251 : f32 to vector<3x256xf32>
    %1089 = arith.addf %1083, %1088 : vector<3x256xf32>
    %1090 = math.log %1089 : vector<3x256xf32>
    %cst_252 = arith.constant 8.000000e-01 : f32
    %1091 = vector.broadcast %cst_252 : f32 to vector<3x256xf32>
    %1092 = arith.mulf %1091, %1090 : vector<3x256xf32>
    %1093 = math.exp %1092 : vector<3x256xf32>
    %1094 = vector.broadcast %1077 : vector<1x256xf32> to vector<3x256xf32>
    %1095 = arith.mulf %1094, %1093 : vector<3x256xf32>
    %1096 = arith.addf %1055, %1095 : vector<3x256xf32>
    %cst_253 = arith.constant dense<0.000000e+00> : vector<256xf32>
    %1097 = vector.multi_reduction <add>, %1068, %cst_253 [0] : vector<3x256xf32> to vector<256xf32>
    %1098 = vector.shape_cast %1097 : vector<256xf32> to vector<1x256xf32>
    %cst_254 = arith.constant dense<0.000000e+00> : vector<256xf32>
    %1099 = vector.multi_reduction <add>, %1071, %cst_254 [0] : vector<3x256xf32> to vector<256xf32>
    %1100 = vector.shape_cast %1099 : vector<256xf32> to vector<1x256xf32>
    %cst_255 = arith.constant 1.000000e+01 : f32
    %1101 = vector.broadcast %cst_255 : f32 to vector<1x256xf32>
    %1102 = arith.cmpf olt, %1098, %1101 : vector<1x256xf32>
    %1103 = arith.subf %1100, %1098 : vector<1x256xf32>
    %cst_256 = arith.constant 5.000000e+00 : f32
    %1104 = vector.broadcast %cst_256 : f32 to vector<1x256xf32>
    %1105 = arith.cmpf ogt, %1103, %1104 : vector<1x256xf32>
    %1106 = arith.andi %1102, %1105 : vector<1x256xi1>
    %cst_257 = arith.constant dense<0.000000e+00> : vector<256xf32>
    %1107 = vector.multi_reduction <add>, %1087, %cst_257 [0] : vector<3x256xf32> to vector<256xf32>
    %1108 = vector.shape_cast %1107 : vector<256xf32> to vector<1x256xf32>
    %cst_258 = arith.constant dense<0.000000e+00> : vector<256xf32>
    %1109 = vector.multi_reduction <add>, %1096, %cst_258 [0] : vector<3x256xf32> to vector<256xf32>
    %1110 = vector.shape_cast %1109 : vector<256xf32> to vector<1x256xf32>
    %cst_259 = arith.constant 5.000000e+00 : f32
    %1111 = vector.broadcast %cst_259 : f32 to vector<1x256xf32>
    %1112 = arith.mulf %1111, %1108 : vector<1x256xf32>
    %1113 = arith.select %1106, %1112, %1110 : vector<1x256xi1>, vector<1x256xf32>
    %1114 = vector.shape_cast %1113 : vector<1x256xf32> to vector<1x1x256xf32>
    %cst_260 = arith.constant dense<0.000000e+00> : vector<1xf32>
    %1115 = vector.multi_reduction <add>, %1114, %cst_260 [1, 2] : vector<1x1x256xf32> to vector<1xf32>
    %1116 = vector.shape_cast %1115 : vector<1xf32> to vector<1x1x1xf32>
    %1117 = vector.extract %1116[0, 0, 0] : f32 from vector<1x1x1xf32>
    %cst_261 = arith.constant 4.8828125E-4 : f32
    %1118 = arith.mulf %1117, %cst_261 : f32
    %1119 = vector.broadcast %1118 : f32 to vector<1x8x128xf32>
    %c0_262 = arith.constant 0 : index
    %c0_263 = arith.constant 0 : index
    %c0_264 = arith.constant 0 : index
    %1120 = vector.load %arg3[%c0_262, %c0_263, %c0_264] : memref<1x8x128xf32, #tpu.memory_space<vmem>>, vector<1x8x128xf32>
    tpu.vector_store %arg3[%c0_262, %c0_263, %c0_264], %1119 {strides = array<i32>} : memref<1x8x128xf32, #tpu.memory_space<vmem>>, vector<1x8x128xf32>,
    return
  }
  func.func @transform_0(%arg0: i32) -> (i32, i32, i32) {
    %c0_i32 = arith.constant 0 : i32
    %c0_i32_0 = arith.constant 0 : i32
    %c0_i32_1 = arith.constant 0 : i32
    return %arg0, %c0_i32, %c0_i32_0 : i32, i32, i32
  }
  func.func @transform_1(%arg0: i32) -> (i32, i32, i32) {
    %c0_i32 = arith.constant 0 : i32
    %c0_i32_0 = arith.constant 0 : i32
    %c0_i32_1 = arith.constant 0 : i32
    return %arg0, %c0_i32, %c0_i32_0 : i32, i32, i32
  }
  func.func @transform_2(%arg0: i32) -> (i32, i32, i32) {
    %c0_i32 = arith.constant 0 : i32
    %c0_i32_0 = arith.constant 0 : i32
    %c0_i32_1 = arith.constant 0 : i32
    return %arg0, %c0_i32, %c0_i32_0 : i32, i32, i32
  }
}

</mosaic_0001>

<llo_original>
// kernel: tpu_custom_call.1
$region0: #{tpu_custom_call.1}
  #allocation0 [shape = 'u32[]', space=smem, size = 0x4, offset = 0x4, fixed_abs, tag = 'smem constant byte address 0x4 - core index']
  #allocation1 [shape = 'u32[144,128]{1,0:T(1,128)}', space=vmem, size = 0x12000, scoped, tag = 'internal scratch']
  %s0 = inlined_call_operand.vmem [shape: f32[2,3,324], index: 0, kind: input, shape index: {}]
  %s1 = inlined_call_operand.vmem [shape: f32[2,3,324], index: 1, kind: input, shape index: {}]
  %s2 = inlined_call_operand.hbm [shape: f32[2,8,128], index: 2, kind: output, shape index: {}]
  %s3 = sld [smem:[#allocation0]]
  $region41: #{tpu_custom_call.1} parent=0
    _
  %s5 = ssub.s32 1, %s3
  %s6 = scalar_select 0, %s5, %s3
  $region1: #{tpu_custom_call.1} parent=0
    #allocation2 [shape = 'u8[8192]{0}', space=vmem, size = 0x2000, scoped, tag = 'output window, operand 0']
    #allocation3 [shape = 's32[2]{0}', space=sflag, size = 0x8, scoped, tag = 'scoped memory for tpu_custom_call.1']
    %7 = vsyncpa [#allocation3], 0
    %s8 = scalar_lea.sflag [#allocation3], 1
    %9 = vsyncpa %s8, 0
    loop: start=0, step=1, limit=4
    $region2: #{tpu_custom_call.1} parent=1 // loop_pre_header
      _
    $region3: #{tpu_custom_call.1} parent=1 // loop_header
      %s11 = sphi 0, %s15
      %p12 = scmp.ge.s32.totalorder %s11, 4
      %s21 = sphi 0, %s23
      %s24 = sphi 0, %s21
      %s25 = sphi 0, %s24
      %s41 = sphi 0, %s25
      %s47 = sphi 0, %s49
      %s50 = sphi 0, %s47
      %s51 = sphi 0, %s50
      %s67 = sphi 0, %s51
      %s73 = sphi 0, %s75
      %s76 = sphi 0, %s73
      %s77 = sphi 0, %s76
      %s93 = sphi 0, %s77
    $region4: #{tpu_custom_call.1} parent=1 // loop_header_branch
      %14 = sbr.rel (%p12) target = $region8
    $region5: #{tpu_custom_call.1} parent=1 // loop_body
      %s16 = ssub.s32 %s11, 1
      %s17 = ssub.s32 %s11, 2
      %s18 = sadd.s32 %s11, 1
      %s19 = ssub.s32 %s11, %s18
      %p20 = scmp.eq.s32.totalorder %s19, 0
      %s22 = sadd.s32 %s21, 1
      %s23 = scalar_select %p20, %s21, %s22
      %p26 = pneg %p20
      %p27 = scmp.eq.s32.totalorder %s11, 1
      %p28 = por %p26, %p27
      %p29 = scmp.ne.s32.totalorder %s21, %s24
      %p30 = scmp.eq.s32.totalorder %s11, 0
      %p31 = por %p29, %p30
      %p32 = scmp.ne.s32.totalorder %s21, %s24
      %p33 = scmp.eq.s32.totalorder %s16, 1
      %p34 = por %p32, %p33
      %p35 = scmp.ne.s32.totalorder %s24, %s25
      %p36 = scmp.eq.s32.totalorder %s16, 0
      %p37 = por %p35, %p36
      %p38 = scmp.ne.s32.totalorder %s24, %s25
      %p39 = scmp.eq.s32.totalorder %s17, 1
      %p40 = por %p38, %p39
      %p42 = scmp.ne.s32.totalorder %s25, %s41
      %p43 = scmp.eq.s32.totalorder %s17, 0
      %p44 = por %p42, %p43
      %s45 = ssub.s32 %s11, %s18
      %p46 = scmp.eq.s32.totalorder %s45, 0
      %s48 = sadd.s32 %s47, 1
      %s49 = scalar_select %p46, %s47, %s48
      %p52 = pneg %p46
      %p53 = scmp.eq.s32.totalorder %s11, 1
      %p54 = por %p52, %p53
      %p55 = scmp.ne.s32.totalorder %s47, %s50
      %p56 = scmp.eq.s32.totalorder %s11, 0
      %p57 = por %p55, %p56
      %p58 = scmp.ne.s32.totalorder %s47, %s50
      %p59 = scmp.eq.s32.totalorder %s16, 1
      %p60 = por %p58, %p59
      %p61 = scmp.ne.s32.totalorder %s50, %s51
      %p62 = scmp.eq.s32.totalorder %s16, 0
      %p63 = por %p61, %p62
      %p64 = scmp.ne.s32.totalorder %s50, %s51
      %p65 = scmp.eq.s32.totalorder %s17, 1
      %p66 = por %p64, %p65
      %p68 = scmp.ne.s32.totalorder %s51, %s67
      %p69 = scmp.eq.s32.totalorder %s17, 0
      %p70 = por %p68, %p69
      %s71 = ssub.s32 %s11, %s18
      %p72 = scmp.eq.s32.totalorder %s71, 0
      %s74 = sadd.s32 %s73, 1
      %s75 = scalar_select %p72, %s73, %s74
      %p78 = pneg %p72
      %p79 = scmp.eq.s32.totalorder %s11, 1
      %p80 = por %p78, %p79
      %p81 = scmp.ne.s32.totalorder %s73, %s76
      %p82 = scmp.eq.s32.totalorder %s11, 0
      %p83 = por %p81, %p82
      %p84 = scmp.ne.s32.totalorder %s73, %s76
      %p85 = scmp.eq.s32.totalorder %s16, 1
      %p86 = por %p84, %p85
      %p87 = scmp.ne.s32.totalorder %s76, %s77
      %p88 = scmp.eq.s32.totalorder %s16, 0
      %p89 = por %p87, %p88
      %p90 = scmp.ne.s32.totalorder %s76, %s77
      %p91 = scmp.eq.s32.totalorder %s17, 1
      %p92 = por %p90, %p91
      %p94 = scmp.ne.s32.totalorder %s77, %s93
      %p95 = scmp.eq.s32.totalorder %s17, 0
      %p96 = por %p94, %p95
      %p97 = scmp.le.s32.totalorder 1, %s11
      %p98 = scmp.lt.s32.totalorder %s11, 3
      %p99 = pnand %p97, %p98
      %p100 = pneg %p99
      // Predicated region
      $region9: #{tpu_custom_call.1} parent=5 // pred_check
        _
      $region10: #{tpu_custom_call.1} parent=5 // pred_check_branch
        %102 = sbr.rel (%p99) target = $region12
      $region11: #{tpu_custom_call.1} parent=5 // pred_region
        %s103 = ssub.s32 %s11, 1
      $region12: #{tpu_custom_call.1} parent=5 // pred_fallthru
        _
      %p104 = scmp.lt.s32.totalorder %s11, 2
      // Predicated region
      $region13: #{tpu_custom_call.1} parent=5 // pred_check
        %p105 = pneg %p104
      $region14: #{tpu_custom_call.1} parent=5 // pred_check_branch
        %107 = sbr.rel (%p105) target = $region16
      $region15: #{tpu_custom_call.1} parent=5 // pred_region
        // Predicated region
        $region17: #{tpu_custom_call.1} parent=15 // pred_check
          %p108 = pneg %p31
        $region18: #{tpu_custom_call.1} parent=15 // pred_check_branch
          %110 = sbr.rel (%p108) target = $region20
        $region19: #{tpu_custom_call.1} parent=15 // pred_region
          %p111 = scmp.lt.s32.totalorder %s11, 1
          %s112 = scalar_select %p111, %s11, 1
          %s113 = smul.addr %s112, 3
          %s114 = smul.addr %s113, 4
          %s115 = scalar_lea.vmem %s0, %s114
        $region20: #{tpu_custom_call.1} parent=15 // pred_fallthru
          _
        // Predicated region
        $region21: #{tpu_custom_call.1} parent=15 // pred_check
          %p116 = pneg %p57
        $region22: #{tpu_custom_call.1} parent=15 // pred_check_branch
          %118 = sbr.rel (%p116) target = $region24
        $region23: #{tpu_custom_call.1} parent=15 // pred_region
          %p119 = scmp.lt.s32.totalorder %s11, 1
          %s120 = scalar_select %p119, %s11, 1
          %s121 = smul.addr %s120, 3
          %s122 = smul.addr %s121, 4
          %s123 = scalar_lea.vmem %s1, %s122
        $region24: #{tpu_custom_call.1} parent=15 // pred_fallthru
          _
      $region16: #{tpu_custom_call.1} parent=5 // pred_fallthru
        _
      %p124 = scmp.le.s32.totalorder 1, %s11
      %p125 = scmp.lt.s32.totalorder %s11, 3
      %p126 = pnand %p124, %p125
      %p127 = pneg %p126
      // Predicated region
      $region25: #{tpu_custom_call.1} parent=5 // pred_check
        _
      $region26: #{tpu_custom_call.1} parent=5 // pred_check_branch
        %129 = sbr.rel (%p126) target = $region28
      $region27: #{tpu_custom_call.1} parent=5 // pred_region
        %s130 = ssub.s32 %s11, 1
        %p131 = scmp.lt.s32.totalorder %s16, 1
        %s132 = scalar_select %p131, %s16, 1
        %s133 = smul.addr %s132, 3
        %s134 = smul.addr %s133, 4
        %s135 = scalar_lea.vmem %s0, %s134
        %p136 = pneg %p37
        %p137 = pneg %p34
        %p138 = scmp.lt.s32.totalorder %s16, 1
        %s139 = scalar_select %p138, %s16, 1
        %s140 = smul.addr %s139, 3
        %s141 = smul.addr %s140, 4
        %s142 = scalar_lea.vmem %s1, %s141
        %p143 = pneg %p63
        %p144 = pneg %p60
        %p145 = pneg %p89
        %p146 = pneg %p86
        %s147 = sand.u32 %s76, 1
        %s148 = scalar_lea.sflag [#allocation3], %s147
        %s149 = sand.u32 %s76, 1
        %s150 = smul.addr %s149, 8
        %s151 = scalar_lea.vmem [#allocation2], %s150
        %p152 = scmp.lt.s32.totalorder %s16, 1
        %s153 = scalar_select %p152, %s16, 1
        %s154 = smul.addr %s153, 3
        %s155 = smul.addr %s154, 4
        %s156 = scalar_lea.vmem %s0, %s155
        %p157 = scmp.lt.s32.totalorder %s16, 1
        %s158 = scalar_select %p157, %s16, 1
        %s159 = smul.addr %s158, 3
        %s160 = smul.addr %s159, 4
        %s161 = scalar_lea.vmem %s1, %s160
        %v162 = vld [vmem:[%s156] sm:$0x77]
        %v163 = vld [vmem:[%s156 + $0x8] sm:$0x7]
        %v164 = vld [vmem:[%s161] sm:$0x77]
        %v165 = vld [vmem:[%s161 + $0x8] sm:$0x7]
        %v166 = vlaneseq
        %v167 = vand.u32 %v166, 127
        %v168 = vadd.s32 %v167, 128
        %vm169 = vcmp.lt.s32.totalorder %v167, 0
        %v170 = vsub.s32 0, %v167
        %v171 = vsel %vm169, %v170, %v167
        %v172 = vshrl.u32 %v171, 4
        %v173 = vand.u32 %v171, 15
        %v174 = vsub.s32 0, %v173
        %v175 = vsel %vm169, %v174, %v173
        %vm176 = vcmp.lt.s32.totalorder %v168, 0
        %v177 = vsub.s32 0, %v168
        %v178 = vsel %vm176, %v177, %v168
        %v179 = vshrl.u32 %v178, 4
        %v180 = vand.u32 %v178, 15
        %v181 = vsub.s32 0, %v180
        %v182 = vsel %vm176, %v181, %v180
        %vm183 = vcmp.ne.s32.totalorder %v175, 0
        %vm184 = vcmp.ne.s32.totalorder %v182, 0
        %vm185 = vcmp.lt.s32.totalorder %v175, 0
        %vm186 = vcmp.lt.s32.totalorder %v182, 0
        %vm187 = vmand %vm185, %vm183
        %vm188 = vmand %vm186, %vm184
        %v189 = vadd.s32 %v175, 16
        %v190 = vadd.s32 %v182, 16
        %v191 = vsel %vm187, %v189, %v175
        %v192 = vsel %vm188, %v190, %v182
        %v193 = vadd.s32 %v191, 4294967294
        %v194 = vadd.s32 %v192, 4294967294
        %vm195 = vcmp.ge.s32.totalorder %v193, 0
        %vm196 = vcmp.ge.s32.totalorder %v194, 0
        %vm197 = vcmp.lt.s32.totalorder %v193, 16
        %vm198 = vcmp.lt.s32.totalorder %v194, 16
        %vm199 = vmand %vm195, %vm197
        %vm200 = vmand %vm196, %vm198
        %v201 = vadd.s32 %v191, 4294967295
        %v202 = vadd.s32 %v192, 4294967295
        %vm203 = vcmp.ge.s32.totalorder %v201, 0
        %vm204 = vcmp.ge.s32.totalorder %v202, 0
        %vm205 = vcmp.lt.s32.totalorder %v201, 16
        %vm206 = vcmp.lt.s32.totalorder %v202, 16
        %vm207 = vmand %vm203, %vm205
        %vm208 = vmand %vm204, %vm206
        %vm209 = vcmp.ge.s32.totalorder %v191, 0
        %vm210 = vcmp.ge.s32.totalorder %v192, 0
        %vm211 = vcmp.lt.s32.totalorder %v191, 16
        %vm212 = vcmp.lt.s32.totalorder %v192, 16
        %vm213 = vmand %vm209, %vm211
        %vm214 = vmand %vm210, %vm212
        %v215 = vadd.s32 %v191, 1
        %v216 = vadd.s32 %v192, 1
        %vm217 = vcmp.ge.s32.totalorder %v215, 0
        %vm218 = vcmp.ge.s32.totalorder %v216, 0
        %vm219 = vcmp.lt.s32.totalorder %v215, 16
        %vm220 = vcmp.lt.s32.totalorder %v216, 16
        %vm221 = vmand %vm217, %vm219
        %vm222 = vmand %vm218, %vm220
        %v223 = vadd.s32 %v191, 2
        %v224 = vadd.s32 %v192, 2
        %vm225 = vcmp.ge.s32.totalorder %v223, 0
        %vm226 = vcmp.ge.s32.totalorder %v224, 0
        %vm227 = vcmp.lt.s32.totalorder %v223, 16
        %vm228 = vcmp.lt.s32.totalorder %v224, 16
        %vm229 = vmand %vm225, %vm227
        %vm230 = vmand %vm226, %vm228
        %v231 = vsel %vm199, 1, 0
        %v232 = vsel %vm200, 1, 0
        %vm233 = vcmp.eq.s32.totalorder %v231, 1
        %vm234 = vcmp.eq.s32.totalorder %v232, 1
        %v236 = vcombine.high %v162, %v162
        %v238 = vsel %vm233, %v162, 0.0
        %v239 = vsel %vm234, %v236, 0.0
        %v241 = vcombine.high %v164, %v164
        %v243 = vsel %vm233, %v164, 0.0
        %v244 = vsel %vm234, %v241, 0.0
        %246 = vrot.lane.b32.xlu0 %v162, 94
        %v247 = vpop.permute.xlu0 %246
        %248 = vrot.lane.b32.xlu0 %v236, 94
        %v249 = vpop.permute.xlu0 %248
        %250 = vrot.lane.b32.xlu0 %v163, 94
        %v251 = vpop.permute.xlu0 %250
        %vm252 = vcmask 769024
        %v253 = vsel %vm252, %v247, %v249
        %v254 = vsel %vm252, %v249, %v251
        %v257 = vsub.f32 %v238, %v253
        %v258 = vsub.f32 %v239, %v254
        %v259 = vand.u32 2147483647, %v257
        %v260 = vand.u32 2147483647, %v258
        %v261 = vadd.f32 %v259, 0.0
        %v262 = vadd.f32 %v260, 0.0
        %264 = vrot.lane.b32.xlu0 %v164, 94
        %v265 = vpop.permute.xlu0 %264
        %266 = vrot.lane.b32.xlu0 %v241, 94
        %v267 = vpop.permute.xlu0 %266
        %268 = vrot.lane.b32.xlu0 %v165, 94
        %v269 = vpop.permute.xlu0 %268
        %v270 = vsel %vm252, %v265, %v267
        %v271 = vsel %vm252, %v267, %v269
        %v274 = vsub.f32 %v243, %v270
        %v275 = vsub.f32 %v244, %v271
        %v276 = vand.u32 2147483647, %v274
        %v277 = vand.u32 2147483647, %v275
        %v278 = vadd.f32 %v276, 0.0
        %v279 = vadd.f32 %v277, 0.0
        %v280 = vmul.f32 %v257, %v257
        %v281 = vmul.f32 %v258, %v258
        %vm282 = vcmask 1042432
        %v283 = vsel %vm282, %v280, 0.0
        %v284 = vrot.slane %v283, 4
        %v285 = vadd.f32 %v283, %v284
        %v286 = vrot.slane %v285, 2
        %v287 = vadd.f32 %v285, %v286
        %v288 = vrot.slane %v287, 1
        %v289 = vadd.f32 %v287, %v288
        %v290 = vsel %vm282, %v281, 0.0
        %v291 = vrot.slane %v290, 4
        %v292 = vadd.f32 %v290, %v291
        %v293 = vrot.slane %v292, 2
        %v294 = vadd.f32 %v292, %v293
        %v295 = vrot.slane %v294, 1
        %v296 = vadd.f32 %v294, %v295
        %v297 = vmul.f32 %v289, -50.0
        %v298 = vmul.f32 %v296, -50.0
        %v299 = vmul.f32 %v297, 1.442695
        %v300 = vpow.pop %v299
        %v301 = vmul.f32 %v298, 1.442695
        %v302 = vpow.pop %v301
        %vm303 = vcmp.gt.f32.partialorder %v243, 0.0
        %vm304 = vcmp.gt.f32.partialorder %v244, 0.0
        %v305 = vsel %vm303, %v274, 0.0
        %v306 = vsel %vm304, %v275, 0.0
        %v307 = vand.u32 2147483647, %v305
        %v308 = vand.u32 2147483647, %v306
        %v309 = vmul.f32 %v307, %v307
        %v310 = vmul.f32 %v308, %v308
        %v311 = vmul.f32 %v309, 0.9216105
        %v312 = vmul.f32 %v310, 0.9216105
        %v313 = vadd.f32 %v311, 0.0
        %v314 = vadd.f32 %v312, 0.0
        %v315 = vadd.f32 %v307, 1e-06
        %v316 = vadd.f32 %v308, 1e-06
        %v317 = vlog2.pop %v315
        %v318 = vmul.f32 %v317, 0.6931472
        %v319 = vlog2.pop %v316
        %v320 = vmul.f32 %v319, 0.6931472
        %v321 = vmul.f32 %v318, 0.8
        %v322 = vmul.f32 %v320, 0.8
        %v323 = vmul.f32 %v321, 1.442695
        %v324 = vpow.pop %v323
        %v325 = vmul.f32 %v322, 1.442695
        %v326 = vpow.pop %v325
        %v327 = vmul.f32 %v300, %v324
        %v328 = vmul.f32 %v302, %v326
        %v329 = vadd.f32 %v327, 0.0
        %v330 = vadd.f32 %v328, 0.0
        %v331 = vsel %vm207, 1, 0
        %v332 = vsel %vm208, 1, 0
        %vm333 = vcmp.eq.s32.totalorder %v331, 1
        %vm334 = vcmp.eq.s32.totalorder %v332, 1
        %335 = vrot.lane.b32.xlu0 %v162, 127
        %v336 = vpop.permute.xlu0 %335
        %337 = vrot.lane.b32.xlu0 %v236, 127
        %v338 = vpop.permute.xlu0 %337
        %339 = vrot.lane.b32.xlu0 %v163, 127
        %v340 = vpop.permute.xlu0 %339
        %vm341 = vcmask 1039360
        %v342 = vsel %vm341, %v336, %v338
        %v343 = vsel %vm341, %v338, %v340
        %v346 = vsel %vm333, %v342, 0.0
        %v347 = vsel %vm334, %v343, 0.0
        %348 = vrot.lane.b32.xlu0 %v164, 127
        %v349 = vpop.permute.xlu0 %348
        %350 = vrot.lane.b32.xlu0 %v241, 127
        %v351 = vpop.permute.xlu0 %350
        %352 = vrot.lane.b32.xlu0 %v165, 127
        %v353 = vpop.permute.xlu0 %352
        %v354 = vsel %vm341, %v349, %v351
        %v355 = vsel %vm341, %v351, %v353
        %v358 = vsel %vm333, %v354, 0.0
        %v359 = vsel %vm334, %v355, 0.0
        %v360 = vsub.f32 %v346, %v253
        %v361 = vsub.f32 %v347, %v254
        %v362 = vand.u32 2147483647, %v360
        %v363 = vand.u32 2147483647, %v361
        %v364 = vadd.f32 %v261, %v362
        %v365 = vadd.f32 %v262, %v363
        %v366 = vsub.f32 %v358, %v270
        %v367 = vsub.f32 %v359, %v271
        %v368 = vand.u32 2147483647, %v366
        %v369 = vand.u32 2147483647, %v367
        %v370 = vadd.f32 %v278, %v368
        %v371 = vadd.f32 %v279, %v369
        %v372 = vmul.f32 %v360, %v360
        %v373 = vmul.f32 %v361, %v361
        %v374 = vsel %vm282, %v372, 0.0
        %v375 = vrot.slane %v374, 4
        %v376 = vadd.f32 %v374, %v375
        %v377 = vrot.slane %v376, 2
        %v378 = vadd.f32 %v376, %v377
        %v379 = vrot.slane %v378, 1
        %v380 = vadd.f32 %v378, %v379
        %v381 = vsel %vm282, %v373, 0.0
        %v382 = vrot.slane %v381, 4
        %v383 = vadd.f32 %v381, %v382
        %v384 = vrot.slane %v383, 2
        %v385 = vadd.f32 %v383, %v384
        %v386 = vrot.slane %v385, 1
        %v387 = vadd.f32 %v385, %v386
        %v388 = vmul.f32 %v380, -50.0
        %v389 = vmul.f32 %v387, -50.0
        %v390 = vmul.f32 %v388, 1.442695
        %v391 = vpow.pop %v390
        %v392 = vmul.f32 %v389, 1.442695
        %v393 = vpow.pop %v392
        %vm394 = vcmp.gt.f32.partialorder %v358, 0.0
        %vm395 = vcmp.gt.f32.partialorder %v359, 0.0
        %v396 = vsel %vm394, %v366, 0.0
        %v397 = vsel %vm395, %v367, 0.0
        %v398 = vand.u32 2147483647, %v396
        %v399 = vand.u32 2147483647, %v397
        %v400 = vmul.f32 %v398, %v398
        %v401 = vmul.f32 %v399, %v399
        %v402 = vmul.f32 %v400, 0.95025927
        %v403 = vmul.f32 %v401, 0.95025927
        %v404 = vadd.f32 %v313, %v402
        %v405 = vadd.f32 %v314, %v403
        %v406 = vadd.f32 %v398, 1e-06
        %v407 = vadd.f32 %v399, 1e-06
        %v408 = vlog2.pop %v406
        %v409 = vmul.f32 %v408, 0.6931472
        %v410 = vlog2.pop %v407
        %v411 = vmul.f32 %v410, 0.6931472
        %v412 = vmul.f32 %v409, 0.8
        %v413 = vmul.f32 %v411, 0.8
        %v414 = vmul.f32 %v412, 1.442695
        %v415 = vpow.pop %v414
        %v416 = vmul.f32 %v413, 1.442695
        %v417 = vpow.pop %v416
        %v418 = vmul.f32 %v391, %v415
        %v419 = vmul.f32 %v393, %v417
        %v420 = vadd.f32 %v329, %v418
        %v421 = vadd.f32 %v330, %v419
        %v422 = vsel %vm213, 1, 0
        %v423 = vsel %vm214, 1, 0
        %vm424 = vcmp.eq.s32.totalorder %v422, 1
        %vm425 = vcmp.eq.s32.totalorder %v423, 1
        %426 = vrot.lane.b32.xlu0 %v162, 126
        %v427 = vpop.permute.xlu0 %426
        %428 = vrot.lane.b32.xlu0 %v236, 126
        %v429 = vpop.permute.xlu0 %428
        %430 = vrot.lane.b32.xlu0 %v163, 126
        %v431 = vpop.permute.xlu0 %430
        %vm432 = vcmask 1031168
        %v433 = vsel %vm432, %v427, %v429
        %v434 = vsel %vm432, %v429, %v431
        %v437 = vsel %vm424, %v433, 0.0
        %v438 = vsel %vm425, %v434, 0.0
        %439 = vrot.lane.b32.xlu0 %v164, 126
        %v440 = vpop.permute.xlu0 %439
        %441 = vrot.lane.b32.xlu0 %v241, 126
        %v442 = vpop.permute.xlu0 %441
        %443 = vrot.lane.b32.xlu0 %v165, 126
        %v444 = vpop.permute.xlu0 %443
        %v445 = vsel %vm432, %v440, %v442
        %v446 = vsel %vm432, %v442, %v444
        %v449 = vsel %vm424, %v445, 0.0
        %v450 = vsel %vm425, %v446, 0.0
        %v451 = vsub.f32 %v437, %v253
        %v452 = vsub.f32 %v438, %v254
        %v453 = vand.u32 2147483647, %v451
        %v454 = vand.u32 2147483647, %v452
        %v455 = vadd.f32 %v364, %v453
        %v456 = vadd.f32 %v365, %v454
        %v457 = vsub.f32 %v449, %v270
        %v458 = vsub.f32 %v450, %v271
        %v459 = vand.u32 2147483647, %v457
        %v460 = vand.u32 2147483647, %v458
        %v461 = vadd.f32 %v370, %v459
        %v462 = vadd.f32 %v371, %v460
        %v463 = vmul.f32 %v451, %v451
        %v464 = vmul.f32 %v452, %v452
        %v465 = vsel %vm282, %v463, 0.0
        %v466 = vrot.slane %v465, 4
        %v467 = vadd.f32 %v465, %v466
        %v468 = vrot.slane %v467, 2
        %v469 = vadd.f32 %v467, %v468
        %v470 = vrot.slane %v469, 1
        %v471 = vadd.f32 %v469, %v470
        %v472 = vsel %vm282, %v464, 0.0
        %v473 = vrot.slane %v472, 4
        %v474 = vadd.f32 %v472, %v473
        %v475 = vrot.slane %v474, 2
        %v476 = vadd.f32 %v474, %v475
        %v477 = vrot.slane %v476, 1
        %v478 = vadd.f32 %v476, %v477
        %v479 = vmul.f32 %v471, -50.0
        %v480 = vmul.f32 %v478, -50.0
        %v481 = vmul.f32 %v479, 1.442695
        %v482 = vpow.pop %v481
        %v483 = vmul.f32 %v480, 1.442695
        %v484 = vpow.pop %v483
        %vm485 = vcmp.gt.f32.partialorder %v449, 0.0
        %vm486 = vcmp.gt.f32.partialorder %v450, 0.0
        %v487 = vsel %vm485, %v457, 0.0
        %v488 = vsel %vm486, %v458, 0.0
        %v489 = vand.u32 2147483647, %v487
        %v490 = vand.u32 2147483647, %v488
        %v491 = vmul.f32 %v489, %v489
        %v492 = vmul.f32 %v490, %v490
        %v493 = vmul.f32 %v491, 0.96000546
        %v494 = vmul.f32 %v492, 0.96000546
        %v495 = vadd.f32 %v404, %v493
        %v496 = vadd.f32 %v405, %v494
        %v497 = vadd.f32 %v489, 1e-06
        %v498 = vadd.f32 %v490, 1e-06
        %v499 = vlog2.pop %v497
        %v500 = vmul.f32 %v499, 0.6931472
        %v501 = vlog2.pop %v498
        %v502 = vmul.f32 %v501, 0.6931472
        %v503 = vmul.f32 %v500, 0.8
        %v504 = vmul.f32 %v502, 0.8
        %v505 = vmul.f32 %v503, 1.442695
        %v506 = vpow.pop %v505
        %v507 = vmul.f32 %v504, 1.442695
        %v508 = vpow.pop %v507
        %v509 = vmul.f32 %v482, %v506
        %v510 = vmul.f32 %v484, %v508
        %v511 = vadd.f32 %v420, %v509
        %v512 = vadd.f32 %v421, %v510
        %v513 = vsel %vm221, 1, 0
        %v514 = vsel %vm222, 1, 0
        %vm515 = vcmp.eq.s32.totalorder %v513, 1
        %vm516 = vcmp.eq.s32.totalorder %v514, 1
        %517 = vrot.lane.b32.xlu0 %v162, 125
        %v518 = vpop.permute.xlu0 %517
        %519 = vrot.lane.b32.xlu0 %v236, 125
        %v520 = vpop.permute.xlu0 %519
        %521 = vrot.lane.b32.xlu0 %v163, 125
        %v522 = vpop.permute.xlu0 %521
        %vm523 = vcmask 1022976
        %v524 = vsel %vm523, %v518, %v520
        %v525 = vsel %vm523, %v520, %v522
        %v528 = vsel %vm515, %v524, 0.0
        %v529 = vsel %vm516, %v525, 0.0
        %530 = vrot.lane.b32.xlu0 %v164, 125
        %v531 = vpop.permute.xlu0 %530
        %532 = vrot.lane.b32.xlu0 %v241, 125
        %v533 = vpop.permute.xlu0 %532
        %534 = vrot.lane.b32.xlu0 %v165, 125
        %v535 = vpop.permute.xlu0 %534
        %v536 = vsel %vm523, %v531, %v533
        %v537 = vsel %vm523, %v533, %v535
        %v540 = vsel %vm515, %v536, 0.0
        %v541 = vsel %vm516, %v537, 0.0
        %v542 = vsub.f32 %v528, %v253
        %v543 = vsub.f32 %v529, %v254
        %v544 = vand.u32 2147483647, %v542
        %v545 = vand.u32 2147483647, %v543
        %v546 = vadd.f32 %v455, %v544
        %v547 = vadd.f32 %v456, %v545
        %v548 = vsub.f32 %v540, %v270
        %v549 = vsub.f32 %v541, %v271
        %v550 = vand.u32 2147483647, %v548
        %v551 = vand.u32 2147483647, %v549
        %v552 = vadd.f32 %v461, %v550
        %v553 = vadd.f32 %v462, %v551
        %v554 = vmul.f32 %v542, %v542
        %v555 = vmul.f32 %v543, %v543
        %v556 = vsel %vm282, %v554, 0.0
        %v557 = vrot.slane %v556, 4
        %v558 = vadd.f32 %v556, %v557
        %v559 = vrot.slane %v558, 2
        %v560 = vadd.f32 %v558, %v559
        %v561 = vrot.slane %v560, 1
        %v562 = vadd.f32 %v560, %v561
        %v563 = vsel %vm282, %v555, 0.0
        %v564 = vrot.slane %v563, 4
        %v565 = vadd.f32 %v563, %v564
        %v566 = vrot.slane %v565, 2
        %v567 = vadd.f32 %v565, %v566
        %v568 = vrot.slane %v567, 1
        %v569 = vadd.f32 %v567, %v568
        %v570 = vmul.f32 %v562, -50.0
        %v571 = vmul.f32 %v569, -50.0
        %v572 = vmul.f32 %v570, 1.442695
        %v573 = vpow.pop %v572
        %v574 = vmul.f32 %v571, 1.442695
        %v575 = vpow.pop %v574
        %vm576 = vcmp.gt.f32.partialorder %v540, 0.0
        %vm577 = vcmp.gt.f32.partialorder %v541, 0.0
        %v578 = vsel %vm576, %v548, 0.0
        %v579 = vsel %vm577, %v549, 0.0
        %v580 = vand.u32 2147483647, %v578
        %v581 = vand.u32 2147483647, %v579
        %v582 = vmul.f32 %v580, %v580
        %v583 = vmul.f32 %v581, %v581
        %v584 = vmul.f32 %v582, 0.95025927
        %v585 = vmul.f32 %v583, 0.95025927
        %v586 = vadd.f32 %v495, %v584
        %v587 = vadd.f32 %v496, %v585
        %v588 = vadd.f32 %v580, 1e-06
        %v589 = vadd.f32 %v581, 1e-06
        %v590 = vlog2.pop %v588
        %v591 = vmul.f32 %v590, 0.6931472
        %v592 = vlog2.pop %v589
        %v593 = vmul.f32 %v592, 0.6931472
        %v594 = vmul.f32 %v591, 0.8
        %v595 = vmul.f32 %v593, 0.8
        %v596 = vmul.f32 %v594, 1.442695
        %v597 = vpow.pop %v596
        %v598 = vmul.f32 %v595, 1.442695
        %v599 = vpow.pop %v598
        %v600 = vmul.f32 %v573, %v597
        %v601 = vmul.f32 %v575, %v599
        %v602 = vadd.f32 %v511, %v600
        %v603 = vadd.f32 %v512, %v601
        %v604 = vsel %vm229, 1, 0
        %v605 = vsel %vm230, 1, 0
        %vm606 = vcmp.eq.s32.totalorder %v604, 1
        %vm607 = vcmp.eq.s32.totalorder %v605, 1
        %608 = vrot.lane.b32.xlu0 %v162, 124
        %v609 = vpop.permute.xlu0 %608
        %610 = vrot.lane.b32.xlu0 %v236, 124
        %v611 = vpop.permute.xlu0 %610
        %612 = vrot.lane.b32.xlu0 %v163, 124
        %v613 = vpop.permute.xlu0 %612
        %vm614 = vcmask 1014784
        %v615 = vsel %vm614, %v609, %v611
        %v616 = vsel %vm614, %v611, %v613
        %v619 = vsel %vm606, %v615, 0.0
        %v620 = vsel %vm607, %v616, 0.0
        %621 = vrot.lane.b32.xlu0 %v164, 124
        %v622 = vpop.permute.xlu0 %621
        %623 = vrot.lane.b32.xlu0 %v241, 124
        %v624 = vpop.permute.xlu0 %623
        %625 = vrot.lane.b32.xlu0 %v165, 124
        %v626 = vpop.permute.xlu0 %625
        %v627 = vsel %vm614, %v622, %v624
        %v628 = vsel %vm614, %v624, %v626
        %v631 = vsel %vm606, %v627, 0.0
        %v632 = vsel %vm607, %v628, 0.0
        %v633 = vsub.f32 %v619, %v253
        %v634 = vsub.f32 %v620, %v254
        %v635 = vand.u32 2147483647, %v633
        %v636 = vand.u32 2147483647, %v634
        %v637 = vadd.f32 %v546, %v635
        %v638 = vadd.f32 %v547, %v636
        %v639 = vsub.f32 %v631, %v270
        %v640 = vsub.f32 %v632, %v271
        %v641 = vand.u32 2147483647, %v639
        %v642 = vand.u32 2147483647, %v640
        %v643 = vadd.f32 %v552, %v641
        %v644 = vadd.f32 %v553, %v642
        %v645 = vmul.f32 %v633, %v633
        %v646 = vmul.f32 %v634, %v634
        %v647 = vsel %vm282, %v645, 0.0
        %v648 = vrot.slane %v647, 4
        %v649 = vadd.f32 %v647, %v648
        %v650 = vrot.slane %v649, 2
        %v651 = vadd.f32 %v649, %v650
        %v652 = vrot.slane %v651, 1
        %v653 = vadd.f32 %v651, %v652
        %v654 = vsel %vm282, %v646, 0.0
        %v655 = vrot.slane %v654, 4
        %v656 = vadd.f32 %v654, %v655
        %v657 = vrot.slane %v656, 2
        %v658 = vadd.f32 %v656, %v657
        %v659 = vrot.slane %v658, 1
        %v660 = vadd.f32 %v658, %v659
        %v661 = vmul.f32 %v653, -50.0
        %v662 = vmul.f32 %v660, -50.0
        %v663 = vmul.f32 %v661, 1.442695
        %v664 = vpow.pop %v663
        %v665 = vmul.f32 %v662, 1.442695
        %v666 = vpow.pop %v665
        %vm667 = vcmp.gt.f32.partialorder %v631, 0.0
        %vm668 = vcmp.gt.f32.partialorder %v632, 0.0
        %v669 = vsel %vm667, %v639, 0.0
        %v670 = vsel %vm668, %v640, 0.0
        %v671 = vand.u32 2147483647, %v669
        %v672 = vand.u32 2147483647, %v670
        %v673 = vmul.f32 %v671, %v671
        %v674 = vmul.f32 %v672, %v672
        %v675 = vmul.f32 %v673, 0.9216105
        %v676 = vmul.f32 %v674, 0.9216105
        %v677 = vadd.f32 %v586, %v675
        %v678 = vadd.f32 %v587, %v676
        %v679 = vadd.f32 %v671, 1e-06
        %v680 = vadd.f32 %v672, 1e-06
        %v681 = vlog2.pop %v679
        %v682 = vmul.f32 %v681, 0.6931472
        %v683 = vlog2.pop %v680
        %v684 = vmul.f32 %v683, 0.6931472
        %v685 = vmul.f32 %v682, 0.8
        %v686 = vmul.f32 %v684, 0.8
        %v687 = vmul.f32 %v685, 1.442695
        %v688 = vpow.pop %v687
        %v689 = vmul.f32 %v686, 1.442695
        %v690 = vpow.pop %v689
        %v691 = vmul.f32 %v664, %v688
        %v692 = vmul.f32 %v666, %v690
        %v693 = vadd.f32 %v602, %v691
        %v694 = vadd.f32 %v603, %v692
        %695 = vrot.lane.b32.xlu0 %v162, 112
        %v696 = vpop.permute.xlu0 %695
        %697 = vrot.lane.b32.xlu0 %v236, 112
        %v698 = vpop.permute.xlu0 %697
        %699 = vrot.lane.b32.xlu0 %v163, 112
        %v700 = vpop.permute.xlu0 %699
        %vm701 = vcmask 916480
        %v702 = vsel %vm701, %v696, %v698
        %v703 = vsel %vm701, %v698, %v700
        %v706 = vsel %vm233, %v702, 0.0
        %v707 = vsel %vm234, %v703, 0.0
        %708 = vrot.lane.b32.xlu0 %v164, 112
        %v709 = vpop.permute.xlu0 %708
        %710 = vrot.lane.b32.xlu0 %v241, 112
        %v711 = vpop.permute.xlu0 %710
        %712 = vrot.lane.b32.xlu0 %v165, 112
        %v713 = vpop.permute.xlu0 %712
        %v714 = vsel %vm701, %v709, %v711
        %v715 = vsel %vm701, %v711, %v713
        %v718 = vsel %vm233, %v714, 0.0
        %v719 = vsel %vm234, %v715, 0.0
        %v720 = vsub.f32 %v706, %v253
        %v721 = vsub.f32 %v707, %v254
        %v722 = vand.u32 2147483647, %v720
        %v723 = vand.u32 2147483647, %v721
        %v724 = vadd.f32 %v637, %v722
        %v725 = vadd.f32 %v638, %v723
        %v726 = vsub.f32 %v718, %v270
        %v727 = vsub.f32 %v719, %v271
        %v728 = vand.u32 2147483647, %v726
        %v729 = vand.u32 2147483647, %v727
        %v730 = vadd.f32 %v643, %v728
        %v731 = vadd.f32 %v644, %v729
        %v732 = vmul.f32 %v720, %v720
        %v733 = vmul.f32 %v721, %v721
        %v734 = vsel %vm282, %v732, 0.0
        %v735 = vrot.slane %v734, 4
        %v736 = vadd.f32 %v734, %v735
        %v737 = vrot.slane %v736, 2
        %v738 = vadd.f32 %v736, %v737
        %v739 = vrot.slane %v738, 1
        %v740 = vadd.f32 %v738, %v739
        %v741 = vsel %vm282, %v733, 0.0
        %v742 = vrot.slane %v741, 4
        %v743 = vadd.f32 %v741, %v742
        %v744 = vrot.slane %v743, 2
        %v745 = vadd.f32 %v743, %v744
        %v746 = vrot.slane %v745, 1
        %v747 = vadd.f32 %v745, %v746
        %v748 = vmul.f32 %v740, -50.0
        %v749 = vmul.f32 %v747, -50.0
        %v750 = vmul.f32 %v748, 1.442695
        %v751 = vpow.pop %v750
        %v752 = vmul.f32 %v749, 1.442695
        %v753 = vpow.pop %v752
        %vm754 = vcmp.gt.f32.partialorder %v718, 0.0
        %vm755 = vcmp.gt.f32.partialorder %v719, 0.0
        %v756 = vsel %vm754, %v726, 0.0
        %v757 = vsel %vm755, %v727, 0.0
        %v758 = vand.u32 2147483647, %v756
        %v759 = vand.u32 2147483647, %v757
        %v760 = vmul.f32 %v758, %v758
        %v761 = vmul.f32 %v759, %v759
        %v762 = vmul.f32 %v760, 0.95025927
        %v763 = vmul.f32 %v761, 0.95025927
        %v764 = vadd.f32 %v677, %v762
        %v765 = vadd.f32 %v678, %v763
        %v766 = vadd.f32 %v758, 1e-06
        %v767 = vadd.f32 %v759, 1e-06
        %v768 = vlog2.pop %v766
        %v769 = vmul.f32 %v768, 0.6931472
        %v770 = vlog2.pop %v767
        %v771 = vmul.f32 %v770, 0.6931472
        %v772 = vmul.f32 %v769, 0.8
        %v773 = vmul.f32 %v771, 0.8
        %v774 = vmul.f32 %v772, 1.442695
        %v775 = vpow.pop %v774
        %v776 = vmul.f32 %v773, 1.442695
        %v777 = vpow.pop %v776
        %v778 = vmul.f32 %v751, %v775
        %v779 = vmul.f32 %v753, %v777
        %v780 = vadd.f32 %v693, %v778
        %v781 = vadd.f32 %v694, %v779
        %782 = vrot.lane.b32.xlu0 %v162, 111
        %v783 = vpop.permute.xlu0 %782
        %784 = vrot.lane.b32.xlu0 %v236, 111
        %v785 = vpop.permute.xlu0 %784
        %786 = vrot.lane.b32.xlu0 %v163, 111
        %v787 = vpop.permute.xlu0 %786
        %vm788 = vcmask 908288
        %v789 = vsel %vm788, %v783, %v785
        %v790 = vsel %vm788, %v785, %v787
        %v793 = vsel %vm333, %v789, 0.0
        %v794 = vsel %vm334, %v790, 0.0
        %795 = vrot.lane.b32.xlu0 %v164, 111
        %v796 = vpop.permute.xlu0 %795
        %797 = vrot.lane.b32.xlu0 %v241, 111
        %v798 = vpop.permute.xlu0 %797
        %799 = vrot.lane.b32.xlu0 %v165, 111
        %v800 = vpop.permute.xlu0 %799
        %v801 = vsel %vm788, %v796, %v798
        %v802 = vsel %vm788, %v798, %v800
        %v805 = vsel %vm333, %v801, 0.0
        %v806 = vsel %vm334, %v802, 0.0
        %v807 = vsub.f32 %v793, %v253
        %v808 = vsub.f32 %v794, %v254
        %v809 = vand.u32 2147483647, %v807
        %v810 = vand.u32 2147483647, %v808
        %v811 = vadd.f32 %v724, %v809
        %v812 = vadd.f32 %v725, %v810
        %v813 = vsub.f32 %v805, %v270
        %v814 = vsub.f32 %v806, %v271
        %v815 = vand.u32 2147483647, %v813
        %v816 = vand.u32 2147483647, %v814
        %v817 = vadd.f32 %v730, %v815
        %v818 = vadd.f32 %v731, %v816
        %v819 = vmul.f32 %v807, %v807
        %v820 = vmul.f32 %v808, %v808
        %v821 = vsel %vm282, %v819, 0.0
        %v822 = vrot.slane %v821, 4
        %v823 = vadd.f32 %v821, %v822
        %v824 = vrot.slane %v823, 2
        %v825 = vadd.f32 %v823, %v824
        %v826 = vrot.slane %v825, 1
        %v827 = vadd.f32 %v825, %v826
        %v828 = vsel %vm282, %v820, 0.0
        %v829 = vrot.slane %v828, 4
        %v830 = vadd.f32 %v828, %v829
        %v831 = vrot.slane %v830, 2
        %v832 = vadd.f32 %v830, %v831
        %v833 = vrot.slane %v832, 1
        %v834 = vadd.f32 %v832, %v833
        %v835 = vmul.f32 %v827, -50.0
        %v836 = vmul.f32 %v834, -50.0
        %v837 = vmul.f32 %v835, 1.442695
        %v838 = vpow.pop %v837
        %v839 = vmul.f32 %v836, 1.442695
        %v840 = vpow.pop %v839
        %vm841 = vcmp.gt.f32.partialorder %v805, 0.0
        %vm842 = vcmp.gt.f32.partialorder %v806, 0.0
        %v843 = vsel %vm841, %v813, 0.0
        %v844 = vsel %vm842, %v814, 0.0
        %v845 = vand.u32 2147483647, %v843
        %v846 = vand.u32 2147483647, %v844
        %v847 = vmul.f32 %v845, %v845
        %v848 = vmul.f32 %v846, %v846
        %v849 = vmul.f32 %v847, 0.9797987
        %v850 = vmul.f32 %v848, 0.9797987
        %v851 = vadd.f32 %v764, %v849
        %v852 = vadd.f32 %v765, %v850
        %v853 = vadd.f32 %v845, 1e-06
        %v854 = vadd.f32 %v846, 1e-06
        %v855 = vlog2.pop %v853
        %v856 = vmul.f32 %v855, 0.6931472
        %v857 = vlog2.pop %v854
        %v858 = vmul.f32 %v857, 0.6931472
        %v859 = vmul.f32 %v856, 0.8
        %v860 = vmul.f32 %v858, 0.8
        %v861 = vmul.f32 %v859, 1.442695
        %v862 = vpow.pop %v861
        %v863 = vmul.f32 %v860, 1.442695
        %v864 = vpow.pop %v863
        %v865 = vmul.f32 %v838, %v862
        %v866 = vmul.f32 %v840, %v864
        %v867 = vadd.f32 %v780, %v865
        %v868 = vadd.f32 %v781, %v866
        %869 = vrot.lane.b32.xlu0 %v162, 110
        %v870 = vpop.permute.xlu0 %869
        %871 = vrot.lane.b32.xlu0 %v236, 110
        %v872 = vpop.permute.xlu0 %871
        %873 = vrot.lane.b32.xlu0 %v163, 110
        %v874 = vpop.permute.xlu0 %873
        %vm875 = vcmask 900096
        %v876 = vsel %vm875, %v870, %v872
        %v877 = vsel %vm875, %v872, %v874
        %v880 = vsel %vm424, %v876, 0.0
        %v881 = vsel %vm425, %v877, 0.0
        %882 = vrot.lane.b32.xlu0 %v164, 110
        %v883 = vpop.permute.xlu0 %882
        %884 = vrot.lane.b32.xlu0 %v241, 110
        %v885 = vpop.permute.xlu0 %884
        %886 = vrot.lane.b32.xlu0 %v165, 110
        %v887 = vpop.permute.xlu0 %886
        %v888 = vsel %vm875, %v883, %v885
        %v889 = vsel %vm875, %v885, %v887
        %v892 = vsel %vm424, %v888, 0.0
        %v893 = vsel %vm425, %v889, 0.0
        %v894 = vsub.f32 %v880, %v253
        %v895 = vsub.f32 %v881, %v254
        %v896 = vand.u32 2147483647, %v894
        %v897 = vand.u32 2147483647, %v895
        %v898 = vadd.f32 %v811, %v896
        %v899 = vadd.f32 %v812, %v897
        %v900 = vsub.f32 %v892, %v270
        %v901 = vsub.f32 %v893, %v271
        %v902 = vand.u32 2147483647, %v900
        %v903 = vand.u32 2147483647, %v901
        %v904 = vadd.f32 %v817, %v902
        %v905 = vadd.f32 %v818, %v903
        %v906 = vmul.f32 %v894, %v894
        %v907 = vmul.f32 %v895, %v895
        %v908 = vsel %vm282, %v906, 0.0
        %v909 = vrot.slane %v908, 4
        %v910 = vadd.f32 %v908, %v909
        %v911 = vrot.slane %v910, 2
        %v912 = vadd.f32 %v910, %v911
        %v913 = vrot.slane %v912, 1
        %v914 = vadd.f32 %v912, %v913
        %v915 = vsel %vm282, %v907, 0.0
        %v916 = vrot.slane %v915, 4
        %v917 = vadd.f32 %v915, %v916
        %v918 = vrot.slane %v917, 2
        %v919 = vadd.f32 %v917, %v918
        %v920 = vrot.slane %v919, 1
        %v921 = vadd.f32 %v919, %v920
        %v922 = vmul.f32 %v914, -50.0
        %v923 = vmul.f32 %v921, -50.0
        %v924 = vmul.f32 %v922, 1.442695
        %v925 = vpow.pop %v924
        %v926 = vmul.f32 %v923, 1.442695
        %v927 = vpow.pop %v926
        %vm928 = vcmp.gt.f32.partialorder %v892, 0.0
        %vm929 = vcmp.gt.f32.partialorder %v893, 0.0
        %v930 = vsel %vm928, %v900, 0.0
        %v931 = vsel %vm929, %v901, 0.0
        %v932 = vand.u32 2147483647, %v930
        %v933 = vand.u32 2147483647, %v931
        %v934 = vmul.f32 %v932, %v932
        %v935 = vmul.f32 %v933, %v933
        %v936 = vmul.f32 %v934, 0.9898478
        %v937 = vmul.f32 %v935, 0.9898478
        %v938 = vadd.f32 %v851, %v936
        %v939 = vadd.f32 %v852, %v937
        %v940 = vadd.f32 %v932, 1e-06
        %v941 = vadd.f32 %v933, 1e-06
        %v942 = vlog2.pop %v940
        %v943 = vmul.f32 %v942, 0.6931472
        %v944 = vlog2.pop %v941
        %v945 = vmul.f32 %v944, 0.6931472
        %v946 = vmul.f32 %v943, 0.8
        %v947 = vmul.f32 %v945, 0.8
        %v948 = vmul.f32 %v946, 1.442695
        %v949 = vpow.pop %v948
        %v950 = vmul.f32 %v947, 1.442695
        %v951 = vpow.pop %v950
        %v952 = vmul.f32 %v925, %v949
        %v953 = vmul.f32 %v927, %v951
        %v954 = vadd.f32 %v867, %v952
        %v955 = vadd.f32 %v868, %v953
        %956 = vrot.lane.b32.xlu0 %v162, 109
        %v957 = vpop.permute.xlu0 %956
        %958 = vrot.lane.b32.xlu0 %v236, 109
        %v959 = vpop.permute.xlu0 %958
        %960 = vrot.lane.b32.xlu0 %v163, 109
        %v961 = vpop.permute.xlu0 %960
        %vm962 = vcmask 891904
        %v963 = vsel %vm962, %v957, %v959
        %v964 = vsel %vm962, %v959, %v961
        %v967 = vsel %vm515, %v963, 0.0
        %v968 = vsel %vm516, %v964, 0.0
        %969 = vrot.lane.b32.xlu0 %v164, 109
        %v970 = vpop.permute.xlu0 %969
        %971 = vrot.lane.b32.xlu0 %v241, 109
        %v972 = vpop.permute.xlu0 %971
        %973 = vrot.lane.b32.xlu0 %v165, 109
        %v974 = vpop.permute.xlu0 %973
        %v975 = vsel %vm962, %v970, %v972
        %v976 = vsel %vm962, %v972, %v974
        %v979 = vsel %vm515, %v975, 0.0
        %v980 = vsel %vm516, %v976, 0.0
        %v981 = vsub.f32 %v967, %v253
        %v982 = vsub.f32 %v968, %v254
        %v983 = vand.u32 2147483647, %v981
        %v984 = vand.u32 2147483647, %v982
        %v985 = vadd.f32 %v898, %v983
        %v986 = vadd.f32 %v899, %v984
        %v987 = vsub.f32 %v979, %v270
        %v988 = vsub.f32 %v980, %v271
        %v989 = vand.u32 2147483647, %v987
        %v990 = vand.u32 2147483647, %v988
        %v991 = vadd.f32 %v904, %v989
        %v992 = vadd.f32 %v905, %v990
        %v993 = vmul.f32 %v981, %v981
        %v994 = vmul.f32 %v982, %v982
        %v995 = vsel %vm282, %v993, 0.0
        %v996 = vrot.slane %v995, 4
        %v997 = vadd.f32 %v995, %v996
        %v998 = vrot.slane %v997, 2
        %v999 = vadd.f32 %v997, %v998
        %v1000 = vrot.slane %v999, 1
        %v1001 = vadd.f32 %v999, %v1000
        %v1002 = vsel %vm282, %v994, 0.0
        %v1003 = vrot.slane %v1002, 4
        %v1004 = vadd.f32 %v1002, %v1003
        %v1005 = vrot.slane %v1004, 2
        %v1006 = vadd.f32 %v1004, %v1005
        %v1007 = vrot.slane %v1006, 1
        %v1008 = vadd.f32 %v1006, %v1007
        %v1009 = vmul.f32 %v1001, -50.0
        %v1010 = vmul.f32 %v1008, -50.0
        %v1011 = vmul.f32 %v1009, 1.442695
        %v1012 = vpow.pop %v1011
        %v1013 = vmul.f32 %v1010, 1.442695
        %v1014 = vpow.pop %v1013
        %vm1015 = vcmp.gt.f32.partialorder %v979, 0.0
        %vm1016 = vcmp.gt.f32.partialorder %v980, 0.0
        %v1017 = vsel %vm1015, %v987, 0.0
        %v1018 = vsel %vm1016, %v988, 0.0
        %v1019 = vand.u32 2147483647, %v1017
        %v1020 = vand.u32 2147483647, %v1018
        %v1021 = vmul.f32 %v1019, %v1019
        %v1022 = vmul.f32 %v1020, %v1020
        %v1023 = vmul.f32 %v1021, 0.9797987
        %v1024 = vmul.f32 %v1022, 0.9797987
        %v1025 = vadd.f32 %v938, %v1023
        %v1026 = vadd.f32 %v939, %v1024
        %v1027 = vadd.f32 %v1019, 1e-06
        %v1028 = vadd.f32 %v1020, 1e-06
        %v1029 = vlog2.pop %v1027
        %v1030 = vmul.f32 %v1029, 0.6931472
        %v1031 = vlog2.pop %v1028
        %v1032 = vmul.f32 %v1031, 0.6931472
        %v1033 = vmul.f32 %v1030, 0.8
        %v1034 = vmul.f32 %v1032, 0.8
        %v1035 = vmul.f32 %v1033, 1.442695
        %v1036 = vpow.pop %v1035
        %v1037 = vmul.f32 %v1034, 1.442695
        %v1038 = vpow.pop %v1037
        %v1039 = vmul.f32 %v1012, %v1036
        %v1040 = vmul.f32 %v1014, %v1038
        %v1041 = vadd.f32 %v954, %v1039
        %v1042 = vadd.f32 %v955, %v1040
        %1043 = vrot.lane.b32.xlu0 %v162, 108
        %v1044 = vpop.permute.xlu0 %1043
        %1045 = vrot.lane.b32.xlu0 %v236, 108
        %v1046 = vpop.permute.xlu0 %1045
        %1047 = vrot.lane.b32.xlu0 %v163, 108
        %v1048 = vpop.permute.xlu0 %1047
        %vm1049 = vcmask 883712
        %v1050 = vsel %vm1049, %v1044, %v1046
        %v1051 = vsel %vm1049, %v1046, %v1048
        %v1054 = vsel %vm606, %v1050, 0.0
        %v1055 = vsel %vm607, %v1051, 0.0
        %1056 = vrot.lane.b32.xlu0 %v164, 108
        %v1057 = vpop.permute.xlu0 %1056
        %1058 = vrot.lane.b32.xlu0 %v241, 108
        %v1059 = vpop.permute.xlu0 %1058
        %1060 = vrot.lane.b32.xlu0 %v165, 108
        %v1061 = vpop.permute.xlu0 %1060
        %v1062 = vsel %vm1049, %v1057, %v1059
        %v1063 = vsel %vm1049, %v1059, %v1061
        %v1066 = vsel %vm606, %v1062, 0.0
        %v1067 = vsel %vm607, %v1063, 0.0
        %v1068 = vsub.f32 %v1054, %v253
        %v1069 = vsub.f32 %v1055, %v254
        %v1070 = vand.u32 2147483647, %v1068
        %v1071 = vand.u32 2147483647, %v1069
        %v1072 = vadd.f32 %v985, %v1070
        %v1073 = vadd.f32 %v986, %v1071
        %v1074 = vsub.f32 %v1066, %v270
        %v1075 = vsub.f32 %v1067, %v271
        %v1076 = vand.u32 2147483647, %v1074
        %v1077 = vand.u32 2147483647, %v1075
        %v1078 = vadd.f32 %v991, %v1076
        %v1079 = vadd.f32 %v992, %v1077
        %v1080 = vmul.f32 %v1068, %v1068
        %v1081 = vmul.f32 %v1069, %v1069
        %v1082 = vsel %vm282, %v1080, 0.0
        %v1083 = vrot.slane %v1082, 4
        %v1084 = vadd.f32 %v1082, %v1083
        %v1085 = vrot.slane %v1084, 2
        %v1086 = vadd.f32 %v1084, %v1085
        %v1087 = vrot.slane %v1086, 1
        %v1088 = vadd.f32 %v1086, %v1087
        %v1089 = vsel %vm282, %v1081, 0.0
        %v1090 = vrot.slane %v1089, 4
        %v1091 = vadd.f32 %v1089, %v1090
        %v1092 = vrot.slane %v1091, 2
        %v1093 = vadd.f32 %v1091, %v1092
        %v1094 = vrot.slane %v1093, 1
        %v1095 = vadd.f32 %v1093, %v1094
        %v1096 = vmul.f32 %v1088, -50.0
        %v1097 = vmul.f32 %v1095, -50.0
        %v1098 = vmul.f32 %v1096, 1.442695
        %v1099 = vpow.pop %v1098
        %v1100 = vmul.f32 %v1097, 1.442695
        %v1101 = vpow.pop %v1100
        %vm1102 = vcmp.gt.f32.partialorder %v1066, 0.0
        %vm1103 = vcmp.gt.f32.partialorder %v1067, 0.0
        %v1104 = vsel %vm1102, %v1074, 0.0
        %v1105 = vsel %vm1103, %v1075, 0.0
        %v1106 = vand.u32 2147483647, %v1104
        %v1107 = vand.u32 2147483647, %v1105
        %v1108 = vmul.f32 %v1106, %v1106
        %v1109 = vmul.f32 %v1107, %v1107
        %v1110 = vmul.f32 %v1108, 0.95025927
        %v1111 = vmul.f32 %v1109, 0.95025927
        %v1112 = vadd.f32 %v1025, %v1110
        %v1113 = vadd.f32 %v1026, %v1111
        %v1114 = vadd.f32 %v1106, 1e-06
        %v1115 = vadd.f32 %v1107, 1e-06
        %v1116 = vlog2.pop %v1114
        %v1117 = vmul.f32 %v1116, 0.6931472
        %v1118 = vlog2.pop %v1115
        %v1119 = vmul.f32 %v1118, 0.6931472
        %v1120 = vmul.f32 %v1117, 0.8
        %v1121 = vmul.f32 %v1119, 0.8
        %v1122 = vmul.f32 %v1120, 1.442695
        %v1123 = vpow.pop %v1122
        %v1124 = vmul.f32 %v1121, 1.442695
        %v1125 = vpow.pop %v1124
        %v1126 = vmul.f32 %v1099, %v1123
        %v1127 = vmul.f32 %v1101, %v1125
        %v1128 = vadd.f32 %v1041, %v1126
        %v1129 = vadd.f32 %v1042, %v1127
        %1130 = vrot.lane.b32.xlu0 %v162, 96
        %v1131 = vpop.permute.xlu0 %1130
        %1132 = vrot.lane.b32.xlu0 %v236, 96
        %v1133 = vpop.permute.xlu0 %1132
        %1134 = vrot.lane.b32.xlu0 %v163, 96
        %v1135 = vpop.permute.xlu0 %1134
        %vm1136 = vcmask 785408
        %v1137 = vsel %vm1136, %v1131, %v1133
        %v1138 = vsel %vm1136, %v1133, %v1135
        %v1141 = vsel %vm233, %v1137, 0.0
        %v1142 = vsel %vm234, %v1138, 0.0
        %1143 = vrot.lane.b32.xlu0 %v164, 96
        %v1144 = vpop.permute.xlu0 %1143
        %1145 = vrot.lane.b32.xlu0 %v241, 96
        %v1146 = vpop.permute.xlu0 %1145
        %1147 = vrot.lane.b32.xlu0 %v165, 96
        %v1148 = vpop.permute.xlu0 %1147
        %v1149 = vsel %vm1136, %v1144, %v1146
        %v1150 = vsel %vm1136, %v1146, %v1148
        %v1153 = vsel %vm233, %v1149, 0.0
        %v1154 = vsel %vm234, %v1150, 0.0
        %v1155 = vsub.f32 %v1141, %v253
        %v1156 = vsub.f32 %v1142, %v254
        %v1157 = vand.u32 2147483647, %v1155
        %v1158 = vand.u32 2147483647, %v1156
        %v1159 = vadd.f32 %v1072, %v1157
        %v1160 = vadd.f32 %v1073, %v1158
        %v1161 = vsub.f32 %v1153, %v270
        %v1162 = vsub.f32 %v1154, %v271
        %v1163 = vand.u32 2147483647, %v1161
        %v1164 = vand.u32 2147483647, %v1162
        %v1165 = vadd.f32 %v1078, %v1163
        %v1166 = vadd.f32 %v1079, %v1164
        %v1167 = vmul.f32 %v1155, %v1155
        %v1168 = vmul.f32 %v1156, %v1156
        %v1169 = vsel %vm282, %v1167, 0.0
        %v1170 = vrot.slane %v1169, 4
        %v1171 = vadd.f32 %v1169, %v1170
        %v1172 = vrot.slane %v1171, 2
        %v1173 = vadd.f32 %v1171, %v1172
        %v1174 = vrot.slane %v1173, 1
        %v1175 = vadd.f32 %v1173, %v1174
        %v1176 = vsel %vm282, %v1168, 0.0
        %v1177 = vrot.slane %v1176, 4
        %v1178 = vadd.f32 %v1176, %v1177
        %v1179 = vrot.slane %v1178, 2
        %v1180 = vadd.f32 %v1178, %v1179
        %v1181 = vrot.slane %v1180, 1
        %v1182 = vadd.f32 %v1180, %v1181
        %v1183 = vmul.f32 %v1175, -50.0
        %v1184 = vmul.f32 %v1182, -50.0
        %v1185 = vmul.f32 %v1183, 1.442695
        %v1186 = vpow.pop %v1185
        %v1187 = vmul.f32 %v1184, 1.442695
        %v1188 = vpow.pop %v1187
        %vm1189 = vcmp.gt.f32.partialorder %v1153, 0.0
        %vm1190 = vcmp.gt.f32.partialorder %v1154, 0.0
        %v1191 = vsel %vm1189, %v1161, 0.0
        %v1192 = vsel %vm1190, %v1162, 0.0
        %v1193 = vand.u32 2147483647, %v1191
        %v1194 = vand.u32 2147483647, %v1192
        %v1195 = vmul.f32 %v1193, %v1193
        %v1196 = vmul.f32 %v1194, %v1194
        %v1197 = vmul.f32 %v1195, 0.96000546
        %v1198 = vmul.f32 %v1196, 0.96000546
        %v1199 = vadd.f32 %v1112, %v1197
        %v1200 = vadd.f32 %v1113, %v1198
        %v1201 = vadd.f32 %v1193, 1e-06
        %v1202 = vadd.f32 %v1194, 1e-06
        %v1203 = vlog2.pop %v1201
        %v1204 = vmul.f32 %v1203, 0.6931472
        %v1205 = vlog2.pop %v1202
        %v1206 = vmul.f32 %v1205, 0.6931472
        %v1207 = vmul.f32 %v1204, 0.8
        %v1208 = vmul.f32 %v1206, 0.8
        %v1209 = vmul.f32 %v1207, 1.442695
        %v1210 = vpow.pop %v1209
        %v1211 = vmul.f32 %v1208, 1.442695
        %v1212 = vpow.pop %v1211
        %v1213 = vmul.f32 %v1186, %v1210
        %v1214 = vmul.f32 %v1188, %v1212
        %v1215 = vadd.f32 %v1128, %v1213
        %v1216 = vadd.f32 %v1129, %v1214
        %1217 = vrot.lane.b32.xlu0 %v162, 95
        %v1218 = vpop.permute.xlu0 %1217
        %1219 = vrot.lane.b32.xlu0 %v236, 95
        %v1220 = vpop.permute.xlu0 %1219
        %1221 = vrot.lane.b32.xlu0 %v163, 95
        %v1222 = vpop.permute.xlu0 %1221
        %vm1223 = vcmask 777216
        %v1224 = vsel %vm1223, %v1218, %v1220
        %v1225 = vsel %vm1223, %v1220, %v1222
        %v1228 = vsel %vm333, %v1224, 0.0
        %v1229 = vsel %vm334, %v1225, 0.0
        %1230 = vrot.lane.b32.xlu0 %v164, 95
        %v1231 = vpop.permute.xlu0 %1230
        %1232 = vrot.lane.b32.xlu0 %v241, 95
        %v1233 = vpop.permute.xlu0 %1232
        %1234 = vrot.lane.b32.xlu0 %v165, 95
        %v1235 = vpop.permute.xlu0 %1234
        %v1236 = vsel %vm1223, %v1231, %v1233
        %v1237 = vsel %vm1223, %v1233, %v1235
        %v1240 = vsel %vm333, %v1236, 0.0
        %v1241 = vsel %vm334, %v1237, 0.0
        %v1242 = vsub.f32 %v1228, %v253
        %v1243 = vsub.f32 %v1229, %v254
        %v1244 = vand.u32 2147483647, %v1242
        %v1245 = vand.u32 2147483647, %v1243
        %v1246 = vadd.f32 %v1159, %v1244
        %v1247 = vadd.f32 %v1160, %v1245
        %v1248 = vsub.f32 %v1240, %v270
        %v1249 = vsub.f32 %v1241, %v271
        %v1250 = vand.u32 2147483647, %v1248
        %v1251 = vand.u32 2147483647, %v1249
        %v1252 = vadd.f32 %v1165, %v1250
        %v1253 = vadd.f32 %v1166, %v1251
        %v1254 = vmul.f32 %v1242, %v1242
        %v1255 = vmul.f32 %v1243, %v1243
        %v1256 = vsel %vm282, %v1254, 0.0
        %v1257 = vrot.slane %v1256, 4
        %v1258 = vadd.f32 %v1256, %v1257
        %v1259 = vrot.slane %v1258, 2
        %v1260 = vadd.f32 %v1258, %v1259
        %v1261 = vrot.slane %v1260, 1
        %v1262 = vadd.f32 %v1260, %v1261
        %v1263 = vsel %vm282, %v1255, 0.0
        %v1264 = vrot.slane %v1263, 4
        %v1265 = vadd.f32 %v1263, %v1264
        %v1266 = vrot.slane %v1265, 2
        %v1267 = vadd.f32 %v1265, %v1266
        %v1268 = vrot.slane %v1267, 1
        %v1269 = vadd.f32 %v1267, %v1268
        %v1270 = vmul.f32 %v1262, -50.0
        %v1271 = vmul.f32 %v1269, -50.0
        %v1272 = vmul.f32 %v1270, 1.442695
        %v1273 = vpow.pop %v1272
        %v1274 = vmul.f32 %v1271, 1.442695
        %v1275 = vpow.pop %v1274
        %vm1276 = vcmp.gt.f32.partialorder %v1240, 0.0
        %vm1277 = vcmp.gt.f32.partialorder %v1241, 0.0
        %v1278 = vsel %vm1276, %v1248, 0.0
        %v1279 = vsel %vm1277, %v1249, 0.0
        %v1280 = vand.u32 2147483647, %v1278
        %v1281 = vand.u32 2147483647, %v1279
        %v1282 = vmul.f32 %v1280, %v1280
        %v1283 = vmul.f32 %v1281, %v1281
        %v1284 = vmul.f32 %v1282, 0.9898478
        %v1285 = vmul.f32 %v1283, 0.9898478
        %v1286 = vadd.f32 %v1199, %v1284
        %v1287 = vadd.f32 %v1200, %v1285
        %v1288 = vadd.f32 %v1280, 1e-06
        %v1289 = vadd.f32 %v1281, 1e-06
        %v1290 = vlog2.pop %v1288
        %v1291 = vmul.f32 %v1290, 0.6931472
        %v1292 = vlog2.pop %v1289
        %v1293 = vmul.f32 %v1292, 0.6931472
        %v1294 = vmul.f32 %v1291, 0.8
        %v1295 = vmul.f32 %v1293, 0.8
        %v1296 = vmul.f32 %v1294, 1.442695
        %v1297 = vpow.pop %v1296
        %v1298 = vmul.f32 %v1295, 1.442695
        %v1299 = vpow.pop %v1298
        %v1300 = vmul.f32 %v1273, %v1297
        %v1301 = vmul.f32 %v1275, %v1299
        %v1302 = vadd.f32 %v1215, %v1300
        %v1303 = vadd.f32 %v1216, %v1301
        %v1304 = vsel %vm424, %v253, 0.0
        %v1305 = vsel %vm425, %v254, 0.0
        %v1306 = vsel %vm424, %v270, 0.0
        %v1307 = vsel %vm425, %v271, 0.0
        %v1308 = vsub.f32 %v1304, %v253
        %v1309 = vsub.f32 %v1305, %v254
        %v1310 = vand.u32 2147483647, %v1308
        %v1311 = vand.u32 2147483647, %v1309
        %v1312 = vadd.f32 %v1246, %v1310
        %v1313 = vadd.f32 %v1247, %v1311
        %v1314 = vsub.f32 %v1306, %v270
        %v1315 = vsub.f32 %v1307, %v271
        %v1316 = vand.u32 2147483647, %v1314
        %v1317 = vand.u32 2147483647, %v1315
        %v1318 = vadd.f32 %v1252, %v1316
        %v1319 = vadd.f32 %v1253, %v1317
        %v1320 = vmul.f32 %v1308, %v1308
        %v1321 = vmul.f32 %v1309, %v1309
        %v1322 = vsel %vm282, %v1320, 0.0
        %v1323 = vrot.slane %v1322, 4
        %v1324 = vadd.f32 %v1322, %v1323
        %v1325 = vrot.slane %v1324, 2
        %v1326 = vadd.f32 %v1324, %v1325
        %v1327 = vrot.slane %v1326, 1
        %v1328 = vadd.f32 %v1326, %v1327
        %v1329 = vsel %vm282, %v1321, 0.0
        %v1330 = vrot.slane %v1329, 4
        %v1331 = vadd.f32 %v1329, %v1330
        %v1332 = vrot.slane %v1331, 2
        %v1333 = vadd.f32 %v1331, %v1332
        %v1334 = vrot.slane %v1333, 1
        %v1335 = vadd.f32 %v1333, %v1334
        %v1336 = vmul.f32 %v1328, -50.0
        %v1337 = vmul.f32 %v1335, -50.0
        %v1338 = vmul.f32 %v1336, 1.442695
        %v1339 = vpow.pop %v1338
        %v1340 = vmul.f32 %v1337, 1.442695
        %v1341 = vpow.pop %v1340
        %vm1342 = vcmp.gt.f32.partialorder %v1306, 0.0
        %vm1343 = vcmp.gt.f32.partialorder %v1307, 0.0
        %v1344 = vsel %vm1342, %v1314, 0.0
        %v1345 = vsel %vm1343, %v1315, 0.0
        %v1346 = vand.u32 2147483647, %v1344
        %v1347 = vand.u32 2147483647, %v1345
        %v1348 = vmul.f32 %v1346, %v1346
        %v1349 = vmul.f32 %v1347, %v1347
        %v1350 = vadd.f32 %v1286, %v1348
        %v1351 = vadd.f32 %v1287, %v1349
        %v1352 = vadd.f32 %v1346, 1e-06
        %v1353 = vadd.f32 %v1347, 1e-06
        %v1354 = vlog2.pop %v1352
        %v1355 = vmul.f32 %v1354, 0.6931472
        %v1356 = vlog2.pop %v1353
        %v1357 = vmul.f32 %v1356, 0.6931472
        %v1358 = vmul.f32 %v1355, 0.8
        %v1359 = vmul.f32 %v1357, 0.8
        %v1360 = vmul.f32 %v1358, 1.442695
        %v1361 = vpow.pop %v1360
        %v1362 = vmul.f32 %v1359, 1.442695
        %v1363 = vpow.pop %v1362
        %v1364 = vmul.f32 %v1339, %v1361
        %v1365 = vmul.f32 %v1341, %v1363
        %v1366 = vadd.f32 %v1302, %v1364
        %v1367 = vadd.f32 %v1303, %v1365
        %1368 = vrot.lane.b32.xlu0 %v162, 93
        %v1369 = vpop.permute.xlu0 %1368
        %1370 = vrot.lane.b32.xlu0 %v236, 93
        %v1371 = vpop.permute.xlu0 %1370
        %1372 = vrot.lane.b32.xlu0 %v163, 93
        %v1373 = vpop.permute.xlu0 %1372
        %vm1374 = vcmask 760832
        %v1375 = vsel %vm1374, %v1369, %v1371
        %v1376 = vsel %vm1374, %v1371, %v1373
        %v1379 = vsel %vm515, %v1375, 0.0
        %v1380 = vsel %vm516, %v1376, 0.0
        %1381 = vrot.lane.b32.xlu0 %v164, 93
        %v1382 = vpop.permute.xlu0 %1381
        %1383 = vrot.lane.b32.xlu0 %v241, 93
        %v1384 = vpop.permute.xlu0 %1383
        %1385 = vrot.lane.b32.xlu0 %v165, 93
        %v1386 = vpop.permute.xlu0 %1385
        %v1387 = vsel %vm1374, %v1382, %v1384
        %v1388 = vsel %vm1374, %v1384, %v1386
        %v1391 = vsel %vm515, %v1387, 0.0
        %v1392 = vsel %vm516, %v1388, 0.0
        %v1393 = vsub.f32 %v1379, %v253
        %v1394 = vsub.f32 %v1380, %v254
        %v1395 = vand.u32 2147483647, %v1393
        %v1396 = vand.u32 2147483647, %v1394
        %v1397 = vadd.f32 %v1312, %v1395
        %v1398 = vadd.f32 %v1313, %v1396
        %v1399 = vsub.f32 %v1391, %v270
        %v1400 = vsub.f32 %v1392, %v271
        %v1401 = vand.u32 2147483647, %v1399
        %v1402 = vand.u32 2147483647, %v1400
        %v1403 = vadd.f32 %v1318, %v1401
        %v1404 = vadd.f32 %v1319, %v1402
        %v1405 = vmul.f32 %v1393, %v1393
        %v1406 = vmul.f32 %v1394, %v1394
        %v1407 = vsel %vm282, %v1405, 0.0
        %v1408 = vrot.slane %v1407, 4
        %v1409 = vadd.f32 %v1407, %v1408
        %v1410 = vrot.slane %v1409, 2
        %v1411 = vadd.f32 %v1409, %v1410
        %v1412 = vrot.slane %v1411, 1
        %v1413 = vadd.f32 %v1411, %v1412
        %v1414 = vsel %vm282, %v1406, 0.0
        %v1415 = vrot.slane %v1414, 4
        %v1416 = vadd.f32 %v1414, %v1415
        %v1417 = vrot.slane %v1416, 2
        %v1418 = vadd.f32 %v1416, %v1417
        %v1419 = vrot.slane %v1418, 1
        %v1420 = vadd.f32 %v1418, %v1419
        %v1421 = vmul.f32 %v1413, -50.0
        %v1422 = vmul.f32 %v1420, -50.0
        %v1423 = vmul.f32 %v1421, 1.442695
        %v1424 = vpow.pop %v1423
        %v1425 = vmul.f32 %v1422, 1.442695
        %v1426 = vpow.pop %v1425
        %vm1427 = vcmp.gt.f32.partialorder %v1391, 0.0
        %vm1428 = vcmp.gt.f32.partialorder %v1392, 0.0
        %v1429 = vsel %vm1427, %v1399, 0.0
        %v1430 = vsel %vm1428, %v1400, 0.0
        %v1431 = vand.u32 2147483647, %v1429
        %v1432 = vand.u32 2147483647, %v1430
        %v1433 = vmul.f32 %v1431, %v1431
        %v1434 = vmul.f32 %v1432, %v1432
        %v1435 = vmul.f32 %v1433, 0.9898478
        %v1436 = vmul.f32 %v1434, 0.9898478
        %v1437 = vadd.f32 %v1350, %v1435
        %v1438 = vadd.f32 %v1351, %v1436
        %v1439 = vadd.f32 %v1431, 1e-06
        %v1440 = vadd.f32 %v1432, 1e-06
        %v1441 = vlog2.pop %v1439
        %v1442 = vmul.f32 %v1441, 0.6931472
        %v1443 = vlog2.pop %v1440
        %v1444 = vmul.f32 %v1443, 0.6931472
        %v1445 = vmul.f32 %v1442, 0.8
        %v1446 = vmul.f32 %v1444, 0.8
        %v1447 = vmul.f32 %v1445, 1.442695
        %v1448 = vpow.pop %v1447
        %v1449 = vmul.f32 %v1446, 1.442695
        %v1450 = vpow.pop %v1449
        %v1451 = vmul.f32 %v1424, %v1448
        %v1452 = vmul.f32 %v1426, %v1450
        %v1453 = vadd.f32 %v1366, %v1451
        %v1454 = vadd.f32 %v1367, %v1452
        %1455 = vrot.lane.b32.xlu0 %v162, 92
        %v1456 = vpop.permute.xlu0 %1455
        %1457 = vrot.lane.b32.xlu0 %v236, 92
        %v1458 = vpop.permute.xlu0 %1457
        %1459 = vrot.lane.b32.xlu0 %v163, 92
        %v1460 = vpop.permute.xlu0 %1459
        %vm1461 = vcmask 752640
        %v1462 = vsel %vm1461, %v1456, %v1458
        %v1463 = vsel %vm1461, %v1458, %v1460
        %v1466 = vsel %vm606, %v1462, 0.0
        %v1467 = vsel %vm607, %v1463, 0.0
        %1468 = vrot.lane.b32.xlu0 %v164, 92
        %v1469 = vpop.permute.xlu0 %1468
        %1470 = vrot.lane.b32.xlu0 %v241, 92
        %v1471 = vpop.permute.xlu0 %1470
        %1472 = vrot.lane.b32.xlu0 %v165, 92
        %v1473 = vpop.permute.xlu0 %1472
        %v1474 = vsel %vm1461, %v1469, %v1471
        %v1475 = vsel %vm1461, %v1471, %v1473
        %v1478 = vsel %vm606, %v1474, 0.0
        %v1479 = vsel %vm607, %v1475, 0.0
        %v1480 = vsub.f32 %v1466, %v253
        %v1481 = vsub.f32 %v1467, %v254
        %v1482 = vand.u32 2147483647, %v1480
        %v1483 = vand.u32 2147483647, %v1481
        %v1484 = vadd.f32 %v1397, %v1482
        %v1485 = vadd.f32 %v1398, %v1483
        %v1486 = vsub.f32 %v1478, %v270
        %v1487 = vsub.f32 %v1479, %v271
        %v1488 = vand.u32 2147483647, %v1486
        %v1489 = vand.u32 2147483647, %v1487
        %v1490 = vadd.f32 %v1403, %v1488
        %v1491 = vadd.f32 %v1404, %v1489
        %v1492 = vmul.f32 %v1480, %v1480
        %v1493 = vmul.f32 %v1481, %v1481
        %v1494 = vsel %vm282, %v1492, 0.0
        %v1495 = vrot.slane %v1494, 4
        %v1496 = vadd.f32 %v1494, %v1495
        %v1497 = vrot.slane %v1496, 2
        %v1498 = vadd.f32 %v1496, %v1497
        %v1499 = vrot.slane %v1498, 1
        %v1500 = vadd.f32 %v1498, %v1499
        %v1501 = vsel %vm282, %v1493, 0.0
        %v1502 = vrot.slane %v1501, 4
        %v1503 = vadd.f32 %v1501, %v1502
        %v1504 = vrot.slane %v1503, 2
        %v1505 = vadd.f32 %v1503, %v1504
        %v1506 = vrot.slane %v1505, 1
        %v1507 = vadd.f32 %v1505, %v1506
        %v1508 = vmul.f32 %v1500, -50.0
        %v1509 = vmul.f32 %v1507, -50.0
        %v1510 = vmul.f32 %v1508, 1.442695
        %v1511 = vpow.pop %v1510
        %v1512 = vmul.f32 %v1509, 1.442695
        %v1513 = vpow.pop %v1512
        %vm1514 = vcmp.gt.f32.partialorder %v1478, 0.0
        %vm1515 = vcmp.gt.f32.partialorder %v1479, 0.0
        %v1516 = vsel %vm1514, %v1486, 0.0
        %v1517 = vsel %vm1515, %v1487, 0.0
        %v1518 = vand.u32 2147483647, %v1516
        %v1519 = vand.u32 2147483647, %v1517
        %v1520 = vmul.f32 %v1518, %v1518
        %v1521 = vmul.f32 %v1519, %v1519
        %v1522 = vmul.f32 %v1520, 0.96000546
        %v1523 = vmul.f32 %v1521, 0.96000546
        %v1524 = vadd.f32 %v1437, %v1522
        %v1525 = vadd.f32 %v1438, %v1523
        %v1526 = vadd.f32 %v1518, 1e-06
        %v1527 = vadd.f32 %v1519, 1e-06
        %v1528 = vlog2.pop %v1526
        %v1529 = vmul.f32 %v1528, 0.6931472
        %v1530 = vlog2.pop %v1527
        %v1531 = vmul.f32 %v1530, 0.6931472
        %v1532 = vmul.f32 %v1529, 0.8
        %v1533 = vmul.f32 %v1531, 0.8
        %v1534 = vmul.f32 %v1532, 1.442695
        %v1535 = vpow.pop %v1534
        %v1536 = vmul.f32 %v1533, 1.442695
        %v1537 = vpow.pop %v1536
        %v1538 = vmul.f32 %v1511, %v1535
        %v1539 = vmul.f32 %v1513, %v1537
        %v1540 = vadd.f32 %v1453, %v1538
        %v1541 = vadd.f32 %v1454, %v1539
        %1542 = vrot.lane.b32.xlu0 %v162, 80
        %v1543 = vpop.permute.xlu0 %1542
        %1544 = vrot.lane.b32.xlu0 %v236, 80
        %v1545 = vpop.permute.xlu0 %1544
        %1546 = vrot.lane.b32.xlu0 %v163, 80
        %v1547 = vpop.permute.xlu0 %1546
        %vm1548 = vcmask 654336
        %v1549 = vsel %vm1548, %v1543, %v1545
        %v1550 = vsel %vm1548, %v1545, %v1547
        %v1553 = vsel %vm233, %v1549, 0.0
        %v1554 = vsel %vm234, %v1550, 0.0
        %1555 = vrot.lane.b32.xlu0 %v164, 80
        %v1556 = vpop.permute.xlu0 %1555
        %1557 = vrot.lane.b32.xlu0 %v241, 80
        %v1558 = vpop.permute.xlu0 %1557
        %1559 = vrot.lane.b32.xlu0 %v165, 80
        %v1560 = vpop.permute.xlu0 %1559
        %v1561 = vsel %vm1548, %v1556, %v1558
        %v1562 = vsel %vm1548, %v1558, %v1560
        %v1565 = vsel %vm233, %v1561, 0.0
        %v1566 = vsel %vm234, %v1562, 0.0
        %v1567 = vsub.f32 %v1553, %v253
        %v1568 = vsub.f32 %v1554, %v254
        %v1569 = vand.u32 2147483647, %v1567
        %v1570 = vand.u32 2147483647, %v1568
        %v1571 = vadd.f32 %v1484, %v1569
        %v1572 = vadd.f32 %v1485, %v1570
        %v1573 = vsub.f32 %v1565, %v270
        %v1574 = vsub.f32 %v1566, %v271
        %v1575 = vand.u32 2147483647, %v1573
        %v1576 = vand.u32 2147483647, %v1574
        %v1577 = vadd.f32 %v1490, %v1575
        %v1578 = vadd.f32 %v1491, %v1576
        %v1579 = vmul.f32 %v1567, %v1567
        %v1580 = vmul.f32 %v1568, %v1568
        %v1581 = vsel %vm282, %v1579, 0.0
        %v1582 = vrot.slane %v1581, 4
        %v1583 = vadd.f32 %v1581, %v1582
        %v1584 = vrot.slane %v1583, 2
        %v1585 = vadd.f32 %v1583, %v1584
        %v1586 = vrot.slane %v1585, 1
        %v1587 = vadd.f32 %v1585, %v1586
        %v1588 = vsel %vm282, %v1580, 0.0
        %v1589 = vrot.slane %v1588, 4
        %v1590 = vadd.f32 %v1588, %v1589
        %v1591 = vrot.slane %v1590, 2
        %v1592 = vadd.f32 %v1590, %v1591
        %v1593 = vrot.slane %v1592, 1
        %v1594 = vadd.f32 %v1592, %v1593
        %v1595 = vmul.f32 %v1587, -50.0
        %v1596 = vmul.f32 %v1594, -50.0
        %v1597 = vmul.f32 %v1595, 1.442695
        %v1598 = vpow.pop %v1597
        %v1599 = vmul.f32 %v1596, 1.442695
        %v1600 = vpow.pop %v1599
        %vm1601 = vcmp.gt.f32.partialorder %v1565, 0.0
        %vm1602 = vcmp.gt.f32.partialorder %v1566, 0.0
        %v1603 = vsel %vm1601, %v1573, 0.0
        %v1604 = vsel %vm1602, %v1574, 0.0
        %v1605 = vand.u32 2147483647, %v1603
        %v1606 = vand.u32 2147483647, %v1604
        %v1607 = vmul.f32 %v1605, %v1605
        %v1608 = vmul.f32 %v1606, %v1606
        %v1609 = vmul.f32 %v1607, 0.95025927
        %v1610 = vmul.f32 %v1608, 0.95025927
        %v1611 = vadd.f32 %v1524, %v1609
        %v1612 = vadd.f32 %v1525, %v1610
        %v1613 = vadd.f32 %v1605, 1e-06
        %v1614 = vadd.f32 %v1606, 1e-06
        %v1615 = vlog2.pop %v1613
        %v1616 = vmul.f32 %v1615, 0.6931472
        %v1617 = vlog2.pop %v1614
        %v1618 = vmul.f32 %v1617, 0.6931472
        %v1619 = vmul.f32 %v1616, 0.8
        %v1620 = vmul.f32 %v1618, 0.8
        %v1621 = vmul.f32 %v1619, 1.442695
        %v1622 = vpow.pop %v1621
        %v1623 = vmul.f32 %v1620, 1.442695
        %v1624 = vpow.pop %v1623
        %v1625 = vmul.f32 %v1598, %v1622
        %v1626 = vmul.f32 %v1600, %v1624
        %v1627 = vadd.f32 %v1540, %v1625
        %v1628 = vadd.f32 %v1541, %v1626
        %1629 = vrot.lane.b32.xlu0 %v162, 79
        %v1630 = vpop.permute.xlu0 %1629
        %1631 = vrot.lane.b32.xlu0 %v236, 79
        %v1632 = vpop.permute.xlu0 %1631
        %1633 = vrot.lane.b32.xlu0 %v163, 79
        %v1634 = vpop.permute.xlu0 %1633
        %vm1635 = vcmask 646144
        %v1636 = vsel %vm1635, %v1630, %v1632
        %v1637 = vsel %vm1635, %v1632, %v1634
        %v1640 = vsel %vm333, %v1636, 0.0
        %v1641 = vsel %vm334, %v1637, 0.0
        %1642 = vrot.lane.b32.xlu0 %v164, 79
        %v1643 = vpop.permute.xlu0 %1642
        %1644 = vrot.lane.b32.xlu0 %v241, 79
        %v1645 = vpop.permute.xlu0 %1644
        %1646 = vrot.lane.b32.xlu0 %v165, 79
        %v1647 = vpop.permute.xlu0 %1646
        %v1648 = vsel %vm1635, %v1643, %v1645
        %v1649 = vsel %vm1635, %v1645, %v1647
        %v1652 = vsel %vm333, %v1648, 0.0
        %v1653 = vsel %vm334, %v1649, 0.0
        %v1654 = vsub.f32 %v1640, %v253
        %v1655 = vsub.f32 %v1641, %v254
        %v1656 = vand.u32 2147483647, %v1654
        %v1657 = vand.u32 2147483647, %v1655
        %v1658 = vadd.f32 %v1571, %v1656
        %v1659 = vadd.f32 %v1572, %v1657
        %v1660 = vsub.f32 %v1652, %v270
        %v1661 = vsub.f32 %v1653, %v271
        %v1662 = vand.u32 2147483647, %v1660
        %v1663 = vand.u32 2147483647, %v1661
        %v1664 = vadd.f32 %v1577, %v1662
        %v1665 = vadd.f32 %v1578, %v1663
        %v1666 = vmul.f32 %v1654, %v1654
        %v1667 = vmul.f32 %v1655, %v1655
        %v1668 = vsel %vm282, %v1666, 0.0
        %v1669 = vrot.slane %v1668, 4
        %v1670 = vadd.f32 %v1668, %v1669
        %v1671 = vrot.slane %v1670, 2
        %v1672 = vadd.f32 %v1670, %v1671
        %v1673 = vrot.slane %v1672, 1
        %v1674 = vadd.f32 %v1672, %v1673
        %v1675 = vsel %vm282, %v1667, 0.0
        %v1676 = vrot.slane %v1675, 4
        %v1677 = vadd.f32 %v1675, %v1676
        %v1678 = vrot.slane %v1677, 2
        %v1679 = vadd.f32 %v1677, %v1678
        %v1680 = vrot.slane %v1679, 1
        %v1681 = vadd.f32 %v1679, %v1680
        %v1682 = vmul.f32 %v1674, -50.0
        %v1683 = vmul.f32 %v1681, -50.0
        %v1684 = vmul.f32 %v1682, 1.442695
        %v1685 = vpow.pop %v1684
        %v1686 = vmul.f32 %v1683, 1.442695
        %v1687 = vpow.pop %v1686
        %vm1688 = vcmp.gt.f32.partialorder %v1652, 0.0
        %vm1689 = vcmp.gt.f32.partialorder %v1653, 0.0
        %v1690 = vsel %vm1688, %v1660, 0.0
        %v1691 = vsel %vm1689, %v1661, 0.0
        %v1692 = vand.u32 2147483647, %v1690
        %v1693 = vand.u32 2147483647, %v1691
        %v1694 = vmul.f32 %v1692, %v1692
        %v1695 = vmul.f32 %v1693, %v1693
        %v1696 = vmul.f32 %v1694, 0.9797987
        %v1697 = vmul.f32 %v1695, 0.9797987
        %v1698 = vadd.f32 %v1611, %v1696
        %v1699 = vadd.f32 %v1612, %v1697
        %v1700 = vadd.f32 %v1692, 1e-06
        %v1701 = vadd.f32 %v1693, 1e-06
        %v1702 = vlog2.pop %v1700
        %v1703 = vmul.f32 %v1702, 0.6931472
        %v1704 = vlog2.pop %v1701
        %v1705 = vmul.f32 %v1704, 0.6931472
        %v1706 = vmul.f32 %v1703, 0.8
        %v1707 = vmul.f32 %v1705, 0.8
        %v1708 = vmul.f32 %v1706, 1.442695
        %v1709 = vpow.pop %v1708
        %v1710 = vmul.f32 %v1707, 1.442695
        %v1711 = vpow.pop %v1710
        %v1712 = vmul.f32 %v1685, %v1709
        %v1713 = vmul.f32 %v1687, %v1711
        %v1714 = vadd.f32 %v1627, %v1712
        %v1715 = vadd.f32 %v1628, %v1713
        %1716 = vrot.lane.b32.xlu0 %v162, 78
        %v1717 = vpop.permute.xlu0 %1716
        %1718 = vrot.lane.b32.xlu0 %v236, 78
        %v1719 = vpop.permute.xlu0 %1718
        %1720 = vrot.lane.b32.xlu0 %v163, 78
        %v1721 = vpop.permute.xlu0 %1720
        %vm1722 = vcmask 637952
        %v1723 = vsel %vm1722, %v1717, %v1719
        %v1724 = vsel %vm1722, %v1719, %v1721
        %v1727 = vsel %vm424, %v1723, 0.0
        %v1728 = vsel %vm425, %v1724, 0.0
        %1729 = vrot.lane.b32.xlu0 %v164, 78
        %v1730 = vpop.permute.xlu0 %1729
        %1731 = vrot.lane.b32.xlu0 %v241, 78
        %v1732 = vpop.permute.xlu0 %1731
        %1733 = vrot.lane.b32.xlu0 %v165, 78
        %v1734 = vpop.permute.xlu0 %1733
        %v1735 = vsel %vm1722, %v1730, %v1732
        %v1736 = vsel %vm1722, %v1732, %v1734
        %v1739 = vsel %vm424, %v1735, 0.0
        %v1740 = vsel %vm425, %v1736, 0.0
        %v1741 = vsub.f32 %v1727, %v253
        %v1742 = vsub.f32 %v1728, %v254
        %v1743 = vand.u32 2147483647, %v1741
        %v1744 = vand.u32 2147483647, %v1742
        %v1745 = vadd.f32 %v1658, %v1743
        %v1746 = vadd.f32 %v1659, %v1744
        %v1747 = vsub.f32 %v1739, %v270
        %v1748 = vsub.f32 %v1740, %v271
        %v1749 = vand.u32 2147483647, %v1747
        %v1750 = vand.u32 2147483647, %v1748
        %v1751 = vadd.f32 %v1664, %v1749
        %v1752 = vadd.f32 %v1665, %v1750
        %v1753 = vmul.f32 %v1741, %v1741
        %v1754 = vmul.f32 %v1742, %v1742
        %v1755 = vsel %vm282, %v1753, 0.0
        %v1756 = vrot.slane %v1755, 4
        %v1757 = vadd.f32 %v1755, %v1756
        %v1758 = vrot.slane %v1757, 2
        %v1759 = vadd.f32 %v1757, %v1758
        %v1760 = vrot.slane %v1759, 1
        %v1761 = vadd.f32 %v1759, %v1760
        %v1762 = vsel %vm282, %v1754, 0.0
        %v1763 = vrot.slane %v1762, 4
        %v1764 = vadd.f32 %v1762, %v1763
        %v1765 = vrot.slane %v1764, 2
        %v1766 = vadd.f32 %v1764, %v1765
        %v1767 = vrot.slane %v1766, 1
        %v1768 = vadd.f32 %v1766, %v1767
        %v1769 = vmul.f32 %v1761, -50.0
        %v1770 = vmul.f32 %v1768, -50.0
        %v1771 = vmul.f32 %v1769, 1.442695
        %v1772 = vpow.pop %v1771
        %v1773 = vmul.f32 %v1770, 1.442695
        %v1774 = vpow.pop %v1773
        %vm1775 = vcmp.gt.f32.partialorder %v1739, 0.0
        %vm1776 = vcmp.gt.f32.partialorder %v1740, 0.0
        %v1777 = vsel %vm1775, %v1747, 0.0
        %v1778 = vsel %vm1776, %v1748, 0.0
        %v1779 = vand.u32 2147483647, %v1777
        %v1780 = vand.u32 2147483647, %v1778
        %v1781 = vmul.f32 %v1779, %v1779
        %v1782 = vmul.f32 %v1780, %v1780
        %v1783 = vmul.f32 %v1781, 0.9898478
        %v1784 = vmul.f32 %v1782, 0.9898478
        %v1785 = vadd.f32 %v1698, %v1783
        %v1786 = vadd.f32 %v1699, %v1784
        %v1787 = vadd.f32 %v1779, 1e-06
        %v1788 = vadd.f32 %v1780, 1e-06
        %v1789 = vlog2.pop %v1787
        %v1790 = vmul.f32 %v1789, 0.6931472
        %v1791 = vlog2.pop %v1788
        %v1792 = vmul.f32 %v1791, 0.6931472
        %v1793 = vmul.f32 %v1790, 0.8
        %v1794 = vmul.f32 %v1792, 0.8
        %v1795 = vmul.f32 %v1793, 1.442695
        %v1796 = vpow.pop %v1795
        %v1797 = vmul.f32 %v1794, 1.442695
        %v1798 = vpow.pop %v1797
        %v1799 = vmul.f32 %v1772, %v1796
        %v1800 = vmul.f32 %v1774, %v1798
        %v1801 = vadd.f32 %v1714, %v1799
        %v1802 = vadd.f32 %v1715, %v1800
        %1803 = vrot.lane.b32.xlu0 %v162, 77
        %v1804 = vpop.permute.xlu0 %1803
        %1805 = vrot.lane.b32.xlu0 %v236, 77
        %v1806 = vpop.permute.xlu0 %1805
        %1807 = vrot.lane.b32.xlu0 %v163, 77
        %v1808 = vpop.permute.xlu0 %1807
        %vm1809 = vcmask 629760
        %v1810 = vsel %vm1809, %v1804, %v1806
        %v1811 = vsel %vm1809, %v1806, %v1808
        %v1814 = vsel %vm515, %v1810, 0.0
        %v1815 = vsel %vm516, %v1811, 0.0
        %1816 = vrot.lane.b32.xlu0 %v164, 77
        %v1817 = vpop.permute.xlu0 %1816
        %1818 = vrot.lane.b32.xlu0 %v241, 77
        %v1819 = vpop.permute.xlu0 %1818
        %1820 = vrot.lane.b32.xlu0 %v165, 77
        %v1821 = vpop.permute.xlu0 %1820
        %v1822 = vsel %vm1809, %v1817, %v1819
        %v1823 = vsel %vm1809, %v1819, %v1821
        %v1826 = vsel %vm515, %v1822, 0.0
        %v1827 = vsel %vm516, %v1823, 0.0
        %v1828 = vsub.f32 %v1814, %v253
        %v1829 = vsub.f32 %v1815, %v254
        %v1830 = vand.u32 2147483647, %v1828
        %v1831 = vand.u32 2147483647, %v1829
        %v1832 = vadd.f32 %v1745, %v1830
        %v1833 = vadd.f32 %v1746, %v1831
        %v1834 = vsub.f32 %v1826, %v270
        %v1835 = vsub.f32 %v1827, %v271
        %v1836 = vand.u32 2147483647, %v1834
        %v1837 = vand.u32 2147483647, %v1835
        %v1838 = vadd.f32 %v1751, %v1836
        %v1839 = vadd.f32 %v1752, %v1837
        %v1840 = vmul.f32 %v1828, %v1828
        %v1841 = vmul.f32 %v1829, %v1829
        %v1842 = vsel %vm282, %v1840, 0.0
        %v1843 = vrot.slane %v1842, 4
        %v1844 = vadd.f32 %v1842, %v1843
        %v1845 = vrot.slane %v1844, 2
        %v1846 = vadd.f32 %v1844, %v1845
        %v1847 = vrot.slane %v1846, 1
        %v1848 = vadd.f32 %v1846, %v1847
        %v1849 = vsel %vm282, %v1841, 0.0
        %v1850 = vrot.slane %v1849, 4
        %v1851 = vadd.f32 %v1849, %v1850
        %v1852 = vrot.slane %v1851, 2
        %v1853 = vadd.f32 %v1851, %v1852
        %v1854 = vrot.slane %v1853, 1
        %v1855 = vadd.f32 %v1853, %v1854
        %v1856 = vmul.f32 %v1848, -50.0
        %v1857 = vmul.f32 %v1855, -50.0
        %v1858 = vmul.f32 %v1856, 1.442695
        %v1859 = vpow.pop %v1858
        %v1860 = vmul.f32 %v1857, 1.442695
        %v1861 = vpow.pop %v1860
        %vm1862 = vcmp.gt.f32.partialorder %v1826, 0.0
        %vm1863 = vcmp.gt.f32.partialorder %v1827, 0.0
        %v1864 = vsel %vm1862, %v1834, 0.0
        %v1865 = vsel %vm1863, %v1835, 0.0
        %v1866 = vand.u32 2147483647, %v1864
        %v1867 = vand.u32 2147483647, %v1865
        %v1868 = vmul.f32 %v1866, %v1866
        %v1869 = vmul.f32 %v1867, %v1867
        %v1870 = vmul.f32 %v1868, 0.9797987
        %v1871 = vmul.f32 %v1869, 0.9797987
        %v1872 = vadd.f32 %v1785, %v1870
        %v1873 = vadd.f32 %v1786, %v1871
        %v1874 = vadd.f32 %v1866, 1e-06
        %v1875 = vadd.f32 %v1867, 1e-06
        %v1876 = vlog2.pop %v1874
        %v1877 = vmul.f32 %v1876, 0.6931472
        %v1878 = vlog2.pop %v1875
        %v1879 = vmul.f32 %v1878, 0.6931472
        %v1880 = vmul.f32 %v1877, 0.8
        %v1881 = vmul.f32 %v1879, 0.8
        %v1882 = vmul.f32 %v1880, 1.442695
        %v1883 = vpow.pop %v1882
        %v1884 = vmul.f32 %v1881, 1.442695
        %v1885 = vpow.pop %v1884
        %v1886 = vmul.f32 %v1859, %v1883
        %v1887 = vmul.f32 %v1861, %v1885
        %v1888 = vadd.f32 %v1801, %v1886
        %v1889 = vadd.f32 %v1802, %v1887
        %1890 = vrot.lane.b32.xlu0 %v162, 76
        %v1891 = vpop.permute.xlu0 %1890
        %1892 = vrot.lane.b32.xlu0 %v236, 76
        %v1893 = vpop.permute.xlu0 %1892
        %1894 = vrot.lane.b32.xlu0 %v163, 76
        %v1895 = vpop.permute.xlu0 %1894
        %vm1896 = vcmask 621568
        %v1897 = vsel %vm1896, %v1891, %v1893
        %v1898 = vsel %vm1896, %v1893, %v1895
        %v1901 = vsel %vm606, %v1897, 0.0
        %v1902 = vsel %vm607, %v1898, 0.0
        %1903 = vrot.lane.b32.xlu0 %v164, 76
        %v1904 = vpop.permute.xlu0 %1903
        %1905 = vrot.lane.b32.xlu0 %v241, 76
        %v1906 = vpop.permute.xlu0 %1905
        %1907 = vrot.lane.b32.xlu0 %v165, 76
        %v1908 = vpop.permute.xlu0 %1907
        %v1909 = vsel %vm1896, %v1904, %v1906
        %v1910 = vsel %vm1896, %v1906, %v1908
        %v1913 = vsel %vm606, %v1909, 0.0
        %v1914 = vsel %vm607, %v1910, 0.0
        %v1915 = vsub.f32 %v1901, %v253
        %v1916 = vsub.f32 %v1902, %v254
        %v1917 = vand.u32 2147483647, %v1915
        %v1918 = vand.u32 2147483647, %v1916
        %v1919 = vadd.f32 %v1832, %v1917
        %v1920 = vadd.f32 %v1833, %v1918
        %v1921 = vsub.f32 %v1913, %v270
        %v1922 = vsub.f32 %v1914, %v271
        %v1923 = vand.u32 2147483647, %v1921
        %v1924 = vand.u32 2147483647, %v1922
        %v1925 = vadd.f32 %v1838, %v1923
        %v1926 = vadd.f32 %v1839, %v1924
        %v1927 = vmul.f32 %v1915, %v1915
        %v1928 = vmul.f32 %v1916, %v1916
        %v1929 = vsel %vm282, %v1927, 0.0
        %v1930 = vrot.slane %v1929, 4
        %v1931 = vadd.f32 %v1929, %v1930
        %v1932 = vrot.slane %v1931, 2
        %v1933 = vadd.f32 %v1931, %v1932
        %v1934 = vrot.slane %v1933, 1
        %v1935 = vadd.f32 %v1933, %v1934
        %v1936 = vsel %vm282, %v1928, 0.0
        %v1937 = vrot.slane %v1936, 4
        %v1938 = vadd.f32 %v1936, %v1937
        %v1939 = vrot.slane %v1938, 2
        %v1940 = vadd.f32 %v1938, %v1939
        %v1941 = vrot.slane %v1940, 1
        %v1942 = vadd.f32 %v1940, %v1941
        %v1943 = vmul.f32 %v1935, -50.0
        %v1944 = vmul.f32 %v1942, -50.0
        %v1945 = vmul.f32 %v1943, 1.442695
        %v1946 = vpow.pop %v1945
        %v1947 = vmul.f32 %v1944, 1.442695
        %v1948 = vpow.pop %v1947
        %vm1949 = vcmp.gt.f32.partialorder %v1913, 0.0
        %vm1950 = vcmp.gt.f32.partialorder %v1914, 0.0
        %v1951 = vsel %vm1949, %v1921, 0.0
        %v1952 = vsel %vm1950, %v1922, 0.0
        %v1953 = vand.u32 2147483647, %v1951
        %v1954 = vand.u32 2147483647, %v1952
        %v1955 = vmul.f32 %v1953, %v1953
        %v1956 = vmul.f32 %v1954, %v1954
        %v1957 = vmul.f32 %v1955, 0.95025927
        %v1958 = vmul.f32 %v1956, 0.95025927
        %v1959 = vadd.f32 %v1872, %v1957
        %v1960 = vadd.f32 %v1873, %v1958
        %v1961 = vadd.f32 %v1953, 1e-06
        %v1962 = vadd.f32 %v1954, 1e-06
        %v1963 = vlog2.pop %v1961
        %v1964 = vmul.f32 %v1963, 0.6931472
        %v1965 = vlog2.pop %v1962
        %v1966 = vmul.f32 %v1965, 0.6931472
        %v1967 = vmul.f32 %v1964, 0.8
        %v1968 = vmul.f32 %v1966, 0.8
        %v1969 = vmul.f32 %v1967, 1.442695
        %v1970 = vpow.pop %v1969
        %v1971 = vmul.f32 %v1968, 1.442695
        %v1972 = vpow.pop %v1971
        %v1973 = vmul.f32 %v1946, %v1970
        %v1974 = vmul.f32 %v1948, %v1972
        %v1975 = vadd.f32 %v1888, %v1973
        %v1976 = vadd.f32 %v1889, %v1974
        %1977 = vrot.lane.b32.xlu0 %v162, 64
        %v1978 = vpop.permute.xlu0 %1977
        %1979 = vrot.lane.b32.xlu0 %v236, 64
        %v1980 = vpop.permute.xlu0 %1979
        %1981 = vrot.lane.b32.xlu0 %v163, 64
        %v1982 = vpop.permute.xlu0 %1981
        %vm1983 = vcmask 523264
        %v1984 = vsel %vm1983, %v1978, %v1980
        %v1985 = vsel %vm1983, %v1980, %v1982
        %v1988 = vsel %vm233, %v1984, 0.0
        %v1989 = vsel %vm234, %v1985, 0.0
        %1990 = vrot.lane.b32.xlu0 %v164, 64
        %v1991 = vpop.permute.xlu0 %1990
        %1992 = vrot.lane.b32.xlu0 %v241, 64
        %v1993 = vpop.permute.xlu0 %1992
        %1994 = vrot.lane.b32.xlu0 %v165, 64
        %v1995 = vpop.permute.xlu0 %1994
        %v1996 = vsel %vm1983, %v1991, %v1993
        %v1997 = vsel %vm1983, %v1993, %v1995
        %v2000 = vsel %vm233, %v1996, 0.0
        %v2001 = vsel %vm234, %v1997, 0.0
        %v2002 = vsub.f32 %v1988, %v253
        %v2003 = vsub.f32 %v1989, %v254
        %v2004 = vand.u32 2147483647, %v2002
        %v2005 = vand.u32 2147483647, %v2003
        %v2006 = vadd.f32 %v1919, %v2004
        %v2007 = vadd.f32 %v1920, %v2005
        %v2008 = vsub.f32 %v2000, %v270
        %v2009 = vsub.f32 %v2001, %v271
        %v2010 = vand.u32 2147483647, %v2008
        %v2011 = vand.u32 2147483647, %v2009
        %v2012 = vadd.f32 %v1925, %v2010
        %v2013 = vadd.f32 %v1926, %v2011
        %v2014 = vmul.f32 %v2002, %v2002
        %v2015 = vmul.f32 %v2003, %v2003
        %v2016 = vsel %vm282, %v2014, 0.0
        %v2017 = vrot.slane %v2016, 4
        %v2018 = vadd.f32 %v2016, %v2017
        %v2019 = vrot.slane %v2018, 2
        %v2020 = vadd.f32 %v2018, %v2019
        %v2021 = vrot.slane %v2020, 1
        %v2022 = vadd.f32 %v2020, %v2021
        %v2023 = vsel %vm282, %v2015, 0.0
        %v2024 = vrot.slane %v2023, 4
        %v2025 = vadd.f32 %v2023, %v2024
        %v2026 = vrot.slane %v2025, 2
        %v2027 = vadd.f32 %v2025, %v2026
        %v2028 = vrot.slane %v2027, 1
        %v2029 = vadd.f32 %v2027, %v2028
        %v2030 = vmul.f32 %v2022, -50.0
        %v2031 = vmul.f32 %v2029, -50.0
        %v2032 = vmul.f32 %v2030, 1.442695
        %v2033 = vpow.pop %v2032
        %v2034 = vmul.f32 %v2031, 1.442695
        %v2035 = vpow.pop %v2034
        %vm2036 = vcmp.gt.f32.partialorder %v2000, 0.0
        %vm2037 = vcmp.gt.f32.partialorder %v2001, 0.0
        %v2038 = vsel %vm2036, %v2008, 0.0
        %v2039 = vsel %vm2037, %v2009, 0.0
        %v2040 = vand.u32 2147483647, %v2038
        %v2041 = vand.u32 2147483647, %v2039
        %v2042 = vmul.f32 %v2040, %v2040
        %v2043 = vmul.f32 %v2041, %v2041
        %v2044 = vmul.f32 %v2042, 0.9216105
        %v2045 = vmul.f32 %v2043, 0.9216105
        %v2046 = vadd.f32 %v1959, %v2044
        %v2047 = vadd.f32 %v1960, %v2045
        %v2048 = vadd.f32 %v2040, 1e-06
        %v2049 = vadd.f32 %v2041, 1e-06
        %v2050 = vlog2.pop %v2048
        %v2051 = vmul.f32 %v2050, 0.6931472
        %v2052 = vlog2.pop %v2049
        %v2053 = vmul.f32 %v2052, 0.6931472
        %v2054 = vmul.f32 %v2051, 0.8
        %v2055 = vmul.f32 %v2053, 0.8
        %v2056 = vmul.f32 %v2054, 1.442695
        %v2057 = vpow.pop %v2056
        %v2058 = vmul.f32 %v2055, 1.442695
        %v2059 = vpow.pop %v2058
        %v2060 = vmul.f32 %v2033, %v2057
        %v2061 = vmul.f32 %v2035, %v2059
        %v2062 = vadd.f32 %v1975, %v2060
        %v2063 = vadd.f32 %v1976, %v2061
        %2064 = vrot.lane.b32.xlu0 %v162, 63
        %v2065 = vpop.permute.xlu0 %2064
        %2066 = vrot.lane.b32.xlu0 %v236, 63
        %v2067 = vpop.permute.xlu0 %2066
        %2068 = vrot.lane.b32.xlu0 %v163, 63
        %v2069 = vpop.permute.xlu0 %2068
        %vm2070 = vcmask 515072
        %v2071 = vsel %vm2070, %v2065, %v2067
        %v2072 = vsel %vm2070, %v2067, %v2069
        %v2075 = vsel %vm333, %v2071, 0.0
        %v2076 = vsel %vm334, %v2072, 0.0
        %2077 = vrot.lane.b32.xlu0 %v164, 63
        %v2078 = vpop.permute.xlu0 %2077
        %2079 = vrot.lane.b32.xlu0 %v241, 63
        %v2080 = vpop.permute.xlu0 %2079
        %2081 = vrot.lane.b32.xlu0 %v165, 63
        %v2082 = vpop.permute.xlu0 %2081
        %v2083 = vsel %vm2070, %v2078, %v2080
        %v2084 = vsel %vm2070, %v2080, %v2082
        %v2087 = vsel %vm333, %v2083, 0.0
        %v2088 = vsel %vm334, %v2084, 0.0
        %v2089 = vsub.f32 %v2075, %v253
        %v2090 = vsub.f32 %v2076, %v254
        %v2091 = vand.u32 2147483647, %v2089
        %v2092 = vand.u32 2147483647, %v2090
        %v2093 = vadd.f32 %v2006, %v2091
        %v2094 = vadd.f32 %v2007, %v2092
        %v2095 = vsub.f32 %v2087, %v270
        %v2096 = vsub.f32 %v2088, %v271
        %v2097 = vand.u32 2147483647, %v2095
        %v2098 = vand.u32 2147483647, %v2096
        %v2099 = vadd.f32 %v2012, %v2097
        %v2100 = vadd.f32 %v2013, %v2098
        %v2101 = vmul.f32 %v2089, %v2089
        %v2102 = vmul.f32 %v2090, %v2090
        %v2103 = vsel %vm282, %v2101, 0.0
        %v2104 = vrot.slane %v2103, 4
        %v2105 = vadd.f32 %v2103, %v2104
        %v2106 = vrot.slane %v2105, 2
        %v2107 = vadd.f32 %v2105, %v2106
        %v2108 = vrot.slane %v2107, 1
        %v2109 = vadd.f32 %v2107, %v2108
        %v2110 = vsel %vm282, %v2102, 0.0
        %v2111 = vrot.slane %v2110, 4
        %v2112 = vadd.f32 %v2110, %v2111
        %v2113 = vrot.slane %v2112, 2
        %v2114 = vadd.f32 %v2112, %v2113
        %v2115 = vrot.slane %v2114, 1
        %v2116 = vadd.f32 %v2114, %v2115
        %v2117 = vmul.f32 %v2109, -50.0
        %v2118 = vmul.f32 %v2116, -50.0
        %v2119 = vmul.f32 %v2117, 1.442695
        %v2120 = vpow.pop %v2119
        %v2121 = vmul.f32 %v2118, 1.442695
        %v2122 = vpow.pop %v2121
        %vm2123 = vcmp.gt.f32.partialorder %v2087, 0.0
        %vm2124 = vcmp.gt.f32.partialorder %v2088, 0.0
        %v2125 = vsel %vm2123, %v2095, 0.0
        %v2126 = vsel %vm2124, %v2096, 0.0
        %v2127 = vand.u32 2147483647, %v2125
        %v2128 = vand.u32 2147483647, %v2126
        %v2129 = vmul.f32 %v2127, %v2127
        %v2130 = vmul.f32 %v2128, %v2128
        %v2131 = vmul.f32 %v2129, 0.95025927
        %v2132 = vmul.f32 %v2130, 0.95025927
        %v2133 = vadd.f32 %v2046, %v2131
        %v2134 = vadd.f32 %v2047, %v2132
        %v2135 = vadd.f32 %v2127, 1e-06
        %v2136 = vadd.f32 %v2128, 1e-06
        %v2137 = vlog2.pop %v2135
        %v2138 = vmul.f32 %v2137, 0.6931472
        %v2139 = vlog2.pop %v2136
        %v2140 = vmul.f32 %v2139, 0.6931472
        %v2141 = vmul.f32 %v2138, 0.8
        %v2142 = vmul.f32 %v2140, 0.8
        %v2143 = vmul.f32 %v2141, 1.442695
        %v2144 = vpow.pop %v2143
        %v2145 = vmul.f32 %v2142, 1.442695
        %v2146 = vpow.pop %v2145
        %v2147 = vmul.f32 %v2120, %v2144
        %v2148 = vmul.f32 %v2122, %v2146
        %v2149 = vadd.f32 %v2062, %v2147
        %v2150 = vadd.f32 %v2063, %v2148
        %2151 = vrot.lane.b32.xlu0 %v162, 62
        %v2152 = vpop.permute.xlu0 %2151
        %2153 = vrot.lane.b32.xlu0 %v236, 62
        %v2154 = vpop.permute.xlu0 %2153
        %2155 = vrot.lane.b32.xlu0 %v163, 62
        %v2156 = vpop.permute.xlu0 %2155
        %vm2157 = vcmask 506880
        %v2158 = vsel %vm2157, %v2152, %v2154
        %v2159 = vsel %vm2157, %v2154, %v2156
        %v2162 = vsel %vm424, %v2158, 0.0
        %v2163 = vsel %vm425, %v2159, 0.0
        %2164 = vrot.lane.b32.xlu0 %v164, 62
        %v2165 = vpop.permute.xlu0 %2164
        %2166 = vrot.lane.b32.xlu0 %v241, 62
        %v2167 = vpop.permute.xlu0 %2166
        %2168 = vrot.lane.b32.xlu0 %v165, 62
        %v2169 = vpop.permute.xlu0 %2168
        %v2170 = vsel %vm2157, %v2165, %v2167
        %v2171 = vsel %vm2157, %v2167, %v2169
        %v2174 = vsel %vm424, %v2170, 0.0
        %v2175 = vsel %vm425, %v2171, 0.0
        %v2176 = vsub.f32 %v2162, %v253
        %v2177 = vsub.f32 %v2163, %v254
        %v2178 = vand.u32 2147483647, %v2176
        %v2179 = vand.u32 2147483647, %v2177
        %v2180 = vadd.f32 %v2093, %v2178
        %v2181 = vadd.f32 %v2094, %v2179
        %v2182 = vsub.f32 %v2174, %v270
        %v2183 = vsub.f32 %v2175, %v271
        %v2184 = vand.u32 2147483647, %v2182
        %v2185 = vand.u32 2147483647, %v2183
        %v2186 = vadd.f32 %v2099, %v2184
        %v2187 = vadd.f32 %v2100, %v2185
        %v2188 = vmul.f32 %v2176, %v2176
        %v2189 = vmul.f32 %v2177, %v2177
        %v2190 = vsel %vm282, %v2188, 0.0
        %v2191 = vrot.slane %v2190, 4
        %v2192 = vadd.f32 %v2190, %v2191
        %v2193 = vrot.slane %v2192, 2
        %v2194 = vadd.f32 %v2192, %v2193
        %v2195 = vrot.slane %v2194, 1
        %v2196 = vadd.f32 %v2194, %v2195
        %v2197 = vsel %vm282, %v2189, 0.0
        %v2198 = vrot.slane %v2197, 4
        %v2199 = vadd.f32 %v2197, %v2198
        %v2200 = vrot.slane %v2199, 2
        %v2201 = vadd.f32 %v2199, %v2200
        %v2202 = vrot.slane %v2201, 1
        %v2203 = vadd.f32 %v2201, %v2202
        %v2204 = vmul.f32 %v2196, -50.0
        %v2205 = vmul.f32 %v2203, -50.0
        %v2206 = vmul.f32 %v2204, 1.442695
        %v2207 = vpow.pop %v2206
        %v2208 = vmul.f32 %v2205, 1.442695
        %v2209 = vpow.pop %v2208
        %vm2210 = vcmp.gt.f32.partialorder %v2174, 0.0
        %vm2211 = vcmp.gt.f32.partialorder %v2175, 0.0
        %v2212 = vsel %vm2210, %v2182, 0.0
        %v2213 = vsel %vm2211, %v2183, 0.0
        %v2214 = vand.u32 2147483647, %v2212
        %v2215 = vand.u32 2147483647, %v2213
        %v2216 = vmul.f32 %v2214, %v2214
        %v2217 = vmul.f32 %v2215, %v2215
        %v2218 = vmul.f32 %v2216, 0.96000546
        %v2219 = vmul.f32 %v2217, 0.96000546
        %v2220 = vadd.f32 %v2133, %v2218
        %v2221 = vadd.f32 %v2134, %v2219
        %v2222 = vadd.f32 %v2214, 1e-06
        %v2223 = vadd.f32 %v2215, 1e-06
        %v2224 = vlog2.pop %v2222
        %v2225 = vmul.f32 %v2224, 0.6931472
        %v2226 = vlog2.pop %v2223
        %v2227 = vmul.f32 %v2226, 0.6931472
        %v2228 = vmul.f32 %v2225, 0.8
        %v2229 = vmul.f32 %v2227, 0.8
        %v2230 = vmul.f32 %v2228, 1.442695
        %v2231 = vpow.pop %v2230
        %v2232 = vmul.f32 %v2229, 1.442695
        %v2233 = vpow.pop %v2232
        %v2234 = vmul.f32 %v2207, %v2231
        %v2235 = vmul.f32 %v2209, %v2233
        %v2236 = vadd.f32 %v2149, %v2234
        %v2237 = vadd.f32 %v2150, %v2235
        %2238 = vrot.lane.b32.xlu0 %v162, 61
        %v2239 = vpop.permute.xlu0 %2238
        %2240 = vrot.lane.b32.xlu0 %v236, 61
        %v2241 = vpop.permute.xlu0 %2240
        %2242 = vrot.lane.b32.xlu0 %v163, 61
        %v2243 = vpop.permute.xlu0 %2242
        %vm2244 = vcmask 498688
        %v2245 = vsel %vm2244, %v2239, %v2241
        %v2246 = vsel %vm2244, %v2241, %v2243
        %v2249 = vsel %vm515, %v2245, 0.0
        %v2250 = vsel %vm516, %v2246, 0.0
        %2251 = vrot.lane.b32.xlu0 %v164, 61
        %v2252 = vpop.permute.xlu0 %2251
        %2253 = vrot.lane.b32.xlu0 %v241, 61
        %v2254 = vpop.permute.xlu0 %2253
        %2255 = vrot.lane.b32.xlu0 %v165, 61
        %v2256 = vpop.permute.xlu0 %2255
        %v2257 = vsel %vm2244, %v2252, %v2254
        %v2258 = vsel %vm2244, %v2254, %v2256
        %v2261 = vsel %vm515, %v2257, 0.0
        %v2262 = vsel %vm516, %v2258, 0.0
        %v2263 = vsub.f32 %v2249, %v253
        %v2264 = vsub.f32 %v2250, %v254
        %v2265 = vand.u32 2147483647, %v2263
        %v2266 = vand.u32 2147483647, %v2264
        %v2267 = vadd.f32 %v2180, %v2265
        %v2268 = vadd.f32 %v2181, %v2266
        %v2269 = vsub.f32 %v2261, %v270
        %v2270 = vsub.f32 %v2262, %v271
        %v2271 = vand.u32 2147483647, %v2269
        %v2272 = vand.u32 2147483647, %v2270
        %v2273 = vadd.f32 %v2186, %v2271
        %v2274 = vadd.f32 %v2187, %v2272
        %v2275 = vmul.f32 %v2263, %v2263
        %v2276 = vmul.f32 %v2264, %v2264
        %v2277 = vsel %vm282, %v2275, 0.0
        %v2278 = vrot.slane %v2277, 4
        %v2279 = vadd.f32 %v2277, %v2278
        %v2280 = vrot.slane %v2279, 2
        %v2281 = vadd.f32 %v2279, %v2280
        %v2282 = vrot.slane %v2281, 1
        %v2283 = vadd.f32 %v2281, %v2282
        %v2284 = vsel %vm282, %v2276, 0.0
        %v2285 = vrot.slane %v2284, 4
        %v2286 = vadd.f32 %v2284, %v2285
        %v2287 = vrot.slane %v2286, 2
        %v2288 = vadd.f32 %v2286, %v2287
        %v2289 = vrot.slane %v2288, 1
        %v2290 = vadd.f32 %v2288, %v2289
        %v2291 = vmul.f32 %v2283, -50.0
        %v2292 = vmul.f32 %v2290, -50.0
        %v2293 = vmul.f32 %v2291, 1.442695
        %v2294 = vpow.pop %v2293
        %v2295 = vmul.f32 %v2292, 1.442695
        %v2296 = vpow.pop %v2295
        %vm2297 = vcmp.gt.f32.partialorder %v2261, 0.0
        %vm2298 = vcmp.gt.f32.partialorder %v2262, 0.0
        %v2299 = vsel %vm2297, %v2269, 0.0
        %v2300 = vsel %vm2298, %v2270, 0.0
        %v2301 = vand.u32 2147483647, %v2299
        %v2302 = vand.u32 2147483647, %v2300
        %v2303 = vmul.f32 %v2301, %v2301
        %v2304 = vmul.f32 %v2302, %v2302
        %v2305 = vmul.f32 %v2303, 0.95025927
        %v2306 = vmul.f32 %v2304, 0.95025927
        %v2307 = vadd.f32 %v2220, %v2305
        %v2308 = vadd.f32 %v2221, %v2306
        %v2309 = vadd.f32 %v2301, 1e-06
        %v2310 = vadd.f32 %v2302, 1e-06
        %v2311 = vlog2.pop %v2309
        %v2312 = vmul.f32 %v2311, 0.6931472
        %v2313 = vlog2.pop %v2310
        %v2314 = vmul.f32 %v2313, 0.6931472
        %v2315 = vmul.f32 %v2312, 0.8
        %v2316 = vmul.f32 %v2314, 0.8
        %v2317 = vmul.f32 %v2315, 1.442695
        %v2318 = vpow.pop %v2317
        %v2319 = vmul.f32 %v2316, 1.442695
        %v2320 = vpow.pop %v2319
        %v2321 = vmul.f32 %v2294, %v2318
        %v2322 = vmul.f32 %v2296, %v2320
        %v2323 = vadd.f32 %v2236, %v2321
        %v2324 = vadd.f32 %v2237, %v2322
        %2325 = vrot.lane.b32.xlu0 %v162, 60
        %v2326 = vpop.permute.xlu0 %2325
        %2327 = vrot.lane.b32.xlu0 %v236, 60
        %v2328 = vpop.permute.xlu0 %2327
        %2329 = vrot.lane.b32.xlu0 %v163, 60
        %v2330 = vpop.permute.xlu0 %2329
        %vm2331 = vcmask 490496
        %v2332 = vsel %vm2331, %v2326, %v2328
        %v2333 = vsel %vm2331, %v2328, %v2330
        %v2336 = vsel %vm606, %v2332, 0.0
        %v2337 = vsel %vm607, %v2333, 0.0
        %2338 = vrot.lane.b32.xlu0 %v164, 60
        %v2339 = vpop.permute.xlu0 %2338
        %2340 = vrot.lane.b32.xlu0 %v241, 60
        %v2341 = vpop.permute.xlu0 %2340
        %2342 = vrot.lane.b32.xlu0 %v165, 60
        %v2343 = vpop.permute.xlu0 %2342
        %v2344 = vsel %vm2331, %v2339, %v2341
        %v2345 = vsel %vm2331, %v2341, %v2343
        %v2348 = vsel %vm606, %v2344, 0.0
        %v2349 = vsel %vm607, %v2345, 0.0
        %v2350 = vsub.f32 %v2336, %v253
        %v2351 = vsub.f32 %v2337, %v254
        %v2352 = vand.u32 2147483647, %v2350
        %v2353 = vand.u32 2147483647, %v2351
        %v2354 = vadd.f32 %v2267, %v2352
        %v2355 = vadd.f32 %v2268, %v2353
        %v2356 = vsub.f32 %v2348, %v270
        %v2357 = vsub.f32 %v2349, %v271
        %v2358 = vand.u32 2147483647, %v2356
        %v2359 = vand.u32 2147483647, %v2357
        %v2360 = vadd.f32 %v2273, %v2358
        %v2361 = vadd.f32 %v2274, %v2359
        %v2362 = vmul.f32 %v2350, %v2350
        %v2363 = vmul.f32 %v2351, %v2351
        %v2364 = vsel %vm282, %v2362, 0.0
        %v2365 = vrot.slane %v2364, 4
        %v2366 = vadd.f32 %v2364, %v2365
        %v2367 = vrot.slane %v2366, 2
        %v2368 = vadd.f32 %v2366, %v2367
        %v2369 = vrot.slane %v2368, 1
        %v2370 = vadd.f32 %v2368, %v2369
        %v2371 = vsel %vm282, %v2363, 0.0
        %v2372 = vrot.slane %v2371, 4
        %v2373 = vadd.f32 %v2371, %v2372
        %v2374 = vrot.slane %v2373, 2
        %v2375 = vadd.f32 %v2373, %v2374
        %v2376 = vrot.slane %v2375, 1
        %v2377 = vadd.f32 %v2375, %v2376
        %v2378 = vmul.f32 %v2370, -50.0
        %v2379 = vmul.f32 %v2377, -50.0
        %v2380 = vmul.f32 %v2378, 1.442695
        %v2381 = vpow.pop %v2380
        %v2382 = vmul.f32 %v2379, 1.442695
        %v2383 = vpow.pop %v2382
        %vm2384 = vcmp.gt.f32.partialorder %v2348, 0.0
        %vm2385 = vcmp.gt.f32.partialorder %v2349, 0.0
        %v2386 = vsel %vm2384, %v2356, 0.0
        %v2387 = vsel %vm2385, %v2357, 0.0
        %v2388 = vand.u32 2147483647, %v2386
        %v2389 = vand.u32 2147483647, %v2387
        %v2390 = vmul.f32 %v2388, %v2388
        %v2391 = vmul.f32 %v2389, %v2389
        %v2392 = vmul.f32 %v2390, 0.9216105
        %v2393 = vmul.f32 %v2391, 0.9216105
        %v2394 = vadd.f32 %v2307, %v2392
        %v2395 = vadd.f32 %v2308, %v2393
        %v2396 = vadd.f32 %v2388, 1e-06
        %v2397 = vadd.f32 %v2389, 1e-06
        %v2398 = vlog2.pop %v2396
        %v2399 = vmul.f32 %v2398, 0.6931472
        %v2400 = vlog2.pop %v2397
        %v2401 = vmul.f32 %v2400, 0.6931472
        %v2402 = vmul.f32 %v2399, 0.8
        %v2403 = vmul.f32 %v2401, 0.8
        %v2404 = vmul.f32 %v2402, 1.442695
        %v2405 = vpow.pop %v2404
        %v2406 = vmul.f32 %v2403, 1.442695
        %v2407 = vpow.pop %v2406
        %v2408 = vmul.f32 %v2381, %v2405
        %v2409 = vmul.f32 %v2383, %v2407
        %v2410 = vadd.f32 %v2323, %v2408
        %v2411 = vadd.f32 %v2324, %v2409
        %v2412 = vsel %vm282, %v2354, 0.0
        %v2413 = vrot.slane %v2412, 4
        %v2414 = vadd.f32 %v2412, %v2413
        %v2415 = vrot.slane %v2414, 2
        %v2416 = vadd.f32 %v2414, %v2415
        %v2417 = vrot.slane %v2416, 1
        %v2418 = vadd.f32 %v2416, %v2417
        %v2419 = vsel %vm282, %v2355, 0.0
        %v2420 = vrot.slane %v2419, 4
        %v2421 = vadd.f32 %v2419, %v2420
        %v2422 = vrot.slane %v2421, 2
        %v2423 = vadd.f32 %v2421, %v2422
        %v2424 = vrot.slane %v2423, 1
        %v2425 = vadd.f32 %v2423, %v2424
        %v2426 = vsel %vm282, %v2360, 0.0
        %v2427 = vrot.slane %v2426, 4
        %v2428 = vadd.f32 %v2426, %v2427
        %v2429 = vrot.slane %v2428, 2
        %v2430 = vadd.f32 %v2428, %v2429
        %v2431 = vrot.slane %v2430, 1
        %v2432 = vadd.f32 %v2430, %v2431
        %v2433 = vsel %vm282, %v2361, 0.0
        %v2434 = vrot.slane %v2433, 4
        %v2435 = vadd.f32 %v2433, %v2434
        %v2436 = vrot.slane %v2435, 2
        %v2437 = vadd.f32 %v2435, %v2436
        %v2438 = vrot.slane %v2437, 1
        %v2439 = vadd.f32 %v2437, %v2438
        %vm2440 = vcmp.lt.f32.partialorder %v2418, 10.0
        %vm2441 = vcmp.lt.f32.partialorder %v2425, 10.0
        %v2442 = vsub.f32 %v2432, %v2418
        %v2443 = vsub.f32 %v2439, %v2425
        %vm2444 = vcmp.gt.f32.partialorder %v2442, 5.0
        %vm2445 = vcmp.gt.f32.partialorder %v2443, 5.0
        %vm2446 = vmand %vm2440, %vm2444
        %vm2447 = vmand %vm2441, %vm2445
        %v2448 = vsel %vm282, %v2394, 0.0
        %v2449 = vrot.slane %v2448, 4
        %v2450 = vadd.f32 %v2448, %v2449
        %v2451 = vrot.slane %v2450, 2
        %v2452 = vadd.f32 %v2450, %v2451
        %v2453 = vrot.slane %v2452, 1
        %v2454 = vadd.f32 %v2452, %v2453
        %v2455 = vsel %vm282, %v2395, 0.0
        %v2456 = vrot.slane %v2455, 4
        %v2457 = vadd.f32 %v2455, %v2456
        %v2458 = vrot.slane %v2457, 2
        %v2459 = vadd.f32 %v2457, %v2458
        %v2460 = vrot.slane %v2459, 1
        %v2461 = vadd.f32 %v2459, %v2460
        %v2462 = vsel %vm282, %v2410, 0.0
        %v2463 = vrot.slane %v2462, 4
        %v2464 = vadd.f32 %v2462, %v2463
        %v2465 = vrot.slane %v2464, 2
        %v2466 = vadd.f32 %v2464, %v2465
        %v2467 = vrot.slane %v2466, 1
        %v2468 = vadd.f32 %v2466, %v2467
        %v2469 = vsel %vm282, %v2411, 0.0
        %v2470 = vrot.slane %v2469, 4
        %v2471 = vadd.f32 %v2469, %v2470
        %v2472 = vrot.slane %v2471, 2
        %v2473 = vadd.f32 %v2471, %v2472
        %v2474 = vrot.slane %v2473, 1
        %v2475 = vadd.f32 %v2473, %v2474
        %v2476 = vmul.f32 %v2454, 5.0
        %v2477 = vmul.f32 %v2461, 5.0
        %v2478 = vsel %vm2446, %v2476, %v2468
        %v2479 = vsel %vm2447, %v2477, %v2475
        %vm2480 = vcmask 1040384
        %v2481 = vsel %vm2480, %v2478, 0.0
        %v2482 = vsel %vm2480, %v2479, 0.0
        %v2483 = vadd.f32 %v2481, %v2482
        %2484 = vadd.xlane.f32.xlu0 %v2483
        %v2485 = vpop.xlane.xlu0 %2484
        %v2486 = vrot.slane %v2485, 4
        %v2487 = vadd.f32 %v2485, %v2486
        %v2488 = vrot.slane %v2487, 2
        %v2489 = vadd.f32 %v2487, %v2488
        %v2490 = vrot.slane %v2489, 1
        %v2491 = vadd.f32 %v2489, %v2490
        %s2492 = vtos %v2491
        %s2493 = smul.f32 %s2492, 0.00048828125
        %v2494 = vstv %s2493
        %2495 = vst [vmem:[%s151] sm:$0xff] %v2494
        %s2496 = sand.u32 %s76, 1
        %s2497 = scalar_lea.sflag [#allocation3], %s2496
        %s2498 = sand.u32 %s76, 1
        %s2499 = smul.addr %s2498, 8
        %s2500 = scalar_lea.vmem [#allocation2], %s2499
        // Predicated region
        $region29: #{tpu_custom_call.1} parent=27 // pred_check
          %p2501 = pneg %p86
        $region30: #{tpu_custom_call.1} parent=27 // pred_check_branch
          %2503 = sbr.rel (%p2501) target = $region32
        $region31: #{tpu_custom_call.1} parent=27 // pred_region
          %s2505 = ssub.s32 128, 128
          %2506 = vsyncadd %s2497, %s2505
          %s2507 = smul.addr %s16, 128
          %s2508 = scalar_lea.hbm %s2, %s2507
          %s2510 = sshll.u32 %s2500, 4
          %s2511 = int_to_ptr.vmem [resolvable:$true] %s2510
          %2513 = dma.vmem_to_hbm [thread:$0]  %s2511, 128, %s2508, %s2497
        $region32: #{tpu_custom_call.1} parent=27 // pred_fallthru
          _
      $region28: #{tpu_custom_call.1} parent=5 // pred_fallthru
        _
      %p2514 = scmp.le.s32.totalorder 2, %s11
      // Predicated region
      $region33: #{tpu_custom_call.1} parent=5 // pred_check
        %p2515 = pneg %p2514
      $region34: #{tpu_custom_call.1} parent=5 // pred_check_branch
        %2517 = sbr.rel (%p2515) target = $region36
      $region35: #{tpu_custom_call.1} parent=5 // pred_region
        %s2518 = ssub.s32 %s11, 2
        // Predicated region
        $region37: #{tpu_custom_call.1} parent=35 // pred_check
          %p2519 = pneg %p92
        $region38: #{tpu_custom_call.1} parent=35 // pred_check_branch
          %2521 = sbr.rel (%p2519) target = $region40
        $region39: #{tpu_custom_call.1} parent=35 // pred_region
          %s2522 = sand.u32 %s77, 1
          %s2523 = scalar_lea.sflag [#allocation3], %s2522
          %s2524 = sand.u32 %s77, 1
          %s2525 = smul.addr %s2524, 8
          %s2526 = scalar_lea.vmem [#allocation2], %s2525
          %2527 = dma.done %s2523, 128
        $region40: #{tpu_custom_call.1} parent=35 // pred_fallthru
          _
      $region36: #{tpu_custom_call.1} parent=5 // pred_fallthru
        _
    $region6: #{tpu_custom_call.1} parent=1 // loop_footer
      %s15 = sadd.s32 1, %s11
    $region7: #{tpu_custom_call.1} parent=1 // loop_footer_branch
      %10 = sbr.rel target = $region3
    $region8: #{tpu_custom_call.1} parent=1 // loop_exit
      _
    %2528 = vsyncpa [#allocation3], 1
    %s2529 = scalar_lea.sflag [#allocation3], 1
    %2530 = vsyncpa %s2529, 1

</llo_original>
